<compile_context>
chip_gen: v6e
topology: v6e:2x2x1
jax: 0.10.0
libtpu: 0.0.40
codegen_flags: <defaults>
</compile_context>

<pallas_src>
import numpy as np
import jax
import jax.numpy as jnp
from jax.experimental import pallas as pl
from jax.experimental.pallas import tpu as pltpu

_BN_EPS = 1e-5


# --------------------------------------------------------------------------- #
# Kernel factory: whole PhoneNet forward as one Pallas kernel.
# Activations are kept in "band layout": shape (B*(H+2), W*C) f32, image i's
# rows at [i*(H+2)+1, i*(H+2)+H], halo rows exactly zero.
# --------------------------------------------------------------------------- #
def _make_phone_net_kernel(layer_cfgs, b_tile, dense_hf, n_out_pad):
    n_layers = len(layer_cfgs)

    def kernel(*refs):
        idx = 0
        x_ref = refs[idx]; idx += 1
        layer_refs = []
        for _ in range(n_layers):
            layer_refs.append(refs[idx:idx + 9]); idx += 9
        wd_ref = refs[idx]; bd_ref = refs[idx + 1]; idx += 2
        out_ref = refs[idx]; idx += 1
        stage_refs = refs[idx:idx + n_layers]

        x = x_ref[0]                                     # (Rp0, W0*C0) f32

        for li, (H, W, Cin, Cout) in enumerate(layer_cfgs):
            (b1_ref, s1_ref, t1_ref, b2_ref, s2_ref, t2_ref,
             sh_ref, sw_ref, mask_ref) = layer_refs[li]
            stage = stage_refs[li]
            Hpad = H + 2
            Rp = b_tile * Hpad
            SegW = W * Cin                               # == 64 for all layers

            # Zero ONLY the two staging cells the shifted stores never write.
            # Done every grid step (never program_id-gated): megacore safe.
            stage[0:1, 0:SegW] = jnp.zeros((1, SegW), jnp.bfloat16)
            stage[Rp - 1:Rp, 2 * SegW:3 * SegW] = jnp.zeros((1, SegW), jnp.bfloat16)

            def conv3x3(inp, bcat_ref, stage=stage, Rp=Rp, SegW=SegW):
                # Cast once to bf16, stage the 3 row-shifted views contiguously
                # along K, then ONE matmul against the host-concatenated banded
                # weight (3*SegW, W*Cout).  f32 accumulation.
                xb = inp.astype(jnp.bfloat16)
                stage[1:Rp, 0:SegW] = xb[0:Rp - 1, :]            # kh = 0
                stage[:, SegW:2 * SegW] = xb                     # kh = 1
                stage[0:Rp - 1, 2 * SegW:3 * SegW] = xb[1:Rp, :]  # kh = 2
                return jnp.dot(stage[...], bcat_ref[...],
                               preferred_element_type=jnp.float32)

            # --- base1: Conv3x3 + BN + ReLU, zero halo rows, residual add ---
            y = conv3x3(x, b1_ref)
            y = jnp.maximum(y * s1_ref[...] + t1_ref[...], 0.0)
            x = y * mask_ref[...] + x                    # (Rp, W*Cin) f32

            # --- base2: Conv3x3 + BN + ReLU ---
            y = conv3x3(x, b2_ref)
            y = jnp.maximum(y * s2_ref[...] + t2_ref[...], 0.0)  # (Rp, W*Cout)

            # --- MaxPool2d(2): shifted maxes + bf16 0/1 selection matmuls.
            # sh_ref also drops halo/garbage rows and emits the next layer's
            # band layout (or the compact layout on the last layer).
            rmax = jnp.maximum(y[:Rp - 1, :], y[1:, :])
            cmax = jnp.maximum(rmax[:, :(W - 1) * Cout], rmax[:, Cout:])
            t = jnp.dot(sh_ref[...], cmax.astype(jnp.bfloat16),
                        preferred_element_type=jnp.float32)
            x = jnp.dot(t.astype(jnp.bfloat16), sw_ref[...],
                        preferred_element_type=jnp.float32)

        # --- Flatten (torch (C,H,W) order folded into host-permuted weight)
        # x is compact here: (b_tile*dense_hf, Wf*Cf).
        if dense_hf > 1:
            # TODO(synk): reshape-based flatten for final H > 1 is untested on
            # hardware layouts; the module config used here has dense_hf == 1.
            x = x.reshape(b_tile, -1)
        logits = jnp.dot(x.astype(jnp.bfloat16), wd_ref[...],
                         preferred_element_type=jnp.float32)
        out_ref[0] = logits + bd_ref[...]                # (b_tile, n_out_pad)

    return kernel


# --------------------------------------------------------------------------- #
# Host-side parameter preparation (done once, outside the kernel).
# --------------------------------------------------------------------------- #
def _fold_bn(conv_bias, gamma, beta, mean, var):
    s = gamma / jnp.sqrt(var + _BN_EPS)
    t = beta + s * (conv_bias - mean)              # conv bias folded into shift
    return s.astype(jnp.float32), t.astype(jnp.float32)


def _banded_conv_weight(w_hwio, W):
    """(3,3,Cin,Cout) 'same' conv -> concatenated banded matrix (3*W*Cin, W*Cout)
    so that conv(x)[r] = concat_kh(x[r+kh-1]) @ B   ('same' zero padding in W is
    encoded by simply omitting out-of-range taps)."""
    _, _, cin, cout = w_hwio.shape
    w_np = np.asarray(w_hwio, np.float32)
    segw = W * cin
    b = np.zeros((3 * segw, W * cout), np.float32)
    for kh in range(3):
        for w in range(W):
            for kw in range(3):
                wp = w + kw - 1
                if 0 <= wp < W:
                    b[kh * segw + wp * cin: kh * segw + (wp + 1) * cin,
                      w * cout:(w + 1) * cout] = w_np[kh, kw]
    return jnp.asarray(b, jnp.bfloat16)


def _pool_row_select(b_tile, H_in, compact):
    """0/1 row-select: picks rmax rows (even image rows) and re-emits either the
    next layer's band layout (halo rows = zero) or a compact layout (last)."""
    hpad_in = H_in + 2
    ho_n = H_in // 2
    rows_in = b_tile * hpad_in - 1            # rmax has Rp-1 rows
    rows_out = b_tile * ho_n if compact else b_tile * (ho_n + 2)
    m = np.zeros((rows_out, rows_in), np.float32)
    for i in range(b_tile):
        for ho in range(ho_n):
            src = i * hpad_in + 1 + 2 * ho
            dst = i * ho_n + ho if compact else i * (ho_n + 2) + 1 + ho
            m[dst, src] = 1.0
    return jnp.asarray(m, jnp.bfloat16)


def _pool_col_select(W_in, C):
    wo_n = W_in // 2
    m = np.zeros(((W_in - 1) * C, wo_n * C), np.float32)
    for wo in range(wo_n):
        for c in range(C):
            m[2 * wo * C + c, wo * C + c] = 1.0
    return jnp.asarray(m, jnp.bfloat16)


def _row_mask(b_tile, H):
    """(Rp,1) mask: 1 on image rows, 0 on the per-image halo rows."""
    hpad = H + 2
    m = np.zeros((b_tile * hpad, 1), np.float32)
    for i in range(b_tile):
        m[i * hpad + 1: i * hpad + 1 + H, 0] = 1.0
    return jnp.asarray(m)


def prepare_phone_net(res_params, dense_params, in_channels, spatial, batch,
                      batch_tile=32):
    H, W = spatial
    C = in_channels
    b_tile = min(batch_tile, batch)
    n_layers = len(res_params)

    layer_cfgs = []
    ops = []
    for li, p in enumerate(res_params):
        Cout = p["w2"].shape[-1]
        layer_cfgs.append((H, W, C, Cout))
        s1, t1 = _fold_bn(p["b1"], p["bn1_gamma"], p["bn1_beta"],
                          p["bn1_mean"], p["bn1_var"])
        s2, t2 = _fold_bn(p["b2"], p["bn2_gamma"], p["bn2_beta"],
                          p["bn2_mean"], p["bn2_var"])
        last = (li == n_layers - 1)
        ops += [
            _banded_conv_weight(p["w1"], W),                 # (3*W*C, W*C)   bf16
            jnp.tile(s1, W).reshape(1, W * C),
            jnp.tile(t1, W).reshape(1, W * C),
            _banded_conv_weight(p["w2"], W),                 # (3*W*C, W*Cout) bf16
            jnp.tile(s2, W).reshape(1, W * Cout),
            jnp.tile(t2, W).reshape(1, W * Cout),
            _pool_row_select(b_tile, H, compact=last),       # bf16
            _pool_col_select(W, Cout),                       # bf16
            _row_mask(b_tile, H),                            # (Rp, 1) f32
        ]
        C = Cout
        H, W = H // 2, W // 2

    # Dense weight: torch flattens NCHW as (C,H,W); permute to our (h, w*C + c)
    # layout and zero-pad the output dim to a lane-dense 128 columns.
    n_out = dense_params["w"].shape[-1]
    n_out_pad = 128
    wd = np.asarray(dense_params["w"], np.float32).reshape(C, H, W, n_out)
    wd = wd.transpose(1, 2, 0, 3).reshape(H * W * C, n_out)
    wd = np.pad(wd, ((0, 0), (0, n_out_pad - n_out)))
    bd = np.pad(np.asarray(dense_params["b"], np.float32),
                (0, n_out_pad - n_out)).reshape(1, n_out_pad)
    ops += [jnp.asarray(wd, jnp.bfloat16), jnp.asarray(bd, jnp.float32)]

    meta = dict(b_tile=b_tile, dense_hf=H, n_out=n_out, n_out_pad=n_out_pad)
    return tuple(layer_cfgs), ops, meta


# --------------------------------------------------------------------------- #
# Forward pass: one pallas_call, batch-tiles on a "parallel" grid axis.
# --------------------------------------------------------------------------- #
def phone_net_forward(x_nchw, layer_cfgs, ops, meta):
    n, c0, h0, w0 = x_nchw.shape
    assert (h0, w0, c0) == tuple(layer_cfgs[0][:3])
    b_tile = meta["b_tile"]
    n_out, n_out_pad = meta["n_out"], meta["n_out_pad"]

    # NCHW -> (n, H, W*C); add one zero halo row above/below each image; pad the
    # batch to a multiple of b_tile; group b_tile images into one row-stacked
    # band-layout block per grid step.
    x2d = jnp.transpose(x_nchw, (0, 2, 3, 1)).reshape(n, h0, w0 * c0)
    x2d = x2d.astype(jnp.float32)
    n_pad = (-n) % b_tile
    xb = jnp.pad(x2d, ((0, n_pad), (1, 1), (0, 0)))
    n_tiles = (n + n_pad) // b_tile
    xb = xb.reshape(n_tiles, b_tile * (h0 + 2), w0 * c0)

    kernel = _make_phone_net_kernel(layer_cfgs, b_tile, meta["dense_hf"],
                                    n_out_pad)

    bcast2d = lambda g: (0, 0)
    in_specs = [pl.BlockSpec((1, b_tile * (h0 + 2), w0 * c0),
                             lambda g: (g, 0, 0))]
    for a in ops:
        in_specs.append(pl.BlockSpec(a.shape, bcast2d))

    # One bf16 staging scratch per layer: (B*(H+2), 3*W*Cin).
    scratch_shapes = [
        pltpu.VMEM((b_tile * (H + 2), 3 * W * Cin), jnp.bfloat16)
        for (H, W, Cin, _Cout) in layer_cfgs
    ]

    out = pl.pallas_call(
        kernel,
        out_shape=jax.ShapeDtypeStruct((n_tiles, b_tile, n_out_pad),
                                       jnp.float32),
        grid=(n_tiles,),
        in_specs=in_specs,
        out_specs=pl.BlockSpec((1, b_tile, n_out_pad), lambda g: (g, 0, 0)),
        scratch_shapes=scratch_shapes,
        compiler_params=pltpu.CompilerParams(
            dimension_semantics=("parallel",)),
    )(xb, *ops)

    return out.reshape(n_tiles * b_tile, n_out_pad)[:n, :n_out]


# --------------------------------------------------------------------------- #
# Synthetic parameters matching the PyTorch module's shapes (eval-mode BN).
# --------------------------------------------------------------------------- #
def init_phone_net_params(key, in_channels, spatial, factor=2, n_res_layers=4):
    res_params = []
    c = in_channels
    h, w = spatial
    for _ in range(n_res_layers):
        cout = c * factor
        key, k1, k2, k3, k4 = jax.random.split(key, 5)
        blk = dict(
            w1=jax.random.normal(k1, (3, 3, c, c), jnp.float32) / jnp.sqrt(9.0 * c),
            b1=0.01 * jax.random.normal(k2, (c,), jnp.float32),
            bn1_gamma=jnp.ones((c,), jnp.float32),
            bn1_beta=jnp.zeros((c,), jnp.float32),
            bn1_mean=jnp.zeros((c,), jnp.float32),
            bn1_var=jnp.ones((c,), jnp.float32),
            w2=jax.random.normal(k3, (3, 3, c, cout), jnp.float32) / jnp.sqrt(9.0 * c),
            b2=0.01 * jax.random.normal(k4, (cout,), jnp.float32),
            bn2_gamma=jnp.ones((cout,), jnp.float32),
            bn2_beta=jnp.zeros((cout,), jnp.float32),
            bn2_mean=jnp.zeros((cout,), jnp.float32),
            bn2_var=jnp.ones((cout,), jnp.float32),
        )
        res_params.append(blk)
        c = cout
        h, w = h // 2, w // 2            # mirrors MaxPool2d(2) per block

    n_inputs = h * w * c
    n_outputs = 2                        # n_dense_layers=1 -> single Linear
    key, kw, kb = jax.random.split(key, 3)
    dense_params = dict(
        w=jax.random.normal(kw, (n_inputs, n_outputs), jnp.float32)
          / jnp.sqrt(float(n_inputs)),
        b=0.01 * jax.random.normal(kb, (n_outputs,), jnp.float32),
    )
    return res_params, dense_params


# --------------------------------------------------------------------------- #
# Pure-JAX reference (eval-mode BN) for a numerical sanity check.
# --------------------------------------------------------------------------- #
def _reference_forward(x_nchw, res_params, dense_params):
    x = jnp.transpose(x_nchw, (0, 2, 3, 1)).astype(jnp.float32)

    def conv_bn_relu(inp, w, b, g, bt, mu, var):
        y = jax.lax.conv_general_dilated(
            inp, w, window_strides=(1, 1), padding="SAME",
            dimension_numbers=("NHWC", "HWIO", "NHWC"))
        y = (y + b - mu) / jnp.sqrt(var + _BN_EPS) * g + bt
        return jnp.maximum(y, 0.0)

    for p in res_params:
        x = conv_bn_relu(x, p["w1"], p["b1"], p["bn1_gamma"], p["bn1_beta"],
                         p["bn1_mean"], p["bn1_var"]) + x
        x = conv_bn_relu(x, p["w2"], p["b2"], p["bn2_gamma"], p["bn2_beta"],
                         p["bn2_mean"], p["bn2_var"])
        x = jax.lax.reduce_window(x, -jnp.inf, jax.lax.max,
                                  (1, 2, 2, 1), (1, 2, 2, 1), "VALID")
    n = x.shape[0]
    flat = jnp.transpose(x, (0, 3, 1, 2)).reshape(n, -1)   # torch Flatten order
    return flat @ dense_params["w"] + dense_params["b"]


# ---------------------------------- main ------------------------------------ #
if __name__ == "__main__":
    key = jax.random.PRNGKey(0)
    key, kx = jax.random.split(key)

    batch, in_channels, spatial = 2, 4, 16
    x = jax.random.normal(kx, (batch, in_channels, spatial, spatial), jnp.float32)

    res_params, dense_params = init_phone_net_params(
        key, in_channels, (spatial, spatial), factor=2, n_res_layers=4)

    layer_cfgs, ops, meta = prepare_phone_net(
        res_params, dense_params, in_channels, (spatial, spatial),
        batch=batch, batch_tile=32)

    out = phone_net_forward(x, layer_cfgs, ops, meta)
    out = jax.block_until_ready(out)
    assert out.shape == (batch, 2), out.shape

    ref = jax.block_until_ready(_reference_forward(x, res_params, dense_params))
    np.testing.assert_allclose(np.asarray(out), np.asarray(ref),
                               rtol=1e-1, atol=1e-1)

    print("KERNEL_OK")
</pallas_src>

<mosaic_0001>
module attributes {stable_mosaic.version = 11 : i64} {
  func.func @kernel(%arg0: i32, %arg1: memref<1x36x64xf32, #tpu.memory_space<vmem>>, %arg2: memref<192x64xbf16, #tpu.memory_space<vmem>>, %arg3: memref<1x64xf32, #tpu.memory_space<vmem>>, %arg4: memref<1x64xf32, #tpu.memory_space<vmem>>, %arg5: memref<192x128xbf16, #tpu.memory_space<vmem>>, %arg6: memref<1x128xf32, #tpu.memory_space<vmem>>, %arg7: memref<1x128xf32, #tpu.memory_space<vmem>>, %arg8: memref<20x35xbf16, #tpu.memory_space<vmem>>, %arg9: memref<120x64xbf16, #tpu.memory_space<vmem>>, %arg10: memref<36x1xf32, #tpu.memory_space<vmem>>, %arg11: memref<192x64xbf16, #tpu.memory_space<vmem>>, %arg12: memref<1x64xf32, #tpu.memory_space<vmem>>, %arg13: memref<1x64xf32, #tpu.memory_space<vmem>>, %arg14: memref<192x128xbf16, #tpu.memory_space<vmem>>, %arg15: memref<1x128xf32, #tpu.memory_space<vmem>>, %arg16: memref<1x128xf32, #tpu.memory_space<vmem>>, %arg17: memref<12x19xbf16, #tpu.memory_space<vmem>>, %arg18: memref<112x64xbf16, #tpu.memory_space<vmem>>, %arg19: memref<20x1xf32, #tpu.memory_space<vmem>>, %arg20: memref<192x64xbf16, #tpu.memory_space<vmem>>, %arg21: memref<1x64xf32, #tpu.memory_space<vmem>>, %arg22: memref<1x64xf32, #tpu.memory_space<vmem>>, %arg23: memref<192x128xbf16, #tpu.memory_space<vmem>>, %arg24: memref<1x128xf32, #tpu.memory_space<vmem>>, %arg25: memref<1x128xf32, #tpu.memory_space<vmem>>, %arg26: memref<8x11xbf16, #tpu.memory_space<vmem>>, %arg27: memref<96x64xbf16, #tpu.memory_space<vmem>>, %arg28: memref<12x1xf32, #tpu.memory_space<vmem>>, %arg29: memref<192x64xbf16, #tpu.memory_space<vmem>>, %arg30: memref<1x64xf32, #tpu.memory_space<vmem>>, %arg31: memref<1x64xf32, #tpu.memory_space<vmem>>, %arg32: memref<192x128xbf16, #tpu.memory_space<vmem>>, %arg33: memref<1x128xf32, #tpu.memory_space<vmem>>, %arg34: memref<1x128xf32, #tpu.memory_space<vmem>>, %arg35: memref<2x7xbf16, #tpu.memory_space<vmem>>, %arg36: memref<64x64xbf16, #tpu.memory_space<vmem>>, %arg37: memref<8x1xf32, #tpu.memory_space<vmem>>, %arg38: memref<64x128xbf16, #tpu.memory_space<vmem>>, %arg39: memref<1x128xf32, #tpu.memory_space<vmem>>, %arg40: memref<1x2x128xf32, #tpu.memory_space<vmem>>, %arg41: memref<36x192xbf16, #tpu.memory_space<vmem>>, %arg42: memref<20x192xbf16, #tpu.memory_space<vmem>>, %arg43: memref<12x192xbf16, #tpu.memory_space<vmem>>, %arg44: memref<8x192xbf16, #tpu.memory_space<vmem>>) attributes {dimension_semantics = [#tpu.dimension_semantics<parallel>], iteration_bounds = array<i64: 1>, scalar_prefetch = 0 : i64, scratch_operands = 4 : i64, tpu.core_type = #tpu.core_type<tc>, window_params = [{transform_indices = @transform_0, window_bounds = array<i64: 1, 36, 64>}, {pipeline_mode = #tpu.pipeline_mode<synchronous>, transform_indices = @transform_1, window_bounds = array<i64: 192, 64>}, {pipeline_mode = #tpu.pipeline_mode<synchronous>, transform_indices = @transform_2, window_bounds = array<i64: 1, 64>}, {pipeline_mode = #tpu.pipeline_mode<synchronous>, transform_indices = @transform_3, window_bounds = array<i64: 1, 64>}, {pipeline_mode = #tpu.pipeline_mode<synchronous>, transform_indices = @transform_4, window_bounds = array<i64: 192, 128>}, {pipeline_mode = #tpu.pipeline_mode<synchronous>, transform_indices = @transform_5, window_bounds = array<i64: 1, 128>}, {pipeline_mode = #tpu.pipeline_mode<synchronous>, transform_indices = @transform_6, window_bounds = array<i64: 1, 128>}, {pipeline_mode = #tpu.pipeline_mode<synchronous>, transform_indices = @transform_7, window_bounds = array<i64: 20, 35>}, {pipeline_mode = #tpu.pipeline_mode<synchronous>, transform_indices = @transform_8, window_bounds = array<i64: 120, 64>}, {pipeline_mode = #tpu.pipeline_mode<synchronous>, transform_indices = @transform_9, window_bounds = array<i64: 36, 1>}, {pipeline_mode = #tpu.pipeline_mode<synchronous>, transform_indices = @transform_10, window_bounds = array<i64: 192, 64>}, {pipeline_mode = #tpu.pipeline_mode<synchronous>, transform_indices = @transform_11, window_bounds = array<i64: 1, 64>}, {pipeline_mode = #tpu.pipeline_mode<synchronous>, transform_indices = @transform_12, window_bounds = array<i64: 1, 64>}, {pipeline_mode = #tpu.pipeline_mode<synchronous>, transform_indices = @transform_13, window_bounds = array<i64: 192, 128>}, {pipeline_mode = #tpu.pipeline_mode<synchronous>, transform_indices = @transform_14, window_bounds = array<i64: 1, 128>}, {pipeline_mode = #tpu.pipeline_mode<synchronous>, transform_indices = @transform_15, window_bounds = array<i64: 1, 128>}, {pipeline_mode = #tpu.pipeline_mode<synchronous>, transform_indices = @transform_16, window_bounds = array<i64: 12, 19>}, {pipeline_mode = #tpu.pipeline_mode<synchronous>, transform_indices = @transform_17, window_bounds = array<i64: 112, 64>}, {pipeline_mode = #tpu.pipeline_mode<synchronous>, transform_indices = @transform_18, window_bounds = array<i64: 20, 1>}, {pipeline_mode = #tpu.pipeline_mode<synchronous>, transform_indices = @transform_19, window_bounds = array<i64: 192, 64>}, {pipeline_mode = #tpu.pipeline_mode<synchronous>, transform_indices = @transform_20, window_bounds = array<i64: 1, 64>}, {pipeline_mode = #tpu.pipeline_mode<synchronous>, transform_indices = @transform_21, window_bounds = array<i64: 1, 64>}, {pipeline_mode = #tpu.pipeline_mode<synchronous>, transform_indices = @transform_22, window_bounds = array<i64: 192, 128>}, {pipeline_mode = #tpu.pipeline_mode<synchronous>, transform_indices = @transform_23, window_bounds = array<i64: 1, 128>}, {pipeline_mode = #tpu.pipeline_mode<synchronous>, transform_indices = @transform_24, window_bounds = array<i64: 1, 128>}, {pipeline_mode = #tpu.pipeline_mode<synchronous>, transform_indices = @transform_25, window_bounds = array<i64: 8, 11>}, {pipeline_mode = #tpu.pipeline_mode<synchronous>, transform_indices = @transform_26, window_bounds = array<i64: 96, 64>}, {pipeline_mode = #tpu.pipeline_mode<synchronous>, transform_indices = @transform_27, window_bounds = array<i64: 12, 1>}, {pipeline_mode = #tpu.pipeline_mode<synchronous>, transform_indices = @transform_28, window_bounds = array<i64: 192, 64>}, {pipeline_mode = #tpu.pipeline_mode<synchronous>, transform_indices = @transform_29, window_bounds = array<i64: 1, 64>}, {pipeline_mode = #tpu.pipeline_mode<synchronous>, transform_indices = @transform_30, window_bounds = array<i64: 1, 64>}, {pipeline_mode = #tpu.pipeline_mode<synchronous>, transform_indices = @transform_31, window_bounds = array<i64: 192, 128>}, {pipeline_mode = #tpu.pipeline_mode<synchronous>, transform_indices = @transform_32, window_bounds = array<i64: 1, 128>}, {pipeline_mode = #tpu.pipeline_mode<synchronous>, transform_indices = @transform_33, window_bounds = array<i64: 1, 128>}, {pipeline_mode = #tpu.pipeline_mode<synchronous>, transform_indices = @transform_34, window_bounds = array<i64: 2, 7>}, {pipeline_mode = #tpu.pipeline_mode<synchronous>, transform_indices = @transform_35, window_bounds = array<i64: 64, 64>}, {pipeline_mode = #tpu.pipeline_mode<synchronous>, transform_indices = @transform_36, window_bounds = array<i64: 8, 1>}, {pipeline_mode = #tpu.pipeline_mode<synchronous>, transform_indices = @transform_37, window_bounds = array<i64: 64, 128>}, {pipeline_mode = #tpu.pipeline_mode<synchronous>, transform_indices = @transform_38, window_bounds = array<i64: 1, 128>}, {transform_indices = @transform_39, window_bounds = array<i64: 1, 2, 128>}]} {
    %c0 = arith.constant 0 : index
    %c0_0 = arith.constant 0 : index
    %c0_1 = arith.constant 0 : index
    %0 = vector.load %arg1[%c0, %c0_0, %c0_1] : memref<1x36x64xf32, #tpu.memory_space<vmem>>, vector<1x36x64xf32>
    %1 = vector.shape_cast %0 : vector<1x36x64xf32> to vector<36x64xf32>
    %cst = arith.constant 0.000000e+00 : bf16
    %2 = vector.broadcast %cst : bf16 to vector<1x64xbf16>
    %c0_2 = arith.constant 0 : index
    %c0_3 = arith.constant 0 : index
    %3 = vector.load %arg41[%c0_2, %c0_3] : memref<36x192xbf16, #tpu.memory_space<vmem>>, vector<1x64xbf16>
    tpu.vector_store %arg41[%c0_2, %c0_3], %2 {strides = array<i32>} : memref<36x192xbf16, #tpu.memory_space<vmem>>, vector<1x64xbf16>,
    %cst_4 = arith.constant 0.000000e+00 : bf16
    %4 = vector.broadcast %cst_4 : bf16 to vector<1x64xbf16>
    %c35 = arith.constant 35 : index
    %c128 = arith.constant 128 : index
    %5 = vector.load %arg41[%c35, %c128] : memref<36x192xbf16, #tpu.memory_space<vmem>>, vector<1x64xbf16>
    tpu.vector_store %arg41[%c35, %c128], %4 {strides = array<i32>} : memref<36x192xbf16, #tpu.memory_space<vmem>>, vector<1x64xbf16>,
    %6 = arith.truncf %1 : vector<36x64xf32> to vector<36x64xbf16>
    %7 = vector.extract_strided_slice %6 {offsets = [0, 0], sizes = [35, 64], strides = [1, 1]} : vector<36x64xbf16> to vector<35x64xbf16>
    %c1 = arith.constant 1 : index
    %c0_5 = arith.constant 0 : index
    %8 = vector.load %arg41[%c1, %c0_5] : memref<36x192xbf16, #tpu.memory_space<vmem>>, vector<35x64xbf16>
    tpu.vector_store %arg41[%c1, %c0_5], %7 {strides = array<i32>} : memref<36x192xbf16, #tpu.memory_space<vmem>>, vector<35x64xbf16>,
    %c0_6 = arith.constant 0 : index
    %c64 = arith.constant 64 : index
    %9 = vector.load %arg41[%c0_6, %c64] : memref<36x192xbf16, #tpu.memory_space<vmem>>, vector<36x64xbf16>
    tpu.vector_store %arg41[%c0_6, %c64], %6 {strides = array<i32>} : memref<36x192xbf16, #tpu.memory_space<vmem>>, vector<36x64xbf16>,
    %10 = vector.extract_strided_slice %6 {offsets = [1, 0], sizes = [35, 64], strides = [1, 1]} : vector<36x64xbf16> to vector<35x64xbf16>
    %c0_7 = arith.constant 0 : index
    %c128_8 = arith.constant 128 : index
    %11 = vector.load %arg41[%c0_7, %c128_8] : memref<36x192xbf16, #tpu.memory_space<vmem>>, vector<35x64xbf16>
    tpu.vector_store %arg41[%c0_7, %c128_8], %10 {strides = array<i32>} : memref<36x192xbf16, #tpu.memory_space<vmem>>, vector<35x64xbf16>,
    %c0_9 = arith.constant 0 : index
    %c0_10 = arith.constant 0 : index
    %12 = vector.load %arg41[%c0_9, %c0_10] : memref<36x192xbf16, #tpu.memory_space<vmem>>, vector<36x192xbf16>
    %c0_11 = arith.constant 0 : index
    %c0_12 = arith.constant 0 : index
    %13 = vector.load %arg2[%c0_11, %c0_12] : memref<192x64xbf16, #tpu.memory_space<vmem>>, vector<192x64xbf16>
    %cst_13 = arith.constant dense<0.000000e+00> : vector<36x64xf32>
    %14 = tpu.matmul %12, %13, %cst_13 {dimension_numbers = #tpu.dot_dimension_numbers<[1], [0], [0], [1], [0, 0, 1, 1], [], []>} : vector<36x192xbf16>, vector<192x64xbf16>, vector<36x64xf32> -> vector<36x64xf32>
    %c0_14 = arith.constant 0 : index
    %c0_15 = arith.constant 0 : index
    %15 = vector.load %arg3[%c0_14, %c0_15] : memref<1x64xf32, #tpu.memory_space<vmem>>, vector<1x64xf32>
    %16 = vector.broadcast %15 : vector<1x64xf32> to vector<36x64xf32>
    %17 = arith.mulf %14, %16 : vector<36x64xf32>
    %c0_16 = arith.constant 0 : index
    %c0_17 = arith.constant 0 : index
    %18 = vector.load %arg4[%c0_16, %c0_17] : memref<1x64xf32, #tpu.memory_space<vmem>>, vector<1x64xf32>
    %19 = vector.broadcast %18 : vector<1x64xf32> to vector<36x64xf32>
    %20 = arith.addf %17, %19 : vector<36x64xf32>
    %cst_18 = arith.constant 0.000000e+00 : f32
    %21 = vector.broadcast %cst_18 : f32 to vector<36x64xf32>
    %22 = arith.maximumf %20, %21 : vector<36x64xf32>
    %c0_19 = arith.constant 0 : index
    %c0_20 = arith.constant 0 : index
    %23 = vector.load %arg10[%c0_19, %c0_20] : memref<36x1xf32, #tpu.memory_space<vmem>>, vector<36x1xf32>
    %24 = vector.broadcast %23 : vector<36x1xf32> to vector<36x64xf32>
    %25 = arith.mulf %22, %24 : vector<36x64xf32>
    %26 = arith.addf %25, %1 : vector<36x64xf32>
    %27 = arith.truncf %26 : vector<36x64xf32> to vector<36x64xbf16>
    %28 = vector.extract_strided_slice %27 {offsets = [0, 0], sizes = [35, 64], strides = [1, 1]} : vector<36x64xbf16> to vector<35x64xbf16>
    %c1_21 = arith.constant 1 : index
    %c0_22 = arith.constant 0 : index
    %29 = vector.load %arg41[%c1_21, %c0_22] : memref<36x192xbf16, #tpu.memory_space<vmem>>, vector<35x64xbf16>
    tpu.vector_store %arg41[%c1_21, %c0_22], %28 {strides = array<i32>} : memref<36x192xbf16, #tpu.memory_space<vmem>>, vector<35x64xbf16>,
    %c0_23 = arith.constant 0 : index
    %c64_24 = arith.constant 64 : index
    %30 = vector.load %arg41[%c0_23, %c64_24] : memref<36x192xbf16, #tpu.memory_space<vmem>>, vector<36x64xbf16>
    tpu.vector_store %arg41[%c0_23, %c64_24], %27 {strides = array<i32>} : memref<36x192xbf16, #tpu.memory_space<vmem>>, vector<36x64xbf16>,
    %31 = vector.extract_strided_slice %27 {offsets = [1, 0], sizes = [35, 64], strides = [1, 1]} : vector<36x64xbf16> to vector<35x64xbf16>
    %c0_25 = arith.constant 0 : index
    %c128_26 = arith.constant 128 : index
    %32 = vector.load %arg41[%c0_25, %c128_26] : memref<36x192xbf16, #tpu.memory_space<vmem>>, vector<35x64xbf16>
    tpu.vector_store %arg41[%c0_25, %c128_26], %31 {strides = array<i32>} : memref<36x192xbf16, #tpu.memory_space<vmem>>, vector<35x64xbf16>,
    %c0_27 = arith.constant 0 : index
    %c0_28 = arith.constant 0 : index
    %33 = vector.load %arg41[%c0_27, %c0_28] : memref<36x192xbf16, #tpu.memory_space<vmem>>, vector<36x192xbf16>
    %c0_29 = arith.constant 0 : index
    %c0_30 = arith.constant 0 : index
    %34 = vector.load %arg5[%c0_29, %c0_30] : memref<192x128xbf16, #tpu.memory_space<vmem>>, vector<192x128xbf16>
    %cst_31 = arith.constant dense<0.000000e+00> : vector<36x128xf32>
    %35 = tpu.matmul %33, %34, %cst_31 {dimension_numbers = #tpu.dot_dimension_numbers<[1], [0], [0], [1], [0, 0, 1, 1], [], []>} : vector<36x192xbf16>, vector<192x128xbf16>, vector<36x128xf32> -> vector<36x128xf32>
    %c0_32 = arith.constant 0 : index
    %c0_33 = arith.constant 0 : index
    %36 = vector.load %arg6[%c0_32, %c0_33] : memref<1x128xf32, #tpu.memory_space<vmem>>, vector<1x128xf32>
    %37 = vector.broadcast %36 : vector<1x128xf32> to vector<36x128xf32>
    %38 = arith.mulf %35, %37 : vector<36x128xf32>
    %c0_34 = arith.constant 0 : index
    %c0_35 = arith.constant 0 : index
    %39 = vector.load %arg7[%c0_34, %c0_35] : memref<1x128xf32, #tpu.memory_space<vmem>>, vector<1x128xf32>
    %40 = vector.broadcast %39 : vector<1x128xf32> to vector<36x128xf32>
    %41 = arith.addf %38, %40 : vector<36x128xf32>
    %cst_36 = arith.constant 0.000000e+00 : f32
    %42 = vector.broadcast %cst_36 : f32 to vector<36x128xf32>
    %43 = arith.maximumf %41, %42 : vector<36x128xf32>
    %44 = vector.extract_strided_slice %43 {offsets = [0, 0], sizes = [35, 128], strides = [1, 1]} : vector<36x128xf32> to vector<35x128xf32>
    %45 = vector.extract_strided_slice %43 {offsets = [1, 0], sizes = [35, 128], strides = [1, 1]} : vector<36x128xf32> to vector<35x128xf32>
    %46 = arith.maximumf %44, %45 : vector<35x128xf32>
    %47 = vector.extract_strided_slice %46 {offsets = [0, 0], sizes = [35, 120], strides = [1, 1]} : vector<35x128xf32> to vector<35x120xf32>
    %48 = vector.extract_strided_slice %46 {offsets = [0, 8], sizes = [35, 120], strides = [1, 1]} : vector<35x128xf32> to vector<35x120xf32>
    %49 = arith.maximumf %47, %48 : vector<35x120xf32>
    %c0_37 = arith.constant 0 : index
    %c0_38 = arith.constant 0 : index
    %50 = vector.load %arg8[%c0_37, %c0_38] : memref<20x35xbf16, #tpu.memory_space<vmem>>, vector<20x35xbf16>
    %51 = arith.truncf %49 : vector<35x120xf32> to vector<35x120xbf16>
    %cst_39 = arith.constant dense<0.000000e+00> : vector<20x120xf32>
    %52 = tpu.matmul %50, %51, %cst_39 {dimension_numbers = #tpu.dot_dimension_numbers<[1], [0], [0], [1], [0, 0, 1, 1], [], []>} : vector<20x35xbf16>, vector<35x120xbf16>, vector<20x120xf32> -> vector<20x120xf32>
    %53 = arith.truncf %52 : vector<20x120xf32> to vector<20x120xbf16>
    %c0_40 = arith.constant 0 : index
    %c0_41 = arith.constant 0 : index
    %54 = vector.load %arg9[%c0_40, %c0_41] : memref<120x64xbf16, #tpu.memory_space<vmem>>, vector<120x64xbf16>
    %cst_42 = arith.constant dense<0.000000e+00> : vector<20x64xf32>
    %55 = tpu.matmul %53, %54, %cst_42 {dimension_numbers = #tpu.dot_dimension_numbers<[1], [0], [0], [1], [0, 0, 1, 1], [], []>} : vector<20x120xbf16>, vector<120x64xbf16>, vector<20x64xf32> -> vector<20x64xf32>
    %cst_43 = arith.constant 0.000000e+00 : bf16
    %56 = vector.broadcast %cst_43 : bf16 to vector<1x64xbf16>
    %c0_44 = arith.constant 0 : index
    %c0_45 = arith.constant 0 : index
    %57 = vector.load %arg42[%c0_44, %c0_45] : memref<20x192xbf16, #tpu.memory_space<vmem>>, vector<1x64xbf16>
    tpu.vector_store %arg42[%c0_44, %c0_45], %56 {strides = array<i32>} : memref<20x192xbf16, #tpu.memory_space<vmem>>, vector<1x64xbf16>,
    %cst_46 = arith.constant 0.000000e+00 : bf16
    %58 = vector.broadcast %cst_46 : bf16 to vector<1x64xbf16>
    %c19 = arith.constant 19 : index
    %c128_47 = arith.constant 128 : index
    %59 = vector.load %arg42[%c19, %c128_47] : memref<20x192xbf16, #tpu.memory_space<vmem>>, vector<1x64xbf16>
    tpu.vector_store %arg42[%c19, %c128_47], %58 {strides = array<i32>} : memref<20x192xbf16, #tpu.memory_space<vmem>>, vector<1x64xbf16>,
    %60 = arith.truncf %55 : vector<20x64xf32> to vector<20x64xbf16>
    %61 = vector.extract_strided_slice %60 {offsets = [0, 0], sizes = [19, 64], strides = [1, 1]} : vector<20x64xbf16> to vector<19x64xbf16>
    %c1_48 = arith.constant 1 : index
    %c0_49 = arith.constant 0 : index
    %62 = vector.load %arg42[%c1_48, %c0_49] : memref<20x192xbf16, #tpu.memory_space<vmem>>, vector<19x64xbf16>
    tpu.vector_store %arg42[%c1_48, %c0_49], %61 {strides = array<i32>} : memref<20x192xbf16, #tpu.memory_space<vmem>>, vector<19x64xbf16>,
    %c0_50 = arith.constant 0 : index
    %c64_51 = arith.constant 64 : index
    %63 = vector.load %arg42[%c0_50, %c64_51] : memref<20x192xbf16, #tpu.memory_space<vmem>>, vector<20x64xbf16>
    tpu.vector_store %arg42[%c0_50, %c64_51], %60 {strides = array<i32>} : memref<20x192xbf16, #tpu.memory_space<vmem>>, vector<20x64xbf16>,
    %64 = vector.extract_strided_slice %60 {offsets = [1, 0], sizes = [19, 64], strides = [1, 1]} : vector<20x64xbf16> to vector<19x64xbf16>
    %c0_52 = arith.constant 0 : index
    %c128_53 = arith.constant 128 : index
    %65 = vector.load %arg42[%c0_52, %c128_53] : memref<20x192xbf16, #tpu.memory_space<vmem>>, vector<19x64xbf16>
    tpu.vector_store %arg42[%c0_52, %c128_53], %64 {strides = array<i32>} : memref<20x192xbf16, #tpu.memory_space<vmem>>, vector<19x64xbf16>,
    %c0_54 = arith.constant 0 : index
    %c0_55 = arith.constant 0 : index
    %66 = vector.load %arg42[%c0_54, %c0_55] : memref<20x192xbf16, #tpu.memory_space<vmem>>, vector<20x192xbf16>
    %c0_56 = arith.constant 0 : index
    %c0_57 = arith.constant 0 : index
    %67 = vector.load %arg11[%c0_56, %c0_57] : memref<192x64xbf16, #tpu.memory_space<vmem>>, vector<192x64xbf16>
    %cst_58 = arith.constant dense<0.000000e+00> : vector<20x64xf32>
    %68 = tpu.matmul %66, %67, %cst_58 {dimension_numbers = #tpu.dot_dimension_numbers<[1], [0], [0], [1], [0, 0, 1, 1], [], []>} : vector<20x192xbf16>, vector<192x64xbf16>, vector<20x64xf32> -> vector<20x64xf32>
    %c0_59 = arith.constant 0 : index
    %c0_60 = arith.constant 0 : index
    %69 = vector.load %arg12[%c0_59, %c0_60] : memref<1x64xf32, #tpu.memory_space<vmem>>, vector<1x64xf32>
    %70 = vector.broadcast %69 : vector<1x64xf32> to vector<20x64xf32>
    %71 = arith.mulf %68, %70 : vector<20x64xf32>
    %c0_61 = arith.constant 0 : index
    %c0_62 = arith.constant 0 : index
    %72 = vector.load %arg13[%c0_61, %c0_62] : memref<1x64xf32, #tpu.memory_space<vmem>>, vector<1x64xf32>
    %73 = vector.broadcast %72 : vector<1x64xf32> to vector<20x64xf32>
    %74 = arith.addf %71, %73 : vector<20x64xf32>
    %cst_63 = arith.constant 0.000000e+00 : f32
    %75 = vector.broadcast %cst_63 : f32 to vector<20x64xf32>
    %76 = arith.maximumf %74, %75 : vector<20x64xf32>
    %c0_64 = arith.constant 0 : index
    %c0_65 = arith.constant 0 : index
    %77 = vector.load %arg19[%c0_64, %c0_65] : memref<20x1xf32, #tpu.memory_space<vmem>>, vector<20x1xf32>
    %78 = vector.broadcast %77 : vector<20x1xf32> to vector<20x64xf32>
    %79 = arith.mulf %76, %78 : vector<20x64xf32>
    %80 = arith.addf %79, %55 : vector<20x64xf32>
    %81 = arith.truncf %80 : vector<20x64xf32> to vector<20x64xbf16>
    %82 = vector.extract_strided_slice %81 {offsets = [0, 0], sizes = [19, 64], strides = [1, 1]} : vector<20x64xbf16> to vector<19x64xbf16>
    %c1_66 = arith.constant 1 : index
    %c0_67 = arith.constant 0 : index
    %83 = vector.load %arg42[%c1_66, %c0_67] : memref<20x192xbf16, #tpu.memory_space<vmem>>, vector<19x64xbf16>
    tpu.vector_store %arg42[%c1_66, %c0_67], %82 {strides = array<i32>} : memref<20x192xbf16, #tpu.memory_space<vmem>>, vector<19x64xbf16>,
    %c0_68 = arith.constant 0 : index
    %c64_69 = arith.constant 64 : index
    %84 = vector.load %arg42[%c0_68, %c64_69] : memref<20x192xbf16, #tpu.memory_space<vmem>>, vector<20x64xbf16>
    tpu.vector_store %arg42[%c0_68, %c64_69], %81 {strides = array<i32>} : memref<20x192xbf16, #tpu.memory_space<vmem>>, vector<20x64xbf16>,
    %85 = vector.extract_strided_slice %81 {offsets = [1, 0], sizes = [19, 64], strides = [1, 1]} : vector<20x64xbf16> to vector<19x64xbf16>
    %c0_70 = arith.constant 0 : index
    %c128_71 = arith.constant 128 : index
    %86 = vector.load %arg42[%c0_70, %c128_71] : memref<20x192xbf16, #tpu.memory_space<vmem>>, vector<19x64xbf16>
    tpu.vector_store %arg42[%c0_70, %c128_71], %85 {strides = array<i32>} : memref<20x192xbf16, #tpu.memory_space<vmem>>, vector<19x64xbf16>,
    %c0_72 = arith.constant 0 : index
    %c0_73 = arith.constant 0 : index
    %87 = vector.load %arg42[%c0_72, %c0_73] : memref<20x192xbf16, #tpu.memory_space<vmem>>, vector<20x192xbf16>
    %c0_74 = arith.constant 0 : index
    %c0_75 = arith.constant 0 : index
    %88 = vector.load %arg14[%c0_74, %c0_75] : memref<192x128xbf16, #tpu.memory_space<vmem>>, vector<192x128xbf16>
    %cst_76 = arith.constant dense<0.000000e+00> : vector<20x128xf32>
    %89 = tpu.matmul %87, %88, %cst_76 {dimension_numbers = #tpu.dot_dimension_numbers<[1], [0], [0], [1], [0, 0, 1, 1], [], []>} : vector<20x192xbf16>, vector<192x128xbf16>, vector<20x128xf32> -> vector<20x128xf32>
    %c0_77 = arith.constant 0 : index
    %c0_78 = arith.constant 0 : index
    %90 = vector.load %arg15[%c0_77, %c0_78] : memref<1x128xf32, #tpu.memory_space<vmem>>, vector<1x128xf32>
    %91 = vector.broadcast %90 : vector<1x128xf32> to vector<20x128xf32>
    %92 = arith.mulf %89, %91 : vector<20x128xf32>
    %c0_79 = arith.constant 0 : index
    %c0_80 = arith.constant 0 : index
    %93 = vector.load %arg16[%c0_79, %c0_80] : memref<1x128xf32, #tpu.memory_space<vmem>>, vector<1x128xf32>
    %94 = vector.broadcast %93 : vector<1x128xf32> to vector<20x128xf32>
    %95 = arith.addf %92, %94 : vector<20x128xf32>
    %cst_81 = arith.constant 0.000000e+00 : f32
    %96 = vector.broadcast %cst_81 : f32 to vector<20x128xf32>
    %97 = arith.maximumf %95, %96 : vector<20x128xf32>
    %98 = vector.extract_strided_slice %97 {offsets = [0, 0], sizes = [19, 128], strides = [1, 1]} : vector<20x128xf32> to vector<19x128xf32>
    %99 = vector.extract_strided_slice %97 {offsets = [1, 0], sizes = [19, 128], strides = [1, 1]} : vector<20x128xf32> to vector<19x128xf32>
    %100 = arith.maximumf %98, %99 : vector<19x128xf32>
    %101 = vector.extract_strided_slice %100 {offsets = [0, 0], sizes = [19, 112], strides = [1, 1]} : vector<19x128xf32> to vector<19x112xf32>
    %102 = vector.extract_strided_slice %100 {offsets = [0, 16], sizes = [19, 112], strides = [1, 1]} : vector<19x128xf32> to vector<19x112xf32>
    %103 = arith.maximumf %101, %102 : vector<19x112xf32>
    %c0_82 = arith.constant 0 : index
    %c0_83 = arith.constant 0 : index
    %104 = vector.load %arg17[%c0_82, %c0_83] : memref<12x19xbf16, #tpu.memory_space<vmem>>, vector<12x19xbf16>
    %105 = arith.truncf %103 : vector<19x112xf32> to vector<19x112xbf16>
    %cst_84 = arith.constant dense<0.000000e+00> : vector<12x112xf32>
    %106 = tpu.matmul %104, %105, %cst_84 {dimension_numbers = #tpu.dot_dimension_numbers<[1], [0], [0], [1], [0, 0, 1, 1], [], []>} : vector<12x19xbf16>, vector<19x112xbf16>, vector<12x112xf32> -> vector<12x112xf32>
    %107 = arith.truncf %106 : vector<12x112xf32> to vector<12x112xbf16>
    %c0_85 = arith.constant 0 : index
    %c0_86 = arith.constant 0 : index
    %108 = vector.load %arg18[%c0_85, %c0_86] : memref<112x64xbf16, #tpu.memory_space<vmem>>, vector<112x64xbf16>
    %cst_87 = arith.constant dense<0.000000e+00> : vector<12x64xf32>
    %109 = tpu.matmul %107, %108, %cst_87 {dimension_numbers = #tpu.dot_dimension_numbers<[1], [0], [0], [1], [0, 0, 1, 1], [], []>} : vector<12x112xbf16>, vector<112x64xbf16>, vector<12x64xf32> -> vector<12x64xf32>
    %cst_88 = arith.constant 0.000000e+00 : bf16
    %110 = vector.broadcast %cst_88 : bf16 to vector<1x64xbf16>
    %c0_89 = arith.constant 0 : index
    %c0_90 = arith.constant 0 : index
    %111 = vector.load %arg43[%c0_89, %c0_90] : memref<12x192xbf16, #tpu.memory_space<vmem>>, vector<1x64xbf16>
    tpu.vector_store %arg43[%c0_89, %c0_90], %110 {strides = array<i32>} : memref<12x192xbf16, #tpu.memory_space<vmem>>, vector<1x64xbf16>,
    %cst_91 = arith.constant 0.000000e+00 : bf16
    %112 = vector.broadcast %cst_91 : bf16 to vector<1x64xbf16>
    %c11 = arith.constant 11 : index
    %c128_92 = arith.constant 128 : index
    %113 = vector.load %arg43[%c11, %c128_92] : memref<12x192xbf16, #tpu.memory_space<vmem>>, vector<1x64xbf16>
    tpu.vector_store %arg43[%c11, %c128_92], %112 {strides = array<i32>} : memref<12x192xbf16, #tpu.memory_space<vmem>>, vector<1x64xbf16>,
    %114 = arith.truncf %109 : vector<12x64xf32> to vector<12x64xbf16>
    %115 = vector.extract_strided_slice %114 {offsets = [0, 0], sizes = [11, 64], strides = [1, 1]} : vector<12x64xbf16> to vector<11x64xbf16>
    %c1_93 = arith.constant 1 : index
    %c0_94 = arith.constant 0 : index
    %116 = vector.load %arg43[%c1_93, %c0_94] : memref<12x192xbf16, #tpu.memory_space<vmem>>, vector<11x64xbf16>
    tpu.vector_store %arg43[%c1_93, %c0_94], %115 {strides = array<i32>} : memref<12x192xbf16, #tpu.memory_space<vmem>>, vector<11x64xbf16>,
    %c0_95 = arith.constant 0 : index
    %c64_96 = arith.constant 64 : index
    %117 = vector.load %arg43[%c0_95, %c64_96] : memref<12x192xbf16, #tpu.memory_space<vmem>>, vector<12x64xbf16>
    tpu.vector_store %arg43[%c0_95, %c64_96], %114 {strides = array<i32>} : memref<12x192xbf16, #tpu.memory_space<vmem>>, vector<12x64xbf16>,
    %118 = vector.extract_strided_slice %114 {offsets = [1, 0], sizes = [11, 64], strides = [1, 1]} : vector<12x64xbf16> to vector<11x64xbf16>
    %c0_97 = arith.constant 0 : index
    %c128_98 = arith.constant 128 : index
    %119 = vector.load %arg43[%c0_97, %c128_98] : memref<12x192xbf16, #tpu.memory_space<vmem>>, vector<11x64xbf16>
    tpu.vector_store %arg43[%c0_97, %c128_98], %118 {strides = array<i32>} : memref<12x192xbf16, #tpu.memory_space<vmem>>, vector<11x64xbf16>,
    %c0_99 = arith.constant 0 : index
    %c0_100 = arith.constant 0 : index
    %120 = vector.load %arg43[%c0_99, %c0_100] : memref<12x192xbf16, #tpu.memory_space<vmem>>, vector<12x192xbf16>
    %c0_101 = arith.constant 0 : index
    %c0_102 = arith.constant 0 : index
    %121 = vector.load %arg20[%c0_101, %c0_102] : memref<192x64xbf16, #tpu.memory_space<vmem>>, vector<192x64xbf16>
    %cst_103 = arith.constant dense<0.000000e+00> : vector<12x64xf32>
    %122 = tpu.matmul %120, %121, %cst_103 {dimension_numbers = #tpu.dot_dimension_numbers<[1], [0], [0], [1], [0, 0, 1, 1], [], []>} : vector<12x192xbf16>, vector<192x64xbf16>, vector<12x64xf32> -> vector<12x64xf32>
    %c0_104 = arith.constant 0 : index
    %c0_105 = arith.constant 0 : index
    %123 = vector.load %arg21[%c0_104, %c0_105] : memref<1x64xf32, #tpu.memory_space<vmem>>, vector<1x64xf32>
    %124 = vector.broadcast %123 : vector<1x64xf32> to vector<12x64xf32>
    %125 = arith.mulf %122, %124 : vector<12x64xf32>
    %c0_106 = arith.constant 0 : index
    %c0_107 = arith.constant 0 : index
    %126 = vector.load %arg22[%c0_106, %c0_107] : memref<1x64xf32, #tpu.memory_space<vmem>>, vector<1x64xf32>
    %127 = vector.broadcast %126 : vector<1x64xf32> to vector<12x64xf32>
    %128 = arith.addf %125, %127 : vector<12x64xf32>
    %cst_108 = arith.constant 0.000000e+00 : f32
    %129 = vector.broadcast %cst_108 : f32 to vector<12x64xf32>
    %130 = arith.maximumf %128, %129 : vector<12x64xf32>
    %c0_109 = arith.constant 0 : index
    %c0_110 = arith.constant 0 : index
    %131 = vector.load %arg28[%c0_109, %c0_110] : memref<12x1xf32, #tpu.memory_space<vmem>>, vector<12x1xf32>
    %132 = vector.broadcast %131 : vector<12x1xf32> to vector<12x64xf32>
    %133 = arith.mulf %130, %132 : vector<12x64xf32>
    %134 = arith.addf %133, %109 : vector<12x64xf32>
    %135 = arith.truncf %134 : vector<12x64xf32> to vector<12x64xbf16>
    %136 = vector.extract_strided_slice %135 {offsets = [0, 0], sizes = [11, 64], strides = [1, 1]} : vector<12x64xbf16> to vector<11x64xbf16>
    %c1_111 = arith.constant 1 : index
    %c0_112 = arith.constant 0 : index
    %137 = vector.load %arg43[%c1_111, %c0_112] : memref<12x192xbf16, #tpu.memory_space<vmem>>, vector<11x64xbf16>
    tpu.vector_store %arg43[%c1_111, %c0_112], %136 {strides = array<i32>} : memref<12x192xbf16, #tpu.memory_space<vmem>>, vector<11x64xbf16>,
    %c0_113 = arith.constant 0 : index
    %c64_114 = arith.constant 64 : index
    %138 = vector.load %arg43[%c0_113, %c64_114] : memref<12x192xbf16, #tpu.memory_space<vmem>>, vector<12x64xbf16>
    tpu.vector_store %arg43[%c0_113, %c64_114], %135 {strides = array<i32>} : memref<12x192xbf16, #tpu.memory_space<vmem>>, vector<12x64xbf16>,
    %139 = vector.extract_strided_slice %135 {offsets = [1, 0], sizes = [11, 64], strides = [1, 1]} : vector<12x64xbf16> to vector<11x64xbf16>
    %c0_115 = arith.constant 0 : index
    %c128_116 = arith.constant 128 : index
    %140 = vector.load %arg43[%c0_115, %c128_116] : memref<12x192xbf16, #tpu.memory_space<vmem>>, vector<11x64xbf16>
    tpu.vector_store %arg43[%c0_115, %c128_116], %139 {strides = array<i32>} : memref<12x192xbf16, #tpu.memory_space<vmem>>, vector<11x64xbf16>,
    %c0_117 = arith.constant 0 : index
    %c0_118 = arith.constant 0 : index
    %141 = vector.load %arg43[%c0_117, %c0_118] : memref<12x192xbf16, #tpu.memory_space<vmem>>, vector<12x192xbf16>
    %c0_119 = arith.constant 0 : index
    %c0_120 = arith.constant 0 : index
    %142 = vector.load %arg23[%c0_119, %c0_120] : memref<192x128xbf16, #tpu.memory_space<vmem>>, vector<192x128xbf16>
    %cst_121 = arith.constant dense<0.000000e+00> : vector<12x128xf32>
    %143 = tpu.matmul %141, %142, %cst_121 {dimension_numbers = #tpu.dot_dimension_numbers<[1], [0], [0], [1], [0, 0, 1, 1], [], []>} : vector<12x192xbf16>, vector<192x128xbf16>, vector<12x128xf32> -> vector<12x128xf32>
    %c0_122 = arith.constant 0 : index
    %c0_123 = arith.constant 0 : index
    %144 = vector.load %arg24[%c0_122, %c0_123] : memref<1x128xf32, #tpu.memory_space<vmem>>, vector<1x128xf32>
    %145 = vector.broadcast %144 : vector<1x128xf32> to vector<12x128xf32>
    %146 = arith.mulf %143, %145 : vector<12x128xf32>
    %c0_124 = arith.constant 0 : index
    %c0_125 = arith.constant 0 : index
    %147 = vector.load %arg25[%c0_124, %c0_125] : memref<1x128xf32, #tpu.memory_space<vmem>>, vector<1x128xf32>
    %148 = vector.broadcast %147 : vector<1x128xf32> to vector<12x128xf32>
    %149 = arith.addf %146, %148 : vector<12x128xf32>
    %cst_126 = arith.constant 0.000000e+00 : f32
    %150 = vector.broadcast %cst_126 : f32 to vector<12x128xf32>
    %151 = arith.maximumf %149, %150 : vector<12x128xf32>
    %152 = vector.extract_strided_slice %151 {offsets = [0, 0], sizes = [11, 128], strides = [1, 1]} : vector<12x128xf32> to vector<11x128xf32>
    %153 = vector.extract_strided_slice %151 {offsets = [1, 0], sizes = [11, 128], strides = [1, 1]} : vector<12x128xf32> to vector<11x128xf32>
    %154 = arith.maximumf %152, %153 : vector<11x128xf32>
    %155 = vector.extract_strided_slice %154 {offsets = [0, 0], sizes = [11, 96], strides = [1, 1]} : vector<11x128xf32> to vector<11x96xf32>
    %156 = vector.extract_strided_slice %154 {offsets = [0, 32], sizes = [11, 96], strides = [1, 1]} : vector<11x128xf32> to vector<11x96xf32>
    %157 = arith.maximumf %155, %156 : vector<11x96xf32>
    %c0_127 = arith.constant 0 : index
    %c0_128 = arith.constant 0 : index
    %158 = vector.load %arg26[%c0_127, %c0_128] : memref<8x11xbf16, #tpu.memory_space<vmem>>, vector<8x11xbf16>
    %159 = arith.truncf %157 : vector<11x96xf32> to vector<11x96xbf16>
    %cst_129 = arith.constant dense<0.000000e+00> : vector<8x96xf32>
    %160 = tpu.matmul %158, %159, %cst_129 {dimension_numbers = #tpu.dot_dimension_numbers<[1], [0], [0], [1], [0, 0, 1, 1], [], []>} : vector<8x11xbf16>, vector<11x96xbf16>, vector<8x96xf32> -> vector<8x96xf32>
    %161 = arith.truncf %160 : vector<8x96xf32> to vector<8x96xbf16>
    %c0_130 = arith.constant 0 : index
    %c0_131 = arith.constant 0 : index
    %162 = vector.load %arg27[%c0_130, %c0_131] : memref<96x64xbf16, #tpu.memory_space<vmem>>, vector<96x64xbf16>
    %cst_132 = arith.constant dense<0.000000e+00> : vector<8x64xf32>
    %163 = tpu.matmul %161, %162, %cst_132 {dimension_numbers = #tpu.dot_dimension_numbers<[1], [0], [0], [1], [0, 0, 1, 1], [], []>} : vector<8x96xbf16>, vector<96x64xbf16>, vector<8x64xf32> -> vector<8x64xf32>
    %cst_133 = arith.constant 0.000000e+00 : bf16
    %164 = vector.broadcast %cst_133 : bf16 to vector<1x64xbf16>
    %c0_134 = arith.constant 0 : index
    %c0_135 = arith.constant 0 : index
    %165 = vector.load %arg44[%c0_134, %c0_135] : memref<8x192xbf16, #tpu.memory_space<vmem>>, vector<1x64xbf16>
    tpu.vector_store %arg44[%c0_134, %c0_135], %164 {strides = array<i32>} : memref<8x192xbf16, #tpu.memory_space<vmem>>, vector<1x64xbf16>,
    %cst_136 = arith.constant 0.000000e+00 : bf16
    %166 = vector.broadcast %cst_136 : bf16 to vector<1x64xbf16>
    %c7 = arith.constant 7 : index
    %c128_137 = arith.constant 128 : index
    %167 = vector.load %arg44[%c7, %c128_137] : memref<8x192xbf16, #tpu.memory_space<vmem>>, vector<1x64xbf16>
    tpu.vector_store %arg44[%c7, %c128_137], %166 {strides = array<i32>} : memref<8x192xbf16, #tpu.memory_space<vmem>>, vector<1x64xbf16>,
    %168 = arith.truncf %163 : vector<8x64xf32> to vector<8x64xbf16>
    %169 = vector.extract_strided_slice %168 {offsets = [0, 0], sizes = [7, 64], strides = [1, 1]} : vector<8x64xbf16> to vector<7x64xbf16>
    %c1_138 = arith.constant 1 : index
    %c0_139 = arith.constant 0 : index
    %170 = vector.load %arg44[%c1_138, %c0_139] : memref<8x192xbf16, #tpu.memory_space<vmem>>, vector<7x64xbf16>
    tpu.vector_store %arg44[%c1_138, %c0_139], %169 {strides = array<i32>} : memref<8x192xbf16, #tpu.memory_space<vmem>>, vector<7x64xbf16>,
    %c0_140 = arith.constant 0 : index
    %c64_141 = arith.constant 64 : index
    %171 = vector.load %arg44[%c0_140, %c64_141] : memref<8x192xbf16, #tpu.memory_space<vmem>>, vector<8x64xbf16>
    tpu.vector_store %arg44[%c0_140, %c64_141], %168 {strides = array<i32>} : memref<8x192xbf16, #tpu.memory_space<vmem>>, vector<8x64xbf16>,
    %172 = vector.extract_strided_slice %168 {offsets = [1, 0], sizes = [7, 64], strides = [1, 1]} : vector<8x64xbf16> to vector<7x64xbf16>
    %c0_142 = arith.constant 0 : index
    %c128_143 = arith.constant 128 : index
    %173 = vector.load %arg44[%c0_142, %c128_143] : memref<8x192xbf16, #tpu.memory_space<vmem>>, vector<7x64xbf16>
    tpu.vector_store %arg44[%c0_142, %c128_143], %172 {strides = array<i32>} : memref<8x192xbf16, #tpu.memory_space<vmem>>, vector<7x64xbf16>,
    %c0_144 = arith.constant 0 : index
    %c0_145 = arith.constant 0 : index
    %174 = vector.load %arg44[%c0_144, %c0_145] : memref<8x192xbf16, #tpu.memory_space<vmem>>, vector<8x192xbf16>
    %c0_146 = arith.constant 0 : index
    %c0_147 = arith.constant 0 : index
    %175 = vector.load %arg29[%c0_146, %c0_147] : memref<192x64xbf16, #tpu.memory_space<vmem>>, vector<192x64xbf16>
    %cst_148 = arith.constant dense<0.000000e+00> : vector<8x64xf32>
    %176 = tpu.matmul %174, %175, %cst_148 {dimension_numbers = #tpu.dot_dimension_numbers<[1], [0], [0], [1], [0, 0, 1, 1], [], []>} : vector<8x192xbf16>, vector<192x64xbf16>, vector<8x64xf32> -> vector<8x64xf32>
    %c0_149 = arith.constant 0 : index
    %c0_150 = arith.constant 0 : index
    %177 = vector.load %arg30[%c0_149, %c0_150] : memref<1x64xf32, #tpu.memory_space<vmem>>, vector<1x64xf32>
    %178 = vector.broadcast %177 : vector<1x64xf32> to vector<8x64xf32>
    %179 = arith.mulf %176, %178 : vector<8x64xf32>
    %c0_151 = arith.constant 0 : index
    %c0_152 = arith.constant 0 : index
    %180 = vector.load %arg31[%c0_151, %c0_152] : memref<1x64xf32, #tpu.memory_space<vmem>>, vector<1x64xf32>
    %181 = vector.broadcast %180 : vector<1x64xf32> to vector<8x64xf32>
    %182 = arith.addf %179, %181 : vector<8x64xf32>
    %cst_153 = arith.constant 0.000000e+00 : f32
    %183 = vector.broadcast %cst_153 : f32 to vector<8x64xf32>
    %184 = arith.maximumf %182, %183 : vector<8x64xf32>
    %c0_154 = arith.constant 0 : index
    %c0_155 = arith.constant 0 : index
    %185 = vector.load %arg37[%c0_154, %c0_155] : memref<8x1xf32, #tpu.memory_space<vmem>>, vector<8x1xf32>
    %186 = vector.broadcast %185 : vector<8x1xf32> to vector<8x64xf32>
    %187 = arith.mulf %184, %186 : vector<8x64xf32>
    %188 = arith.addf %187, %163 : vector<8x64xf32>
    %189 = arith.truncf %188 : vector<8x64xf32> to vector<8x64xbf16>
    %190 = vector.extract_strided_slice %189 {offsets = [0, 0], sizes = [7, 64], strides = [1, 1]} : vector<8x64xbf16> to vector<7x64xbf16>
    %c1_156 = arith.constant 1 : index
    %c0_157 = arith.constant 0 : index
    %191 = vector.load %arg44[%c1_156, %c0_157] : memref<8x192xbf16, #tpu.memory_space<vmem>>, vector<7x64xbf16>
    tpu.vector_store %arg44[%c1_156, %c0_157], %190 {strides = array<i32>} : memref<8x192xbf16, #tpu.memory_space<vmem>>, vector<7x64xbf16>,
    %c0_158 = arith.constant 0 : index
    %c64_159 = arith.constant 64 : index
    %192 = vector.load %arg44[%c0_158, %c64_159] : memref<8x192xbf16, #tpu.memory_space<vmem>>, vector<8x64xbf16>
    tpu.vector_store %arg44[%c0_158, %c64_159], %189 {strides = array<i32>} : memref<8x192xbf16, #tpu.memory_space<vmem>>, vector<8x64xbf16>,
    %193 = vector.extract_strided_slice %189 {offsets = [1, 0], sizes = [7, 64], strides = [1, 1]} : vector<8x64xbf16> to vector<7x64xbf16>
    %c0_160 = arith.constant 0 : index
    %c128_161 = arith.constant 128 : index
    %194 = vector.load %arg44[%c0_160, %c128_161] : memref<8x192xbf16, #tpu.memory_space<vmem>>, vector<7x64xbf16>
    tpu.vector_store %arg44[%c0_160, %c128_161], %193 {strides = array<i32>} : memref<8x192xbf16, #tpu.memory_space<vmem>>, vector<7x64xbf16>,
    %c0_162 = arith.constant 0 : index
    %c0_163 = arith.constant 0 : index
    %195 = vector.load %arg44[%c0_162, %c0_163] : memref<8x192xbf16, #tpu.memory_space<vmem>>, vector<8x192xbf16>
    %c0_164 = arith.constant 0 : index
    %c0_165 = arith.constant 0 : index
    %196 = vector.load %arg32[%c0_164, %c0_165] : memref<192x128xbf16, #tpu.memory_space<vmem>>, vector<192x128xbf16>
    %cst_166 = arith.constant dense<0.000000e+00> : vector<8x128xf32>
    %197 = tpu.matmul %195, %196, %cst_166 {dimension_numbers = #tpu.dot_dimension_numbers<[1], [0], [0], [1], [0, 0, 1, 1], [], []>} : vector<8x192xbf16>, vector<192x128xbf16>, vector<8x128xf32> -> vector<8x128xf32>
    %c0_167 = arith.constant 0 : index
    %c0_168 = arith.constant 0 : index
    %198 = vector.load %arg33[%c0_167, %c0_168] : memref<1x128xf32, #tpu.memory_space<vmem>>, vector<1x128xf32>
    %199 = vector.broadcast %198 : vector<1x128xf32> to vector<8x128xf32>
    %200 = arith.mulf %197, %199 : vector<8x128xf32>
    %c0_169 = arith.constant 0 : index
    %c0_170 = arith.constant 0 : index
    %201 = vector.load %arg34[%c0_169, %c0_170] : memref<1x128xf32, #tpu.memory_space<vmem>>, vector<1x128xf32>
    %202 = vector.broadcast %201 : vector<1x128xf32> to vector<8x128xf32>
    %203 = arith.addf %200, %202 : vector<8x128xf32>
    %cst_171 = arith.constant 0.000000e+00 : f32
    %204 = vector.broadcast %cst_171 : f32 to vector<8x128xf32>
    %205 = arith.maximumf %203, %204 : vector<8x128xf32>
    %206 = vector.extract_strided_slice %205 {offsets = [0, 0], sizes = [7, 128], strides = [1, 1]} : vector<8x128xf32> to vector<7x128xf32>
    %207 = vector.extract_strided_slice %205 {offsets = [1, 0], sizes = [7, 128], strides = [1, 1]} : vector<8x128xf32> to vector<7x128xf32>
    %208 = arith.maximumf %206, %207 : vector<7x128xf32>
    %209 = vector.extract_strided_slice %208 {offsets = [0, 0], sizes = [7, 64], strides = [1, 1]} : vector<7x128xf32> to vector<7x64xf32>
    %210 = vector.extract_strided_slice %208 {offsets = [0, 64], sizes = [7, 64], strides = [1, 1]} : vector<7x128xf32> to vector<7x64xf32>
    %211 = arith.maximumf %209, %210 : vector<7x64xf32>
    %c0_172 = arith.constant 0 : index
    %c0_173 = arith.constant 0 : index
    %212 = vector.load %arg35[%c0_172, %c0_173] : memref<2x7xbf16, #tpu.memory_space<vmem>>, vector<2x7xbf16>
    %213 = arith.truncf %211 : vector<7x64xf32> to vector<7x64xbf16>
    %cst_174 = arith.constant dense<0.000000e+00> : vector<2x64xf32>
    %214 = tpu.matmul %212, %213, %cst_174 {dimension_numbers = #tpu.dot_dimension_numbers<[1], [0], [0], [1], [0, 0, 1, 1], [], []>} : vector<2x7xbf16>, vector<7x64xbf16>, vector<2x64xf32> -> vector<2x64xf32>
    %215 = arith.truncf %214 : vector<2x64xf32> to vector<2x64xbf16>
    %c0_175 = arith.constant 0 : index
    %c0_176 = arith.constant 0 : index
    %216 = vector.load %arg36[%c0_175, %c0_176] : memref<64x64xbf16, #tpu.memory_space<vmem>>, vector<64x64xbf16>
    %cst_177 = arith.constant dense<0.000000e+00> : vector<2x64xf32>
    %217 = tpu.matmul %215, %216, %cst_177 {dimension_numbers = #tpu.dot_dimension_numbers<[1], [0], [0], [1], [0, 0, 1, 1], [], []>} : vector<2x64xbf16>, vector<64x64xbf16>, vector<2x64xf32> -> vector<2x64xf32>
    %218 = arith.truncf %217 : vector<2x64xf32> to vector<2x64xbf16>
    %c0_178 = arith.constant 0 : index
    %c0_179 = arith.constant 0 : index
    %219 = vector.load %arg38[%c0_178, %c0_179] : memref<64x128xbf16, #tpu.memory_space<vmem>>, vector<64x128xbf16>
    %cst_180 = arith.constant dense<0.000000e+00> : vector<2x128xf32>
    %220 = tpu.matmul %218, %219, %cst_180 {dimension_numbers = #tpu.dot_dimension_numbers<[1], [0], [0], [1], [0, 0, 1, 1], [], []>} : vector<2x64xbf16>, vector<64x128xbf16>, vector<2x128xf32> -> vector<2x128xf32>
    %c0_181 = arith.constant 0 : index
    %c0_182 = arith.constant 0 : index
    %221 = vector.load %arg39[%c0_181, %c0_182] : memref<1x128xf32, #tpu.memory_space<vmem>>, vector<1x128xf32>
    %222 = vector.broadcast %221 : vector<1x128xf32> to vector<2x128xf32>
    %223 = arith.addf %220, %222 : vector<2x128xf32>
    %c0_183 = arith.constant 0 : index
    %c0_184 = arith.constant 0 : index
    %c0_185 = arith.constant 0 : index
    %224 = vector.load %arg40[%c0_183, %c0_184, %c0_185] : memref<1x2x128xf32, #tpu.memory_space<vmem>>, vector<1x2x128xf32>
    %225 = vector.shape_cast %224 : vector<1x2x128xf32> to vector<2x128xf32>
    %226 = vector.shape_cast %223 : vector<2x128xf32> to vector<1x2x128xf32>
    tpu.vector_store %arg40[%c0_183, %c0_184, %c0_185], %226 {strides = array<i32>} : memref<1x2x128xf32, #tpu.memory_space<vmem>>, vector<1x2x128xf32>,
    return
  }
  func.func @transform_0(%arg0: i32) -> (i32, i32, i32) {
    %c0_i32 = arith.constant 0 : i32
    %c0_i32_0 = arith.constant 0 : i32
    %c0_i32_1 = arith.constant 0 : i32
    return %arg0, %c0_i32, %c0_i32_0 : i32, i32, i32
  }
  func.func @transform_1(%arg0: i32) -> (i32, i32) {
    %c0_i32 = arith.constant 0 : i32
    %c0_i32_0 = arith.constant 0 : i32
    %c0_i32_1 = arith.constant 0 : i32
    return %c0_i32, %c0_i32_0 : i32, i32
  }
  func.func @transform_2(%arg0: i32) -> (i32, i32) {
    %c0_i32 = arith.constant 0 : i32
    %c0_i32_0 = arith.constant 0 : i32
    %c0_i32_1 = arith.constant 0 : i32
    return %c0_i32, %c0_i32_0 : i32, i32
  }
  func.func @transform_3(%arg0: i32) -> (i32, i32) {
    %c0_i32 = arith.constant 0 : i32
    %c0_i32_0 = arith.constant 0 : i32
    %c0_i32_1 = arith.constant 0 : i32
    return %c0_i32, %c0_i32_0 : i32, i32
  }
  func.func @transform_4(%arg0: i32) -> (i32, i32) {
    %c0_i32 = arith.constant 0 : i32
    %c0_i32_0 = arith.constant 0 : i32
    %c0_i32_1 = arith.constant 0 : i32
    return %c0_i32, %c0_i32_0 : i32, i32
  }
  func.func @transform_5(%arg0: i32) -> (i32, i32) {
    %c0_i32 = arith.constant 0 : i32
    %c0_i32_0 = arith.constant 0 : i32
    %c0_i32_1 = arith.constant 0 : i32
    return %c0_i32, %c0_i32_0 : i32, i32
  }
  func.func @transform_6(%arg0: i32) -> (i32, i32) {
    %c0_i32 = arith.constant 0 : i32
    %c0_i32_0 = arith.constant 0 : i32
    %c0_i32_1 = arith.constant 0 : i32
    return %c0_i32, %c0_i32_0 : i32, i32
  }
  func.func @transform_7(%arg0: i32) -> (i32, i32) {
    %c0_i32 = arith.constant 0 : i32
    %c0_i32_0 = arith.constant 0 : i32
    %c0_i32_1 = arith.constant 0 : i32
    return %c0_i32, %c0_i32_0 : i32, i32
  }
  func.func @transform_8(%arg0: i32) -> (i32, i32) {
    %c0_i32 = arith.constant 0 : i32
    %c0_i32_0 = arith.constant 0 : i32
    %c0_i32_1 = arith.constant 0 : i32
    return %c0_i32, %c0_i32_0 : i32, i32
  }
  func.func @transform_9(%arg0: i32) -> (i32, i32) {
    %c0_i32 = arith.constant 0 : i32
    %c0_i32_0 = arith.constant 0 : i32
    %c0_i32_1 = arith.constant 0 : i32
    return %c0_i32, %c0_i32_0 : i32, i32
  }
  func.func @transform_10(%arg0: i32) -> (i32, i32) {
    %c0_i32 = arith.constant 0 : i32
    %c0_i32_0 = arith.constant 0 : i32
    %c0_i32_1 = arith.constant 0 : i32
    return %c0_i32, %c0_i32_0 : i32, i32
  }
  func.func @transform_11(%arg0: i32) -> (i32, i32) {
    %c0_i32 = arith.constant 0 : i32
    %c0_i32_0 = arith.constant 0 : i32
    %c0_i32_1 = arith.constant 0 : i32
    return %c0_i32, %c0_i32_0 : i32, i32
  }
  func.func @transform_12(%arg0: i32) -> (i32, i32) {
    %c0_i32 = arith.constant 0 : i32
    %c0_i32_0 = arith.constant 0 : i32
    %c0_i32_1 = arith.constant 0 : i32
    return %c0_i32, %c0_i32_0 : i32, i32
  }
  func.func @transform_13(%arg0: i32) -> (i32, i32) {
    %c0_i32 = arith.constant 0 : i32
    %c0_i32_0 = arith.constant 0 : i32
    %c0_i32_1 = arith.constant 0 : i32
    return %c0_i32, %c0_i32_0 : i32, i32
  }
  func.func @transform_14(%arg0: i32) -> (i32, i32) {
    %c0_i32 = arith.constant 0 : i32
    %c0_i32_0 = arith.constant 0 : i32
    %c0_i32_1 = arith.constant 0 : i32
    return %c0_i32, %c0_i32_0 : i32, i32
  }
  func.func @transform_15(%arg0: i32) -> (i32, i32) {
    %c0_i32 = arith.constant 0 : i32
    %c0_i32_0 = arith.constant 0 : i32
    %c0_i32_1 = arith.constant 0 : i32
    return %c0_i32, %c0_i32_0 : i32, i32
  }
  func.func @transform_16(%arg0: i32) -> (i32, i32) {
    %c0_i32 = arith.constant 0 : i32
    %c0_i32_0 = arith.constant 0 : i32
    %c0_i32_1 = arith.constant 0 : i32
    return %c0_i32, %c0_i32_0 : i32, i32
  }
  func.func @transform_17(%arg0: i32) -> (i32, i32) {
    %c0_i32 = arith.constant 0 : i32
    %c0_i32_0 = arith.constant 0 : i32
    %c0_i32_1 = arith.constant 0 : i32
    return %c0_i32, %c0_i32_0 : i32, i32
  }
  func.func @transform_18(%arg0: i32) -> (i32, i32) {
    %c0_i32 = arith.constant 0 : i32
    %c0_i32_0 = arith.constant 0 : i32
    %c0_i32_1 = arith.constant 0 : i32
    return %c0_i32, %c0_i32_0 : i32, i32
  }
  func.func @transform_19(%arg0: i32) -> (i32, i32) {
    %c0_i32 = arith.constant 0 : i32
    %c0_i32_0 = arith.constant 0 : i32
    %c0_i32_1 = arith.constant 0 : i32
    return %c0_i32, %c0_i32_0 : i32, i32
  }
  func.func @transform_20(%arg0: i32) -> (i32, i32) {
    %c0_i32 = arith.constant 0 : i32
    %c0_i32_0 = arith.constant 0 : i32
    %c0_i32_1 = arith.constant 0 : i32
    return %c0_i32, %c0_i32_0 : i32, i32
  }
  func.func @transform_21(%arg0: i32) -> (i32, i32) {
    %c0_i32 = arith.constant 0 : i32
    %c0_i32_0 = arith.constant 0 : i32
    %c0_i32_1 = arith.constant 0 : i32
    return %c0_i32, %c0_i32_0 : i32, i32
  }
  func.func @transform_22(%arg0: i32) -> (i32, i32) {
    %c0_i32 = arith.constant 0 : i32
    %c0_i32_0 = arith.constant 0 : i32
    %c0_i32_1 = arith.constant 0 : i32
    return %c0_i32, %c0_i32_0 : i32, i32
  }
  func.func @transform_23(%arg0: i32) -> (i32, i32) {
    %c0_i32 = arith.constant 0 : i32
    %c0_i32_0 = arith.constant 0 : i32
    %c0_i32_1 = arith.constant 0 : i32
    return %c0_i32, %c0_i32_0 : i32, i32
  }
  func.func @transform_24(%arg0: i32) -> (i32, i32) {
    %c0_i32 = arith.constant 0 : i32
    %c0_i32_0 = arith.constant 0 : i32
    %c0_i32_1 = arith.constant 0 : i32
    return %c0_i32, %c0_i32_0 : i32, i32
  }
  func.func @transform_25(%arg0: i32) -> (i32, i32) {
    %c0_i32 = arith.constant 0 : i32
    %c0_i32_0 = arith.constant 0 : i32
    %c0_i32_1 = arith.constant 0 : i32
    return %c0_i32, %c0_i32_0 : i32, i32
  }
  func.func @transform_26(%arg0: i32) -> (i32, i32) {
    %c0_i32 = arith.constant 0 : i32
    %c0_i32_0 = arith.constant 0 : i32
    %c0_i32_1 = arith.constant 0 : i32
    return %c0_i32, %c0_i32_0 : i32, i32
  }
  func.func @transform_27(%arg0: i32) -> (i32, i32) {
    %c0_i32 = arith.constant 0 : i32
    %c0_i32_0 = arith.constant 0 : i32
    %c0_i32_1 = arith.constant 0 : i32
    return %c0_i32, %c0_i32_0 : i32, i32
  }
  func.func @transform_28(%arg0: i32) -> (i32, i32) {
    %c0_i32 = arith.constant 0 : i32
    %c0_i32_0 = arith.constant 0 : i32
    %c0_i32_1 = arith.constant 0 : i32
    return %c0_i32, %c0_i32_0 : i32, i32
  }
  func.func @transform_29(%arg0: i32) -> (i32, i32) {
    %c0_i32 = arith.constant 0 : i32
    %c0_i32_0 = arith.constant 0 : i32
    %c0_i32_1 = arith.constant 0 : i32
    return %c0_i32, %c0_i32_0 : i32, i32
  }
  func.func @transform_30(%arg0: i32) -> (i32, i32) {
    %c0_i32 = arith.constant 0 : i32
    %c0_i32_0 = arith.constant 0 : i32
    %c0_i32_1 = arith.constant 0 : i32
    return %c0_i32, %c0_i32_0 : i32, i32
  }
  func.func @transform_31(%arg0: i32) -> (i32, i32) {
    %c0_i32 = arith.constant 0 : i32
    %c0_i32_0 = arith.constant 0 : i32
    %c0_i32_1 = arith.constant 0 : i32
    return %c0_i32, %c0_i32_0 : i32, i32
  }
  func.func @transform_32(%arg0: i32) -> (i32, i32) {
    %c0_i32 = arith.constant 0 : i32
    %c0_i32_0 = arith.constant 0 : i32
    %c0_i32_1 = arith.constant 0 : i32
    return %c0_i32, %c0_i32_0 : i32, i32
  }
  func.func @transform_33(%arg0: i32) -> (i32, i32) {
    %c0_i32 = arith.constant 0 : i32
    %c0_i32_0 = arith.constant 0 : i32
    %c0_i32_1 = arith.constant 0 : i32
    return %c0_i32, %c0_i32_0 : i32, i32
  }
  func.func @transform_34(%arg0: i32) -> (i32, i32) {
    %c0_i32 = arith.constant 0 : i32
    %c0_i32_0 = arith.constant 0 : i32
    %c0_i32_1 = arith.constant 0 : i32
    return %c0_i32, %c0_i32_0 : i32, i32
  }
  func.func @transform_35(%arg0: i32) -> (i32, i32) {
    %c0_i32 = arith.constant 0 : i32
    %c0_i32_0 = arith.constant 0 : i32
    %c0_i32_1 = arith.constant 0 : i32
    return %c0_i32, %c0_i32_0 : i32, i32
  }
  func.func @transform_36(%arg0: i32) -> (i32, i32) {
    %c0_i32 = arith.constant 0 : i32
    %c0_i32_0 = arith.constant 0 : i32
    %c0_i32_1 = arith.constant 0 : i32
    return %c0_i32, %c0_i32_0 : i32, i32
  }
  func.func @transform_37(%arg0: i32) -> (i32, i32) {
    %c0_i32 = arith.constant 0 : i32
    %c0_i32_0 = arith.constant 0 : i32
    %c0_i32_1 = arith.constant 0 : i32
    return %c0_i32, %c0_i32_0 : i32, i32
  }
  func.func @transform_38(%arg0: i32) -> (i32, i32) {
    %c0_i32 = arith.constant 0 : i32
    %c0_i32_0 = arith.constant 0 : i32
    %c0_i32_1 = arith.constant 0 : i32
    return %c0_i32, %c0_i32_0 : i32, i32
  }
  func.func @transform_39(%arg0: i32) -> (i32, i32, i32) {
    %c0_i32 = arith.constant 0 : i32
    %c0_i32_0 = arith.constant 0 : i32
    %c0_i32_1 = arith.constant 0 : i32
    return %arg0, %c0_i32, %c0_i32_0 : i32, i32, i32
  }
}

</mosaic_0001>

<llo_original>
// kernel: tpu_custom_call.1
$region0: #{tpu_custom_call.1}
  #allocation0 [shape = 'u32[]', space=smem, size = 0x4, offset = 0x4, fixed_abs, tag = 'smem constant byte address 0x4 - core index']
  #allocation1 [shape = 'u32[144,128]{1,0:T(1,128)}', space=vmem, size = 0x12000, scoped, tag = 'internal scratch']
  #allocation2 [shape = 'bf16[36,192]{1,0:T(8,128)(2,1)}', space=vmem, size = 0x5000, scoped, tag = 'scratch operand']
  #allocation3 [shape = 'bf16[20,192]{1,0:T(8,128)(2,1)}', space=vmem, size = 0x3000, scoped, tag = 'scratch operand']
  #allocation4 [shape = 'bf16[12,192]{1,0:T(8,128)(2,1)}', space=vmem, size = 0x2000, scoped, tag = 'scratch operand']
  #allocation5 [shape = 'bf16[8,192]{1,0:T(8,128)(2,1)}', space=vmem, size = 0x1000, scoped, tag = 'scratch operand']
  %s0 = inlined_call_operand.smem [shape: u32[40], index: -1, kind: input, shape index: {}]
  %s1 = sld [smem:[%s0]]
  %s2 = scalar_lea.smem %s0, 1
  %s3 = sld [smem:[%s2]]
  %s4 = scalar_lea.smem %s0, 2
  %s5 = sld [smem:[%s4]]
  %s6 = scalar_lea.smem %s0, 3
  %s7 = sld [smem:[%s6]]
  %s8 = scalar_lea.smem %s0, 4
  %s9 = sld [smem:[%s8]]
  %s10 = scalar_lea.smem %s0, 5
  %s11 = sld [smem:[%s10]]
  %s12 = scalar_lea.smem %s0, 6
  %s13 = sld [smem:[%s12]]
  %s14 = scalar_lea.smem %s0, 7
  %s15 = sld [smem:[%s14]]
  %s16 = scalar_lea.smem %s0, 8
  %s17 = sld [smem:[%s16]]
  %s18 = scalar_lea.smem %s0, 9
  %s19 = sld [smem:[%s18]]
  %s20 = scalar_lea.smem %s0, 10
  %s21 = sld [smem:[%s20]]
  %s22 = scalar_lea.smem %s0, 11
  %s23 = sld [smem:[%s22]]
  %s24 = scalar_lea.smem %s0, 12
  %s25 = sld [smem:[%s24]]
  %s26 = scalar_lea.smem %s0, 13
  %s27 = sld [smem:[%s26]]
  %s28 = scalar_lea.smem %s0, 14
  %s29 = sld [smem:[%s28]]
  %s30 = scalar_lea.smem %s0, 15
  %s31 = sld [smem:[%s30]]
  %s32 = scalar_lea.smem %s0, 16
  %s33 = sld [smem:[%s32]]
  %s34 = scalar_lea.smem %s0, 17
  %s35 = sld [smem:[%s34]]
  %s36 = scalar_lea.smem %s0, 18
  %s37 = sld [smem:[%s36]]
  %s38 = scalar_lea.smem %s0, 19
  %s39 = sld [smem:[%s38]]
  %s40 = scalar_lea.smem %s0, 20
  %s41 = sld [smem:[%s40]]
  %s42 = scalar_lea.smem %s0, 21
  %s43 = sld [smem:[%s42]]
  %s44 = scalar_lea.smem %s0, 22
  %s45 = sld [smem:[%s44]]
  %s46 = scalar_lea.smem %s0, 23
  %s47 = sld [smem:[%s46]]
  %s48 = scalar_lea.smem %s0, 24
  %s49 = sld [smem:[%s48]]
  %s50 = scalar_lea.smem %s0, 25
  %s51 = sld [smem:[%s50]]
  %s52 = scalar_lea.smem %s0, 26
  %s53 = sld [smem:[%s52]]
  %s54 = scalar_lea.smem %s0, 27
  %s55 = sld [smem:[%s54]]
  %s56 = scalar_lea.smem %s0, 28
  %s57 = sld [smem:[%s56]]
  %s58 = scalar_lea.smem %s0, 29
  %s59 = sld [smem:[%s58]]
  %s60 = scalar_lea.smem %s0, 30
  %s61 = sld [smem:[%s60]]
  %s62 = scalar_lea.smem %s0, 31
  %s63 = sld [smem:[%s62]]
  %s64 = scalar_lea.smem %s0, 32
  %s65 = sld [smem:[%s64]]
  %s66 = scalar_lea.smem %s0, 33
  %s67 = sld [smem:[%s66]]
  %s68 = scalar_lea.smem %s0, 34
  %s69 = sld [smem:[%s68]]
  %s70 = scalar_lea.smem %s0, 35
  %s71 = sld [smem:[%s70]]
  %s72 = scalar_lea.smem %s0, 36
  %s73 = sld [smem:[%s72]]
  %s74 = scalar_lea.smem %s0, 37
  %s75 = sld [smem:[%s74]]
  %s76 = scalar_lea.smem %s0, 38
  %s77 = sld [smem:[%s76]]
  %s78 = scalar_lea.smem %s0, 39
  %s79 = sld [smem:[%s78]]
  %s80 = sld [smem:[#allocation0]]
  $region166: #{tpu_custom_call.1} parent=0
    _
  %s82 = ssub.s32 1, %s80
  %s83 = scalar_select 0, %s82, %s80
  $region1: #{tpu_custom_call.1} parent=0
    #allocation6 [shape = 'u8[1024]{0}', space=vmem, size = 0x400, scoped, tag = 'output window, operand 0, single buffered']
    #allocation7 [shape = 's32[1]{0}', space=sflag, size = 0x4, scoped, tag = 'scoped memory for tpu_custom_call.1']
    %84 = vsyncpa [#allocation7], 0
    // Predicated region
    $region2: #{tpu_custom_call.1} parent=1 // pred_check
      _
    $region3: #{tpu_custom_call.1} parent=1 // pred_check_branch
      %86 = sbr.rel (0) target = $region5
    $region4: #{tpu_custom_call.1} parent=1 // pred_region
      _
    $region5: #{tpu_custom_call.1} parent=1 // pred_fallthru
      _
    // Predicated region
    $region6: #{tpu_custom_call.1} parent=1 // pred_check
      _
    $region7: #{tpu_custom_call.1} parent=1 // pred_check_branch
      %88 = sbr.rel (0) target = $region9
    $region8: #{tpu_custom_call.1} parent=1 // pred_region
      _
    $region9: #{tpu_custom_call.1} parent=1 // pred_fallthru
      _
    // Predicated region
    $region10: #{tpu_custom_call.1} parent=1 // pred_check
      _
    $region11: #{tpu_custom_call.1} parent=1 // pred_check_branch
      %90 = sbr.rel (0) target = $region13
    $region12: #{tpu_custom_call.1} parent=1 // pred_region
      _
    $region13: #{tpu_custom_call.1} parent=1 // pred_fallthru
      _
    // Predicated region
    $region14: #{tpu_custom_call.1} parent=1 // pred_check
      _
    $region15: #{tpu_custom_call.1} parent=1 // pred_check_branch
      %92 = sbr.rel (0) target = $region17
    $region16: #{tpu_custom_call.1} parent=1 // pred_region
      _
    $region17: #{tpu_custom_call.1} parent=1 // pred_fallthru
      _
    // Predicated region
    $region18: #{tpu_custom_call.1} parent=1 // pred_check
      _
    $region19: #{tpu_custom_call.1} parent=1 // pred_check_branch
      %94 = sbr.rel (0) target = $region21
    $region20: #{tpu_custom_call.1} parent=1 // pred_region
      _
    $region21: #{tpu_custom_call.1} parent=1 // pred_fallthru
      _
    // Predicated region
    $region22: #{tpu_custom_call.1} parent=1 // pred_check
      _
    $region23: #{tpu_custom_call.1} parent=1 // pred_check_branch
      %96 = sbr.rel (0) target = $region25
    $region24: #{tpu_custom_call.1} parent=1 // pred_region
      _
    $region25: #{tpu_custom_call.1} parent=1 // pred_fallthru
      _
    // Predicated region
    $region26: #{tpu_custom_call.1} parent=1 // pred_check
      _
    $region27: #{tpu_custom_call.1} parent=1 // pred_check_branch
      %98 = sbr.rel (0) target = $region29
    $region28: #{tpu_custom_call.1} parent=1 // pred_region
      _
    $region29: #{tpu_custom_call.1} parent=1 // pred_fallthru
      _
    // Predicated region
    $region30: #{tpu_custom_call.1} parent=1 // pred_check
      _
    $region31: #{tpu_custom_call.1} parent=1 // pred_check_branch
      %100 = sbr.rel (0) target = $region33
    $region32: #{tpu_custom_call.1} parent=1 // pred_region
      _
    $region33: #{tpu_custom_call.1} parent=1 // pred_fallthru
      _
    // Predicated region
    $region34: #{tpu_custom_call.1} parent=1 // pred_check
      _
    $region35: #{tpu_custom_call.1} parent=1 // pred_check_branch
      %102 = sbr.rel (0) target = $region37
    $region36: #{tpu_custom_call.1} parent=1 // pred_region
      _
    $region37: #{tpu_custom_call.1} parent=1 // pred_fallthru
      _
    // Predicated region
    $region38: #{tpu_custom_call.1} parent=1 // pred_check
      _
    $region39: #{tpu_custom_call.1} parent=1 // pred_check_branch
      %104 = sbr.rel (0) target = $region41
    $region40: #{tpu_custom_call.1} parent=1 // pred_region
      _
    $region41: #{tpu_custom_call.1} parent=1 // pred_fallthru
      _
    // Predicated region
    $region42: #{tpu_custom_call.1} parent=1 // pred_check
      _
    $region43: #{tpu_custom_call.1} parent=1 // pred_check_branch
      %106 = sbr.rel (0) target = $region45
    $region44: #{tpu_custom_call.1} parent=1 // pred_region
      _
    $region45: #{tpu_custom_call.1} parent=1 // pred_fallthru
      _
    // Predicated region
    $region46: #{tpu_custom_call.1} parent=1 // pred_check
      _
    $region47: #{tpu_custom_call.1} parent=1 // pred_check_branch
      %108 = sbr.rel (0) target = $region49
    $region48: #{tpu_custom_call.1} parent=1 // pred_region
      _
    $region49: #{tpu_custom_call.1} parent=1 // pred_fallthru
      _
    // Predicated region
    $region50: #{tpu_custom_call.1} parent=1 // pred_check
      _
    $region51: #{tpu_custom_call.1} parent=1 // pred_check_branch
      %110 = sbr.rel (0) target = $region53
    $region52: #{tpu_custom_call.1} parent=1 // pred_region
      _
    $region53: #{tpu_custom_call.1} parent=1 // pred_fallthru
      _
    // Predicated region
    $region54: #{tpu_custom_call.1} parent=1 // pred_check
      _
    $region55: #{tpu_custom_call.1} parent=1 // pred_check_branch
      %112 = sbr.rel (0) target = $region57
    $region56: #{tpu_custom_call.1} parent=1 // pred_region
      _
    $region57: #{tpu_custom_call.1} parent=1 // pred_fallthru
      _
    // Predicated region
    $region58: #{tpu_custom_call.1} parent=1 // pred_check
      _
    $region59: #{tpu_custom_call.1} parent=1 // pred_check_branch
      %114 = sbr.rel (0) target = $region61
    $region60: #{tpu_custom_call.1} parent=1 // pred_region
      _
    $region61: #{tpu_custom_call.1} parent=1 // pred_fallthru
      _
    // Predicated region
    $region62: #{tpu_custom_call.1} parent=1 // pred_check
      _
    $region63: #{tpu_custom_call.1} parent=1 // pred_check_branch
      %116 = sbr.rel (0) target = $region65
    $region64: #{tpu_custom_call.1} parent=1 // pred_region
      _
    $region65: #{tpu_custom_call.1} parent=1 // pred_fallthru
      _
    // Predicated region
    $region66: #{tpu_custom_call.1} parent=1 // pred_check
      _
    $region67: #{tpu_custom_call.1} parent=1 // pred_check_branch
      %118 = sbr.rel (0) target = $region69
    $region68: #{tpu_custom_call.1} parent=1 // pred_region
      _
    $region69: #{tpu_custom_call.1} parent=1 // pred_fallthru
      _
    // Predicated region
    $region70: #{tpu_custom_call.1} parent=1 // pred_check
      _
    $region71: #{tpu_custom_call.1} parent=1 // pred_check_branch
      %120 = sbr.rel (0) target = $region73
    $region72: #{tpu_custom_call.1} parent=1 // pred_region
      _
    $region73: #{tpu_custom_call.1} parent=1 // pred_fallthru
      _
    // Predicated region
    $region74: #{tpu_custom_call.1} parent=1 // pred_check
      _
    $region75: #{tpu_custom_call.1} parent=1 // pred_check_branch
      %122 = sbr.rel (0) target = $region77
    $region76: #{tpu_custom_call.1} parent=1 // pred_region
      _
    $region77: #{tpu_custom_call.1} parent=1 // pred_fallthru
      _
    // Predicated region
    $region78: #{tpu_custom_call.1} parent=1 // pred_check
      _
    $region79: #{tpu_custom_call.1} parent=1 // pred_check_branch
      %124 = sbr.rel (0) target = $region81
    $region80: #{tpu_custom_call.1} parent=1 // pred_region
      _
    $region81: #{tpu_custom_call.1} parent=1 // pred_fallthru
      _
    // Predicated region
    $region82: #{tpu_custom_call.1} parent=1 // pred_check
      _
    $region83: #{tpu_custom_call.1} parent=1 // pred_check_branch
      %126 = sbr.rel (0) target = $region85
    $region84: #{tpu_custom_call.1} parent=1 // pred_region
      _
    $region85: #{tpu_custom_call.1} parent=1 // pred_fallthru
      _
    // Predicated region
    $region86: #{tpu_custom_call.1} parent=1 // pred_check
      _
    $region87: #{tpu_custom_call.1} parent=1 // pred_check_branch
      %128 = sbr.rel (0) target = $region89
    $region88: #{tpu_custom_call.1} parent=1 // pred_region
      _
    $region89: #{tpu_custom_call.1} parent=1 // pred_fallthru
      _
    // Predicated region
    $region90: #{tpu_custom_call.1} parent=1 // pred_check
      _
    $region91: #{tpu_custom_call.1} parent=1 // pred_check_branch
      %130 = sbr.rel (0) target = $region93
    $region92: #{tpu_custom_call.1} parent=1 // pred_region
      _
    $region93: #{tpu_custom_call.1} parent=1 // pred_fallthru
      _
    // Predicated region
    $region94: #{tpu_custom_call.1} parent=1 // pred_check
      _
    $region95: #{tpu_custom_call.1} parent=1 // pred_check_branch
      %132 = sbr.rel (0) target = $region97
    $region96: #{tpu_custom_call.1} parent=1 // pred_region
      _
    $region97: #{tpu_custom_call.1} parent=1 // pred_fallthru
      _
    // Predicated region
    $region98: #{tpu_custom_call.1} parent=1 // pred_check
      _
    $region99: #{tpu_custom_call.1} parent=1 // pred_check_branch
      %134 = sbr.rel (0) target = $region101
    $region100: #{tpu_custom_call.1} parent=1 // pred_region
      _
    $region101: #{tpu_custom_call.1} parent=1 // pred_fallthru
      _
    // Predicated region
    $region102: #{tpu_custom_call.1} parent=1 // pred_check
      _
    $region103: #{tpu_custom_call.1} parent=1 // pred_check_branch
      %136 = sbr.rel (0) target = $region105
    $region104: #{tpu_custom_call.1} parent=1 // pred_region
      _
    $region105: #{tpu_custom_call.1} parent=1 // pred_fallthru
      _
    // Predicated region
    $region106: #{tpu_custom_call.1} parent=1 // pred_check
      _
    $region107: #{tpu_custom_call.1} parent=1 // pred_check_branch
      %138 = sbr.rel (0) target = $region109
    $region108: #{tpu_custom_call.1} parent=1 // pred_region
      _
    $region109: #{tpu_custom_call.1} parent=1 // pred_fallthru
      _
    // Predicated region
    $region110: #{tpu_custom_call.1} parent=1 // pred_check
      _
    $region111: #{tpu_custom_call.1} parent=1 // pred_check_branch
      %140 = sbr.rel (0) target = $region113
    $region112: #{tpu_custom_call.1} parent=1 // pred_region
      _
    $region113: #{tpu_custom_call.1} parent=1 // pred_fallthru
      _
    // Predicated region
    $region114: #{tpu_custom_call.1} parent=1 // pred_check
      _
    $region115: #{tpu_custom_call.1} parent=1 // pred_check_branch
      %142 = sbr.rel (0) target = $region117
    $region116: #{tpu_custom_call.1} parent=1 // pred_region
      _
    $region117: #{tpu_custom_call.1} parent=1 // pred_fallthru
      _
    // Predicated region
    $region118: #{tpu_custom_call.1} parent=1 // pred_check
      _
    $region119: #{tpu_custom_call.1} parent=1 // pred_check_branch
      %144 = sbr.rel (0) target = $region121
    $region120: #{tpu_custom_call.1} parent=1 // pred_region
      _
    $region121: #{tpu_custom_call.1} parent=1 // pred_fallthru
      _
    // Predicated region
    $region122: #{tpu_custom_call.1} parent=1 // pred_check
      _
    $region123: #{tpu_custom_call.1} parent=1 // pred_check_branch
      %146 = sbr.rel (0) target = $region125
    $region124: #{tpu_custom_call.1} parent=1 // pred_region
      _
    $region125: #{tpu_custom_call.1} parent=1 // pred_fallthru
      _
    // Predicated region
    $region126: #{tpu_custom_call.1} parent=1 // pred_check
      _
    $region127: #{tpu_custom_call.1} parent=1 // pred_check_branch
      %148 = sbr.rel (0) target = $region129
    $region128: #{tpu_custom_call.1} parent=1 // pred_region
      _
    $region129: #{tpu_custom_call.1} parent=1 // pred_fallthru
      _
    // Predicated region
    $region130: #{tpu_custom_call.1} parent=1 // pred_check
      _
    $region131: #{tpu_custom_call.1} parent=1 // pred_check_branch
      %150 = sbr.rel (0) target = $region133
    $region132: #{tpu_custom_call.1} parent=1 // pred_region
      _
    $region133: #{tpu_custom_call.1} parent=1 // pred_fallthru
      _
    // Predicated region
    $region134: #{tpu_custom_call.1} parent=1 // pred_check
      _
    $region135: #{tpu_custom_call.1} parent=1 // pred_check_branch
      %152 = sbr.rel (0) target = $region137
    $region136: #{tpu_custom_call.1} parent=1 // pred_region
      _
    $region137: #{tpu_custom_call.1} parent=1 // pred_fallthru
      _
    // Predicated region
    $region138: #{tpu_custom_call.1} parent=1 // pred_check
      _
    $region139: #{tpu_custom_call.1} parent=1 // pred_check_branch
      %154 = sbr.rel (0) target = $region141
    $region140: #{tpu_custom_call.1} parent=1 // pred_region
      _
    $region141: #{tpu_custom_call.1} parent=1 // pred_fallthru
      _
    // Predicated region
    $region142: #{tpu_custom_call.1} parent=1 // pred_check
      _
    $region143: #{tpu_custom_call.1} parent=1 // pred_check_branch
      %156 = sbr.rel (0) target = $region145
    $region144: #{tpu_custom_call.1} parent=1 // pred_region
      _
    $region145: #{tpu_custom_call.1} parent=1 // pred_fallthru
      _
    // Predicated region
    $region146: #{tpu_custom_call.1} parent=1 // pred_check
      _
    $region147: #{tpu_custom_call.1} parent=1 // pred_check_branch
      %158 = sbr.rel (0) target = $region149
    $region148: #{tpu_custom_call.1} parent=1 // pred_region
      _
    $region149: #{tpu_custom_call.1} parent=1 // pred_fallthru
      _
    // Predicated region
    $region150: #{tpu_custom_call.1} parent=1 // pred_check
      _
    $region151: #{tpu_custom_call.1} parent=1 // pred_check_branch
      %160 = sbr.rel (0) target = $region153
    $region152: #{tpu_custom_call.1} parent=1 // pred_region
      _
    $region153: #{tpu_custom_call.1} parent=1 // pred_fallthru
      _
    // Predicated region
    $region154: #{tpu_custom_call.1} parent=1 // pred_check
      _
    $region155: #{tpu_custom_call.1} parent=1 // pred_check_branch
      %162 = sbr.rel (0) target = $region157
    $region156: #{tpu_custom_call.1} parent=1 // pred_region
      _
    $region157: #{tpu_custom_call.1} parent=1 // pred_fallthru
      _
    %v164 = vld [vmem:[%s1] sm:$0xff]
    %v165 = vld [vmem:[%s1 + $0x8] sm:$0xff]
    %v166 = vld [vmem:[%s1 + $0x10] sm:$0xff]
    %v167 = vld [vmem:[%s1 + $0x18] sm:$0xff]
    %v168 = vld [vmem:[%s1 + $0x20] sm:$0xf]
    %vm169 = vcmask 516096
    %vm170 = vsmask.f32 256
    %vm171 = vmand %vm169, %vm170
    %v172 = vld [vmem:[#allocation2] sm:$0x1]
    %v173 = vsel %vm171, 0, %v172
    %174 = vst [vmem:[#allocation2] sm:$0x1] %v173
    %vm175 = vcmask 517121
    %vm176 = vsmask.f32 7942
    %vm177 = vmand %vm175, %vm176
    %v178 = vld [vmem:[#allocation2 + $0x24] sm:$0x2]
    %v179 = vsel %vm177, 0, %v178
    %180 = vst [vmem:[#allocation2 + $0x24] sm:$0x2] %v179
    %v181 = vpack.c.bf16 %v165, %v164
    %v182 = vpack.c.bf16 %v167, %v166
    %v183 = vpack.c.bf16 %v168, %v168
    %v187 = vunpack.c.l.b16 %v181
    %v188 = vunpack.c.h.b16 %v181
    %v189 = vunpack.c.l.b16 %v182
    %v190 = vunpack.c.h.b16 %v182
    %v191 = vunpack.c.l.b16 %v183
    %v192 = vpack.c.b16 %v187, %v187
    %v193 = vpack.c.b16 %v188, %v188
    %v194 = vpack.c.b16 %v189, %v189
    %v195 = vpack.c.b16 %v190, %v190
    %v196 = vpack.c.b16 %v191, %v191
    %vm197 = vsmask.f32 4368
    %vm198 = vmor %vm170, %vm197
    %v200 = vshrl.u32 %v192, 16
    %v202 = vrot.slane %v200, 7
    %v203 = vshll.u32 %v192, 16
    %v205 = vor.u32 %v202, %v203
    %v206 = vrot.slane %v202, 4
    %v208 = vshrl.u32 %v193, 16
    %v210 = vrot.slane %v208, 7
    %v211 = vshll.u32 %v193, 16
    %v213 = vor.u32 %v210, %v211
    %v214 = vsel %vm198, %v206, %v213
    %v215 = vrot.slane %v210, 4
    %v217 = vshrl.u32 %v194, 16
    %v219 = vrot.slane %v217, 7
    %v220 = vshll.u32 %v194, 16
    %v222 = vor.u32 %v219, %v220
    %v223 = vsel %vm198, %v215, %v222
    %v224 = vrot.slane %v219, 4
    %v226 = vshrl.u32 %v195, 16
    %v228 = vrot.slane %v226, 7
    %v229 = vshll.u32 %v195, 16
    %v231 = vor.u32 %v228, %v229
    %v232 = vsel %vm198, %v224, %v231
    %v233 = vrot.slane %v228, 4
    %v235 = vshrl.u32 %v196, 16
    %v237 = vrot.slane %v235, 7
    %v238 = vshll.u32 %v196, 16
    %v240 = vor.u32 %v237, %v238
    %v241 = vsel %vm198, %v233, %v240
    %vm247 = vcmask 519168
    %vm248 = vsmask.f32 7938
    %vm249 = vmand %vm247, %vm248
    %v250 = vld [vmem:[#allocation2] sm:$0xf]
    %v251 = vsel %vm249, %v205, %v250
    %252 = vst [vmem:[#allocation2] sm:$0xf] %v251
    %vm253 = vcmask 519168
    %254 = vst.msk [vmem:[#allocation2 + $0x8] sm:$0xf] %vm253, %v214
    %255 = vst.msk [vmem:[#allocation2 + $0x10] sm:$0xf] %vm253, %v223
    %256 = vst.msk [vmem:[#allocation2 + $0x18] sm:$0xf] %vm253, %v232
    %vm257 = vcmask 517120
    %258 = vst.msk [vmem:[#allocation2 + $0x20] sm:$0x3] %vm257, %v241
    %259 = vrot.lane.b32.xlu0 %v192, 64
    %v260 = vpop.permute.xlu0 %259
    %261 = vrot.lane.b32.xlu0 %v193, 64
    %v262 = vpop.permute.xlu0 %261
    %263 = vrot.lane.b32.xlu0 %v194, 64
    %v264 = vpop.permute.xlu0 %263
    %265 = vrot.lane.b32.xlu0 %v195, 64
    %v266 = vpop.permute.xlu0 %265
    %267 = vrot.lane.b32.xlu0 %v196, 64
    %v268 = vpop.permute.xlu0 %267
    %vm274 = vcmask 1043968
    %275 = vst.msk [vmem:[#allocation2] sm:$0xf] %vm274, %v260
    %276 = vst.msk [vmem:[#allocation2 + $0x8] sm:$0xf] %vm274, %v262
    %277 = vst.msk [vmem:[#allocation2 + $0x10] sm:$0xf] %vm274, %v264
    %278 = vst.msk [vmem:[#allocation2 + $0x18] sm:$0xf] %vm274, %v266
    %vm279 = vcmask 1041920
    %280 = vst.msk [vmem:[#allocation2 + $0x20] sm:$0x3] %vm279, %v268
    %vm281 = vsmask.f32 3328
    %vm282 = vsmask.f32 7440
    %vm283 = vmor %vm281, %vm282
    %v284 = vrot.slane %v200, 4
    %v285 = vrot.slane %v203, 5
    %v286 = vor.u32 %v284, %v285
    %v287 = vrot.slane %v286, 4
    %v288 = vrot.slane %v211, 5
    %v289 = vsel %vm283, %v287, %v288
    %v290 = vrot.slane %v208, 4
    %v291 = vor.u32 %v290, %v288
    %v292 = vrot.slane %v291, 4
    %v293 = vrot.slane %v220, 5
    %v294 = vsel %vm283, %v292, %v293
    %v295 = vrot.slane %v217, 4
    %v296 = vor.u32 %v295, %v293
    %v297 = vrot.slane %v296, 4
    %v298 = vrot.slane %v229, 5
    %v299 = vsel %vm283, %v297, %v298
    %v300 = vrot.slane %v226, 4
    %v301 = vor.u32 %v300, %v298
    %v302 = vrot.slane %v301, 4
    %v303 = vrot.slane %v238, 5
    %v304 = vsel %vm283, %v302, %v303
    %v305 = vrot.slane %v235, 4
    %v306 = vor.u32 %v305, %v303
    %v307 = vrot.slane %v306, 4
    %313 = vst.msk [vmem:[#allocation2 + $0x4] sm:$0xf] %vm253, %v289
    %314 = vst.msk [vmem:[#allocation2 + $0xc] sm:$0xf] %vm253, %v294
    %315 = vst.msk [vmem:[#allocation2 + $0x14] sm:$0xf] %vm253, %v299
    %316 = vst.msk [vmem:[#allocation2 + $0x1c] sm:$0xf] %vm253, %v304
    %vm317 = vcmask 517120
    %vm318 = vsmask.f32 1280
    %vm319 = vmand %vm317, %vm318
    %v320 = vld [vmem:[#allocation2 + $0x24] sm:$0x3]
    %v321 = vsel %vm319, %v307, %v320
    %322 = vst [vmem:[#allocation2 + $0x24] sm:$0x3] %v321
    %v323 = vld [vmem:[#allocation2] sm:$0xff]
    %v324 = vld [vmem:[#allocation2 + $0x8] sm:$0xff]
    %v325 = vld [vmem:[#allocation2 + $0x10] sm:$0xff]
    %v326 = vld [vmem:[#allocation2 + $0x18] sm:$0xff]
    %v327 = vld [vmem:[#allocation2 + $0x20] sm:$0x33]
    %v328 = vld [vmem:[%s3] sm:$0xf]
    %v329 = vld [vmem:[%s3 + $0x4] sm:$0xf]
    %v330 = vld [vmem:[%s3 + $0x8] sm:$0xf]
    %v331 = vld [vmem:[%s3 + $0xc] sm:$0xf]
    %v332 = vld [vmem:[%s3 + $0x10] sm:$0xf]
    %v333 = vld [vmem:[%s3 + $0x14] sm:$0xf]
    %v334 = vld [vmem:[%s3 + $0x18] sm:$0xf]
    %v335 = vld [vmem:[%s3 + $0x1c] sm:$0xf]
    %v336 = vld [vmem:[%s3 + $0x20] sm:$0xf]
    %v337 = vld [vmem:[%s3 + $0x24] sm:$0xf]
    %v338 = vld [vmem:[%s3 + $0x28] sm:$0xf]
    %v339 = vld [vmem:[%s3 + $0x2c] sm:$0xf]
    %v340 = vld [vmem:[%s3 + $0x30] sm:$0xf]
    %v341 = vld [vmem:[%s3 + $0x34] sm:$0xf]
    %v342 = vld [vmem:[%s3 + $0x38] sm:$0xf]
    %v343 = vld [vmem:[%s3 + $0x3c] sm:$0xf]
    %v344 = vld [vmem:[%s3 + $0x40] sm:$0xf]
    %v345 = vld [vmem:[%s3 + $0x44] sm:$0xf]
    %v346 = vld [vmem:[%s3 + $0x48] sm:$0xf]
    %v347 = vld [vmem:[%s3 + $0x4c] sm:$0xf]
    %v348 = vld [vmem:[%s3 + $0x50] sm:$0xf]
    %v349 = vld [vmem:[%s3 + $0x54] sm:$0xf]
    %v350 = vld [vmem:[%s3 + $0x58] sm:$0xf]
    %v351 = vld [vmem:[%s3 + $0x5c] sm:$0xf]
    %v357 = vunpack.c.l.b16 %v323
    %v358 = vunpack.c.h.b16 %v323
    %v359 = vunpack.c.l.b16 %v324
    %v360 = vunpack.c.h.b16 %v324
    %v361 = vunpack.c.l.b16 %v325
    %v362 = vunpack.c.h.b16 %v325
    %v363 = vunpack.c.l.b16 %v326
    %v364 = vunpack.c.h.b16 %v326
    %v365 = vunpack.c.l.b16 %v327
    %v366 = vunpack.c.h.b16 %v327
    %v367 = vpack.c.b16 %v359, %v357
    %v368 = vpack.c.b16 %v360, %v358
    %v369 = vpack.c.b16 %v363, %v361
    %v370 = vpack.c.b16 %v364, %v362
    %v371 = vpack.c.b16 %v365, %v365
    %v372 = vpack.c.b16 %v366, %v366
    %v400 = vunpack.c.l.b16 %v328
    %v401 = vunpack.c.l.b16 %v329
    %v402 = vunpack.c.l.b16 %v330
    %v403 = vunpack.c.l.b16 %v331
    %v404 = vunpack.c.l.b16 %v332
    %v405 = vunpack.c.l.b16 %v333
    %v406 = vunpack.c.l.b16 %v334
    %v407 = vunpack.c.l.b16 %v335
    %v408 = vunpack.c.l.b16 %v336
    %v409 = vunpack.c.l.b16 %v337
    %v410 = vunpack.c.l.b16 %v338
    %v411 = vunpack.c.l.b16 %v339
    %v412 = vunpack.c.l.b16 %v340
    %v413 = vunpack.c.l.b16 %v341
    %v414 = vunpack.c.l.b16 %v342
    %v415 = vunpack.c.l.b16 %v343
    %v416 = vunpack.c.l.b16 %v344
    %v417 = vunpack.c.l.b16 %v345
    %v418 = vunpack.c.l.b16 %v346
    %v419 = vunpack.c.l.b16 %v347
    %v420 = vunpack.c.l.b16 %v348
    %v421 = vunpack.c.l.b16 %v349
    %v422 = vunpack.c.l.b16 %v350
    %v423 = vunpack.c.l.b16 %v351
    %v424 = vpack.c.b16 %v401, %v400
    %v425 = vpack.c.b16 %v403, %v402
    %v426 = vpack.c.b16 %v405, %v404
    %v427 = vpack.c.b16 %v407, %v406
    %v428 = vpack.c.b16 %v409, %v408
    %v429 = vpack.c.b16 %v411, %v410
    %v430 = vpack.c.b16 %v413, %v412
    %v431 = vpack.c.b16 %v415, %v414
    %v432 = vpack.c.b16 %v417, %v416
    %v433 = vpack.c.b16 %v419, %v418
    %v434 = vpack.c.b16 %v421, %v420
    %v435 = vpack.c.b16 %v423, %v422
    %vm448 = vcmask 523264
    %v450 = vsel %vm448, %v368, 0
    %v453 = vsel %vm448, %v370, 0
    %v456 = vsel %vm448, %v372, 0
    %458 = vmatprep.subr.bf16.mxu0 0
    %459 = vmatpush1.bf16.msra.mxu0 %v431
    %460 = vmatprep.subr.bf16.mxu0 0
    %461 = vmatpush1.bf16.msra.mxu0 %v430
    %462 = vmatprep.subr.bf16.mxu0 0
    %463 = vmatpush1.bf16.msra.mxu0 %v429
    %464 = vmatprep.subr.bf16.mxu0 0
    %465 = vmatpush1.bf16.msra.mxu0 %v428
    %466 = vmatprep.subr.bf16.mxu0 0
    %467 = vmatpush1.bf16.msra.mxu0 %v427
    %468 = vmatprep.subr.bf16.mxu0 0
    %469 = vmatpush1.bf16.msra.mxu0 %v426
    %470 = vmatprep.subr.bf16.mxu0 0
    %471 = vmatpush1.bf16.msra.mxu0 %v425
    %472 = vmatprep.subr.bf16.mxu0 0
    %473 = vmatpush1.bf16.msra.mxu0 %v424
    %474 = vmatprep.subr.bf16.mxu0 0
    %475 = vmatpush2.bf16.msra.mxu0 0
    %476 = vmatprep.subr.bf16.mxu0 0
    %477 = vmatpush2.bf16.msra.mxu0 0
    %478 = vmatprep.subr.bf16.mxu0 0
    %479 = vmatpush2.bf16.msra.mxu0 0
    %480 = vmatprep.subr.bf16.mxu0 0
    %481 = vmatpush2.bf16.msra.mxu0 0
    %482 = vmatprep.subr.bf16.mxu0 0
    %483 = vmatpush2.bf16.msra.mxu0 %v435
    %484 = vmatprep.subr.bf16.mxu0 0
    %485 = vmatpush2.bf16.msra.mxu0 %v434
    %486 = vmatprep.subr.bf16.mxu0 0
    %487 = vmatpush2.bf16.msra.mxu0 %v433
    %488 = vmatprep.subr.bf16.mxu0 0
    %489 = vmatpush2.bf16.msra.mxu0 %v432
    %490 = vmatprep.mubr.bf16.mxu0 %v450
    %491 = vmatmul.mubr.bf16.gmra.mxu0 %v367
    %v492 = vpop.f32.mrf.mxu0
    %v493 = vadd.f32 0.0, %v492
    %v494 = vpop.f32.mrf.mxu0
    %v495 = vpop.f32.mrf.mxu0
    %v496 = vadd.f32 0.0, %v495
    %v497 = vpop.f32.mrf.mxu0
    %498 = vmatprep.mubr.bf16.mxu0 %v453
    %499 = vmatmul.mubr.bf16.gmra.mxu0 %v369
    %v500 = vpop.f32.mrf.mxu0
    %v501 = vadd.f32 0.0, %v500
    %v502 = vpop.f32.mrf.mxu0
    %v503 = vpop.f32.mrf.mxu0
    %v504 = vadd.f32 0.0, %v503
    %v505 = vpop.f32.mrf.mxu0
    %506 = vmatprep.mubr.bf16.mxu0 %v456
    %507 = vmatmul.mubr.bf16.gmra.mxu0 %v371
    %v508 = vpop.f32.mrf.mxu0
    %v509 = vadd.f32 0.0, %v508
    %v510 = vpop.f32.mrf.mxu0
    %v511 = vpop.f32.mrf.mxu0
    %v512 = vpop.f32.mrf.mxu0
    %513 = vdwg.mxu0
    %v514 = vld [vmem:[%s5] sm:$0x1]
    %v516 = vlaneseq
    %v517 = vshrl.u32 %v516, 7
    %v518 = vsub.s32 0, %v517
    %v519 = vrot.slane %v514, %v518
    %v521 = vmul.f32 %v493, %v519
    %v522 = vmul.f32 %v496, %v519
    %v523 = vmul.f32 %v501, %v519
    %v524 = vmul.f32 %v504, %v519
    %v525 = vmul.f32 %v509, %v519
    %v526 = vld [vmem:[%s7] sm:$0x1]
    %v528 = vlaneseq
    %v529 = vshrl.u32 %v528, 7
    %v530 = vsub.s32 0, %v529
    %v531 = vrot.slane %v526, %v530
    %v533 = vadd.f32 %v521, %v531
    %v534 = vadd.f32 %v522, %v531
    %v535 = vadd.f32 %v523, %v531
    %v536 = vadd.f32 %v524, %v531
    %v537 = vadd.f32 %v525, %v531
    %v538 = vmax.f32 %v533, 0.0
    %v539 = vmax.f32 %v534, 0.0
    %v540 = vmax.f32 %v535, 0.0
    %v541 = vmax.f32 %v536, 0.0
    %v542 = vmax.f32 %v537, 0.0
    %v543 = vld [vmem:[%s19] sm:$0xff]
    %v544 = vld [vmem:[%s19 + $0x8] sm:$0xff]
    %v545 = vld [vmem:[%s19 + $0x10] sm:$0xff]
    %v546 = vld [vmem:[%s19 + $0x18] sm:$0xff]
    %v547 = vld [vmem:[%s19 + $0x20] sm:$0xf]
    %549 = vset.pattern.permute.xlu0 0
    %550 = vperm.xlu0 %549, %v543
    %v551 = vpop.permute.xlu0 %550
    %554 = vset.pattern.permute.xlu0 0
    %555 = vperm.xlu0 %554, %v544
    %v556 = vpop.permute.xlu0 %555
    %559 = vset.pattern.permute.xlu0 0
    %560 = vperm.xlu0 %559, %v545
    %v561 = vpop.permute.xlu0 %560
    %564 = vset.pattern.permute.xlu0 0
    %565 = vperm.xlu0 %564, %v546
    %v566 = vpop.permute.xlu0 %565
    %569 = vset.pattern.permute.xlu0 0
    %570 = vperm.xlu0 %569, %v547
    %v571 = vpop.permute.xlu0 %570
    %v573 = vmul.f32 %v538, %v551
    %v574 = vmul.f32 %v539, %v556
    %v575 = vmul.f32 %v540, %v561
    %v576 = vmul.f32 %v541, %v566
    %v577 = vmul.f32 %v542, %v571
    %v578 = vadd.f32 %v573, %v164
    %v579 = vadd.f32 %v574, %v165
    %v580 = vadd.f32 %v575, %v166
    %v581 = vadd.f32 %v576, %v167
    %v582 = vadd.f32 %v577, %v168
    %v583 = vpack.c.bf16 %v579, %v578
    %v584 = vpack.c.bf16 %v581, %v580
    %v585 = vpack.c.bf16 %v582, %v582
    %v589 = vunpack.c.l.b16 %v583
    %v590 = vunpack.c.h.b16 %v583
    %v591 = vunpack.c.l.b16 %v584
    %v592 = vunpack.c.h.b16 %v584
    %v593 = vunpack.c.l.b16 %v585
    %v594 = vpack.c.b16 %v589, %v589
    %v595 = vpack.c.b16 %v590, %v590
    %v596 = vpack.c.b16 %v591, %v591
    %v597 = vpack.c.b16 %v592, %v592
    %v598 = vpack.c.b16 %v593, %v593
    %v600 = vshrl.u32 %v594, 16
    %v602 = vrot.slane %v600, 7
    %v603 = vshll.u32 %v594, 16
    %v605 = vor.u32 %v602, %v603
    %v606 = vrot.slane %v602, 4
    %v608 = vshrl.u32 %v595, 16
    %v610 = vrot.slane %v608, 7
    %v611 = vshll.u32 %v595, 16
    %v613 = vor.u32 %v610, %v611
    %v614 = vsel %vm198, %v606, %v613
    %v615 = vrot.slane %v610, 4
    %v617 = vshrl.u32 %v596, 16
    %v619 = vrot.slane %v617, 7
    %v620 = vshll.u32 %v596, 16
    %v622 = vor.u32 %v619, %v620
    %v623 = vsel %vm198, %v615, %v622
    %v624 = vrot.slane %v619, 4
    %v626 = vshrl.u32 %v597, 16
    %v628 = vrot.slane %v626, 7
    %v629 = vshll.u32 %v597, 16
    %v631 = vor.u32 %v628, %v629
    %v632 = vsel %vm198, %v624, %v631
    %v633 = vrot.slane %v628, 4
    %v635 = vshrl.u32 %v598, 16
    %v637 = vrot.slane %v635, 7
    %v638 = vshll.u32 %v598, 16
    %v640 = vor.u32 %v637, %v638
    %v641 = vsel %vm198, %v633, %v640
    %v647 = vld [vmem:[#allocation2] sm:$0xf]
    %v648 = vsel %vm249, %v605, %v647
    %649 = vst [vmem:[#allocation2] sm:$0xf] %v648
    %650 = vst.msk [vmem:[#allocation2 + $0x8] sm:$0xf] %vm253, %v614
    %651 = vst.msk [vmem:[#allocation2 + $0x10] sm:$0xf] %vm253, %v623
    %652 = vst.msk [vmem:[#allocation2 + $0x18] sm:$0xf] %vm253, %v632
    %653 = vst.msk [vmem:[#allocation2 + $0x20] sm:$0x3] %vm257, %v641
    %654 = vrot.lane.b32.xlu0 %v594, 64
    %v655 = vpop.permute.xlu0 %654
    %656 = vrot.lane.b32.xlu0 %v595, 64
    %v657 = vpop.permute.xlu0 %656
    %658 = vrot.lane.b32.xlu0 %v596, 64
    %v659 = vpop.permute.xlu0 %658
    %660 = vrot.lane.b32.xlu0 %v597, 64
    %v661 = vpop.permute.xlu0 %660
    %662 = vrot.lane.b32.xlu0 %v598, 64
    %v663 = vpop.permute.xlu0 %662
    %669 = vst.msk [vmem:[#allocation2] sm:$0xf] %vm274, %v655
    %670 = vst.msk [vmem:[#allocation2 + $0x8] sm:$0xf] %vm274, %v657
    %671 = vst.msk [vmem:[#allocation2 + $0x10] sm:$0xf] %vm274, %v659
    %672 = vst.msk [vmem:[#allocation2 + $0x18] sm:$0xf] %vm274, %v661
    %673 = vst.msk [vmem:[#allocation2 + $0x20] sm:$0x3] %vm279, %v663
    %v674 = vrot.slane %v600, 4
    %v675 = vrot.slane %v603, 5
    %v676 = vor.u32 %v674, %v675
    %v677 = vrot.slane %v676, 4
    %v678 = vrot.slane %v611, 5
    %v679 = vsel %vm283, %v677, %v678
    %v680 = vrot.slane %v608, 4
    %v681 = vor.u32 %v680, %v678
    %v682 = vrot.slane %v681, 4
    %v683 = vrot.slane %v620, 5
    %v684 = vsel %vm283, %v682, %v683
    %v685 = vrot.slane %v617, 4
    %v686 = vor.u32 %v685, %v683
    %v687 = vrot.slane %v686, 4
    %v688 = vrot.slane %v629, 5
    %v689 = vsel %vm283, %v687, %v688
    %v690 = vrot.slane %v626, 4
    %v691 = vor.u32 %v690, %v688
    %v692 = vrot.slane %v691, 4
    %v693 = vrot.slane %v638, 5
    %v694 = vsel %vm283, %v692, %v693
    %v695 = vrot.slane %v635, 4
    %v696 = vor.u32 %v695, %v693
    %v697 = vrot.slane %v696, 4
    %703 = vst.msk [vmem:[#allocation2 + $0x4] sm:$0xf] %vm253, %v679
    %704 = vst.msk [vmem:[#allocation2 + $0xc] sm:$0xf] %vm253, %v684
    %705 = vst.msk [vmem:[#allocation2 + $0x14] sm:$0xf] %vm253, %v689
    %706 = vst.msk [vmem:[#allocation2 + $0x1c] sm:$0xf] %vm253, %v694
    %v707 = vld [vmem:[#allocation2 + $0x24] sm:$0x3]
    %v708 = vsel %vm319, %v697, %v707
    %709 = vst [vmem:[#allocation2 + $0x24] sm:$0x3] %v708
    %v710 = vld [vmem:[#allocation2] sm:$0xff]
    %v711 = vld [vmem:[#allocation2 + $0x8] sm:$0xff]
    %v712 = vld [vmem:[#allocation2 + $0x10] sm:$0xff]
    %v713 = vld [vmem:[#allocation2 + $0x18] sm:$0xff]
    %v714 = vld [vmem:[#allocation2 + $0x20] sm:$0x33]
    %v715 = vld [vmem:[%s9] sm:$0xf]
    %v716 = vld [vmem:[%s9 + $0x4] sm:$0xf]
    %v717 = vld [vmem:[%s9 + $0x8] sm:$0xf]
    %v718 = vld [vmem:[%s9 + $0xc] sm:$0xf]
    %v719 = vld [vmem:[%s9 + $0x10] sm:$0xf]
    %v720 = vld [vmem:[%s9 + $0x14] sm:$0xf]
    %v721 = vld [vmem:[%s9 + $0x18] sm:$0xf]
    %v722 = vld [vmem:[%s9 + $0x1c] sm:$0xf]
    %v723 = vld [vmem:[%s9 + $0x20] sm:$0xf]
    %v724 = vld [vmem:[%s9 + $0x24] sm:$0xf]
    %v725 = vld [vmem:[%s9 + $0x28] sm:$0xf]
    %v726 = vld [vmem:[%s9 + $0x2c] sm:$0xf]
    %v727 = vld [vmem:[%s9 + $0x30] sm:$0xf]
    %v728 = vld [vmem:[%s9 + $0x34] sm:$0xf]
    %v729 = vld [vmem:[%s9 + $0x38] sm:$0xf]
    %v730 = vld [vmem:[%s9 + $0x3c] sm:$0xf]
    %v731 = vld [vmem:[%s9 + $0x40] sm:$0xf]
    %v732 = vld [vmem:[%s9 + $0x44] sm:$0xf]
    %v733 = vld [vmem:[%s9 + $0x48] sm:$0xf]
    %v734 = vld [vmem:[%s9 + $0x4c] sm:$0xf]
    %v735 = vld [vmem:[%s9 + $0x50] sm:$0xf]
    %v736 = vld [vmem:[%s9 + $0x54] sm:$0xf]
    %v737 = vld [vmem:[%s9 + $0x58] sm:$0xf]
    %v738 = vld [vmem:[%s9 + $0x5c] sm:$0xf]
    %v744 = vunpack.c.l.b16 %v710
    %v745 = vunpack.c.h.b16 %v710
    %v746 = vunpack.c.l.b16 %v711
    %v747 = vunpack.c.h.b16 %v711
    %v748 = vunpack.c.l.b16 %v712
    %v749 = vunpack.c.h.b16 %v712
    %v750 = vunpack.c.l.b16 %v713
    %v751 = vunpack.c.h.b16 %v713
    %v752 = vunpack.c.l.b16 %v714
    %v753 = vunpack.c.h.b16 %v714
    %v754 = vpack.c.b16 %v746, %v744
    %v755 = vpack.c.b16 %v747, %v745
    %v756 = vpack.c.b16 %v750, %v748
    %v757 = vpack.c.b16 %v751, %v749
    %v758 = vpack.c.b16 %v752, %v752
    %v759 = vpack.c.b16 %v753, %v753
    %v787 = vunpack.c.l.b16 %v715
    %v788 = vunpack.c.l.b16 %v716
    %v789 = vunpack.c.l.b16 %v717
    %v790 = vunpack.c.l.b16 %v718
    %v791 = vunpack.c.l.b16 %v719
    %v792 = vunpack.c.l.b16 %v720
    %v793 = vunpack.c.l.b16 %v721
    %v794 = vunpack.c.l.b16 %v722
    %v795 = vunpack.c.l.b16 %v723
    %v796 = vunpack.c.l.b16 %v724
    %v797 = vunpack.c.l.b16 %v725
    %v798 = vunpack.c.l.b16 %v726
    %v799 = vunpack.c.l.b16 %v727
    %v800 = vunpack.c.l.b16 %v728
    %v801 = vunpack.c.l.b16 %v729
    %v802 = vunpack.c.l.b16 %v730
    %v803 = vunpack.c.l.b16 %v731
    %v804 = vunpack.c.l.b16 %v732
    %v805 = vunpack.c.l.b16 %v733
    %v806 = vunpack.c.l.b16 %v734
    %v807 = vunpack.c.l.b16 %v735
    %v808 = vunpack.c.l.b16 %v736
    %v809 = vunpack.c.l.b16 %v737
    %v810 = vunpack.c.l.b16 %v738
    %v811 = vpack.c.b16 %v788, %v787
    %v812 = vpack.c.b16 %v790, %v789
    %v813 = vpack.c.b16 %v792, %v791
    %v814 = vpack.c.b16 %v794, %v793
    %v815 = vpack.c.b16 %v796, %v795
    %v816 = vpack.c.b16 %v798, %v797
    %v817 = vpack.c.b16 %v800, %v799
    %v818 = vpack.c.b16 %v802, %v801
    %v819 = vpack.c.b16 %v804, %v803
    %v820 = vpack.c.b16 %v806, %v805
    %v821 = vpack.c.b16 %v808, %v807
    %v822 = vpack.c.b16 %v810, %v809
    %v836 = vsel %vm448, %v755, 0
    %v839 = vsel %vm448, %v757, 0
    %v842 = vsel %vm448, %v759, 0
    %844 = vmatprep.subr.bf16.mxu0 0
    %845 = vmatpush1.bf16.msra.mxu0 %v818
    %846 = vmatprep.subr.bf16.mxu0 0
    %847 = vmatpush1.bf16.msra.mxu0 %v817
    %848 = vmatprep.subr.bf16.mxu0 0
    %849 = vmatpush1.bf16.msra.mxu0 %v816
    %850 = vmatprep.subr.bf16.mxu0 0
    %851 = vmatpush1.bf16.msra.mxu0 %v815
    %852 = vmatprep.subr.bf16.mxu0 0
    %853 = vmatpush1.bf16.msra.mxu0 %v814
    %854 = vmatprep.subr.bf16.mxu0 0
    %855 = vmatpush1.bf16.msra.mxu0 %v813
    %856 = vmatprep.subr.bf16.mxu0 0
    %857 = vmatpush1.bf16.msra.mxu0 %v812
    %858 = vmatprep.subr.bf16.mxu0 0
    %859 = vmatpush1.bf16.msra.mxu0 %v811
    %860 = vmatprep.subr.bf16.mxu0 0
    %861 = vmatpush2.bf16.msra.mxu0 0
    %862 = vmatprep.subr.bf16.mxu0 0
    %863 = vmatpush2.bf16.msra.mxu0 0
    %864 = vmatprep.subr.bf16.mxu0 0
    %865 = vmatpush2.bf16.msra.mxu0 0
    %866 = vmatprep.subr.bf16.mxu0 0
    %867 = vmatpush2.bf16.msra.mxu0 0
    %868 = vmatprep.subr.bf16.mxu0 0
    %869 = vmatpush2.bf16.msra.mxu0 %v822
    %870 = vmatprep.subr.bf16.mxu0 0
    %871 = vmatpush2.bf16.msra.mxu0 %v821
    %872 = vmatprep.subr.bf16.mxu0 0
    %873 = vmatpush2.bf16.msra.mxu0 %v820
    %874 = vmatprep.subr.bf16.mxu0 0
    %875 = vmatpush2.bf16.msra.mxu0 %v819
    %876 = vmatprep.mubr.bf16.mxu0 %v836
    %877 = vmatmul.mubr.bf16.gmra.mxu0 %v754
    %v878 = vpop.f32.mrf.mxu0
    %v879 = vadd.f32 0.0, %v878
    %v880 = vpop.f32.mrf.mxu0
    %v881 = vpop.f32.mrf.mxu0
    %v882 = vadd.f32 0.0, %v881
    %v883 = vpop.f32.mrf.mxu0
    %884 = vmatprep.mubr.bf16.mxu0 %v839
    %885 = vmatmul.mubr.bf16.gmra.mxu0 %v756
    %v886 = vpop.f32.mrf.mxu0
    %v887 = vadd.f32 0.0, %v886
    %v888 = vpop.f32.mrf.mxu0
    %v889 = vpop.f32.mrf.mxu0
    %v890 = vadd.f32 0.0, %v889
    %v891 = vpop.f32.mrf.mxu0
    %892 = vmatprep.mubr.bf16.mxu0 %v842
    %893 = vmatmul.mubr.bf16.gmra.mxu0 %v758
    %v894 = vpop.f32.mrf.mxu0
    %v895 = vadd.f32 0.0, %v894
    %v896 = vpop.f32.mrf.mxu0
    %v897 = vpop.f32.mrf.mxu0
    %v898 = vpop.f32.mrf.mxu0
    %899 = vdwg.mxu0
    %v900 = vld [vmem:[%s11] sm:$0x1]
    %v902 = vlaneseq
    %v903 = vshrl.u32 %v902, 7
    %v904 = vsub.s32 0, %v903
    %v905 = vrot.slane %v900, %v904
    %v907 = vmul.f32 %v879, %v905
    %v908 = vmul.f32 %v882, %v905
    %v909 = vmul.f32 %v887, %v905
    %v910 = vmul.f32 %v890, %v905
    %v911 = vmul.f32 %v895, %v905
    %v912 = vld [vmem:[%s13] sm:$0x1]
    %v914 = vlaneseq
    %v915 = vshrl.u32 %v914, 7
    %v916 = vsub.s32 0, %v915
    %v917 = vrot.slane %v912, %v916
    %v919 = vadd.f32 %v907, %v917
    %v920 = vadd.f32 %v908, %v917
    %v921 = vadd.f32 %v909, %v917
    %v922 = vadd.f32 %v910, %v917
    %v923 = vadd.f32 %v911, %v917
    %v924 = vmax.f32 %v919, 0.0
    %v925 = vmax.f32 %v920, 0.0
    %v926 = vmax.f32 %v921, 0.0
    %v927 = vmax.f32 %v922, 0.0
    %v928 = vmax.f32 %v923, 0.0
    %vm934 = vcmask 1046528
    %v935 = vrot.slane %v924, 1
    %v936 = vrot.slane %v925, 1
    %v937 = vsel %vm934, %v935, %v936
    %v938 = vrot.slane %v926, 1
    %v939 = vsel %vm934, %v936, %v938
    %v940 = vrot.slane %v927, 1
    %v941 = vsel %vm934, %v938, %v940
    %v942 = vrot.slane %v928, 1
    %v943 = vsel %vm934, %v940, %v942
    %v949 = vmax.f32 %v924, %v937
    %v950 = vmax.f32 %v925, %v939
    %v951 = vmax.f32 %v926, %v941
    %v952 = vmax.f32 %v927, %v943
    %v953 = vmax.f32 %v928, %v942
    %959 = vrot.lane.b32.xlu0 %v949, 120
    %v960 = vpop.permute.xlu0 %959
    %961 = vrot.lane.b32.xlu0 %v950, 120
    %v962 = vpop.permute.xlu0 %961
    %963 = vrot.lane.b32.xlu0 %v951, 120
    %v964 = vpop.permute.xlu0 %963
    %965 = vrot.lane.b32.xlu0 %v952, 120
    %v966 = vpop.permute.xlu0 %965
    %967 = vrot.lane.b32.xlu0 %v953, 120
    %v968 = vpop.permute.xlu0 %967
    %v974 = vmax.f32 %v949, %v960
    %v975 = vmax.f32 %v950, %v962
    %v976 = vmax.f32 %v951, %v964
    %v977 = vmax.f32 %v952, %v966
    %v978 = vmax.f32 %v953, %v968
    %v979 = vld [vmem:[%s15] sm:$0xf]
    %v980 = vld [vmem:[%s15 + $0x4] sm:$0xf]
    %v981 = vld [vmem:[%s15 + $0x8] sm:$0x3]
    %v982 = vpack.c.bf16 %v975, %v974
    %v983 = vpack.c.bf16 %v977, %v976
    %v984 = vpack.c.bf16 %v978, %v978
    %v988 = vunpack.c.l.b16 %v979
    %v989 = vunpack.c.l.b16 %v980
    %v990 = vunpack.c.l.b16 %v981
    %v991 = vpack.c.b16 %v989, %v988
    %v992 = vpack.c.b16 %v990, %v990
    %vm993 = vcmask 285696
    %v995 = vsel %vm993, %v991, 0
    %v998 = vsel %vm993, %v992, 0
    %vm1000 = vcmask 1040384
    %vm1001 = vcmask 1041408
    %v1002 = vsel %vm1000, 4294967295, 65535
    %v1003 = vsel %vm1001, %v1002, 0
    %v1005 = vand.u32 %v984, %v1003
    %1007 = vmatprep.subr.bf16.mxu0 0
    %1008 = vmatpush1.bf16.msra.mxu0 0
    %1009 = vmatprep.subr.bf16.mxu0 0
    %1010 = vmatpush1.bf16.msra.mxu0 0
    %1011 = vmatprep.subr.bf16.mxu0 0
    %1012 = vmatpush1.bf16.msra.mxu0 0
    %1013 = vmatprep.subr.bf16.mxu0 0
    %1014 = vmatpush1.bf16.msra.mxu0 0
    %1015 = vmatprep.subr.bf16.mxu0 0
    %1016 = vmatpush1.bf16.msra.mxu0 0
    %1017 = vmatprep.subr.bf16.mxu0 0
    %1018 = vmatpush1.bf16.msra.mxu0 %v1005
    %1019 = vmatprep.subr.bf16.mxu0 0
    %1020 = vmatpush1.bf16.msra.mxu0 %v983
    %1021 = vmatprep.subr.bf16.mxu0 0
    %1022 = vmatpush1.bf16.msra.mxu0 %v982
    %1023 = vmatprep.subr.bf16.mxu0 0
    %1024 = vmatpush2.bf16.msra.mxu0 0
    %1025 = vmatprep.subr.bf16.mxu0 0
    %1026 = vmatpush2.bf16.msra.mxu0 0
    %1027 = vmatprep.subr.bf16.mxu0 0
    %1028 = vmatpush2.bf16.msra.mxu0 0
    %1029 = vmatprep.subr.bf16.mxu0 0
    %1030 = vmatpush2.bf16.msra.mxu0 0
    %1031 = vmatprep.subr.bf16.mxu0 0
    %1032 = vmatpush2.bf16.msra.mxu0 0
    %1033 = vmatprep.subr.bf16.mxu0 0
    %1034 = vmatpush2.bf16.msra.mxu0 0
    %1035 = vmatprep.subr.bf16.mxu0 0
    %1036 = vmatpush2.bf16.msra.mxu0 0
    %1037 = vmatprep.subr.bf16.mxu0 0
    %1038 = vmatpush2.bf16.msra.mxu0 0
    %1039 = vmatprep.mubr.bf16.mxu0 0
    %1040 = vmatmul.mubr.bf16.gmra.mxu0 %v995
    %v1041 = vpop.f32.mrf.mxu0
    %v1042 = vadd.f32 0.0, %v1041
    %v1043 = vpop.f32.mrf.mxu0
    %v1044 = vpop.f32.mrf.mxu0
    %v1045 = vadd.f32 0.0, %v1044
    %v1046 = vpop.f32.mrf.mxu0
    %1047 = vmatprep.mubr.bf16.mxu0 0
    %1048 = vmatmul.mubr.bf16.gmra.mxu0 %v998
    %v1049 = vpop.f32.mrf.mxu0
    %v1050 = vadd.f32 0.0, %v1049
    %v1051 = vpop.f32.mrf.mxu0
    %v1052 = vpop.f32.mrf.mxu0
    %v1053 = vpop.f32.mrf.mxu0
    %1054 = vdwg.mxu0
    %v1055 = vpack.c.bf16 %v1045, %v1042
    %v1056 = vpack.c.bf16 %v1050, %v1050
    %v1057 = vld [vmem:[%s17] sm:$0xf]
    %v1058 = vld [vmem:[%s17 + $0x4] sm:$0xf]
    %v1059 = vld [vmem:[%s17 + $0x8] sm:$0xf]
    %v1060 = vld [vmem:[%s17 + $0xc] sm:$0xf]
    %v1061 = vld [vmem:[%s17 + $0x10] sm:$0xf]
    %v1062 = vld [vmem:[%s17 + $0x14] sm:$0xf]
    %v1063 = vld [vmem:[%s17 + $0x18] sm:$0xf]
    %v1064 = vld [vmem:[%s17 + $0x1c] sm:$0xf]
    %v1065 = vld [vmem:[%s17 + $0x20] sm:$0xf]
    %v1066 = vld [vmem:[%s17 + $0x24] sm:$0xf]
    %v1067 = vld [vmem:[%s17 + $0x28] sm:$0xf]
    %v1068 = vld [vmem:[%s17 + $0x2c] sm:$0xf]
    %v1069 = vld [vmem:[%s17 + $0x30] sm:$0xf]
    %v1070 = vld [vmem:[%s17 + $0x34] sm:$0xf]
    %v1071 = vld [vmem:[%s17 + $0x38] sm:$0xf]
    %v1087 = vunpack.c.l.b16 %v1057
    %v1088 = vunpack.c.l.b16 %v1058
    %v1089 = vunpack.c.l.b16 %v1059
    %v1090 = vunpack.c.l.b16 %v1060
    %v1091 = vunpack.c.l.b16 %v1061
    %v1092 = vunpack.c.l.b16 %v1062
    %v1093 = vunpack.c.l.b16 %v1063
    %v1094 = vunpack.c.l.b16 %v1064
    %v1095 = vunpack.c.l.b16 %v1065
    %v1096 = vunpack.c.l.b16 %v1066
    %v1097 = vunpack.c.l.b16 %v1067
    %v1098 = vunpack.c.l.b16 %v1068
    %v1099 = vunpack.c.l.b16 %v1069
    %v1100 = vunpack.c.l.b16 %v1070
    %v1101 = vunpack.c.l.b16 %v1071
    %v1102 = vpack.c.b16 %v1088, %v1087
    %v1103 = vpack.c.b16 %v1090, %v1089
    %v1104 = vpack.c.b16 %v1092, %v1091
    %v1105 = vpack.c.b16 %v1094, %v1093
    %v1106 = vpack.c.b16 %v1096, %v1095
    %v1107 = vpack.c.b16 %v1098, %v1097
    %v1108 = vpack.c.b16 %v1100, %v1099
    %v1109 = vpack.c.b16 %v1101, %v1101
    %vm1117 = vcmask 982016
    %v1119 = vsel %vm1117, %v1055, 0
    %v1122 = vsel %vm1117, %v1056, 0
    %vm1124 = vcmask 1043456
    %v1126 = vsel %vm1124, %v1109, 0
    %1128 = vmatprep.subr.bf16.mxu0 0
    %1129 = vmatpush1.bf16.msra.mxu0 %v1126
    %1130 = vmatprep.subr.bf16.mxu0 0
    %1131 = vmatpush1.bf16.msra.mxu0 %v1108
    %1132 = vmatprep.subr.bf16.mxu0 0
    %1133 = vmatpush1.bf16.msra.mxu0 %v1107
    %1134 = vmatprep.subr.bf16.mxu0 0
    %1135 = vmatpush1.bf16.msra.mxu0 %v1106
    %1136 = vmatprep.subr.bf16.mxu0 0
    %1137 = vmatpush1.bf16.msra.mxu0 %v1105
    %1138 = vmatprep.subr.bf16.mxu0 0
    %1139 = vmatpush1.bf16.msra.mxu0 %v1104
    %1140 = vmatprep.subr.bf16.mxu0 0
    %1141 = vmatpush1.bf16.msra.mxu0 %v1103
    %1142 = vmatprep.subr.bf16.mxu0 0
    %1143 = vmatpush1.bf16.msra.mxu0 %v1102
    %1144 = vmatprep.subr.bf16.mxu0 0
    %1145 = vmatpush2.bf16.msra.mxu0 0
    %1146 = vmatprep.subr.bf16.mxu0 0
    %1147 = vmatpush2.bf16.msra.mxu0 0
    %1148 = vmatprep.subr.bf16.mxu0 0
    %1149 = vmatpush2.bf16.msra.mxu0 0
    %1150 = vmatprep.subr.bf16.mxu0 0
    %1151 = vmatpush2.bf16.msra.mxu0 0
    %1152 = vmatprep.subr.bf16.mxu0 0
    %1153 = vmatpush2.bf16.msra.mxu0 0
    %1154 = vmatprep.subr.bf16.mxu0 0
    %1155 = vmatpush2.bf16.msra.mxu0 0
    %1156 = vmatprep.subr.bf16.mxu0 0
    %1157 = vmatpush2.bf16.msra.mxu0 0
    %1158 = vmatprep.subr.bf16.mxu0 0
    %1159 = vmatpush2.bf16.msra.mxu0 0
    %1160 = vmatprep.mubr.bf16.mxu0 0
    %1161 = vmatmul.mubr.bf16.gmra.mxu0 %v1119
    %v1162 = vpop.f32.mrf.mxu0
    %v1163 = vadd.f32 0.0, %v1162
    %v1164 = vpop.f32.mrf.mxu0
    %v1165 = vpop.f32.mrf.mxu0
    %v1166 = vadd.f32 0.0, %v1165
    %v1167 = vpop.f32.mrf.mxu0
    %1168 = vmatprep.mubr.bf16.mxu0 0
    %1169 = vmatmul.mubr.bf16.gmra.mxu0 %v1122
    %v1170 = vpop.f32.mrf.mxu0
    %v1171 = vadd.f32 0.0, %v1170
    %v1172 = vpop.f32.mrf.mxu0
    %v1173 = vpop.f32.mrf.mxu0
    %v1174 = vpop.f32.mrf.mxu0
    %1175 = vdwg.mxu0
    %v1176 = vld [vmem:[#allocation3] sm:$0x1]
    %v1177 = vsel %vm171, 0, %v1176
    %1178 = vst [vmem:[#allocation3] sm:$0x1] %v1177
    %v1179 = vld [vmem:[#allocation3 + $0x14] sm:$0x2]
    %v1180 = vsel %vm177, 0, %v1179
    %1181 = vst [vmem:[#allocation3 + $0x14] sm:$0x2] %v1180
    %v1182 = vpack.c.bf16 %v1166, %v1163
    %v1183 = vpack.c.bf16 %v1171, %v1171
    %v1186 = vunpack.c.l.b16 %v1182
    %v1187 = vunpack.c.h.b16 %v1182
    %v1188 = vunpack.c.l.b16 %v1183
    %v1189 = vpack.c.b16 %v1186, %v1186
    %v1190 = vpack.c.b16 %v1187, %v1187
    %v1191 = vpack.c.b16 %v1188, %v1188
    %v1193 = vshrl.u32 %v1189, 16
    %v1195 = vrot.slane %v1193, 7
    %v1196 = vshll.u32 %v1189, 16
    %v1198 = vor.u32 %v1195, %v1196
    %v1199 = vrot.slane %v1195, 4
    %v1201 = vshrl.u32 %v1190, 16
    %v1203 = vrot.slane %v1201, 7
    %v1204 = vshll.u32 %v1190, 16
    %v1206 = vor.u32 %v1203, %v1204
    %v1207 = vsel %vm198, %v1199, %v1206
    %v1208 = vrot.slane %v1203, 4
    %v1210 = vshrl.u32 %v1191, 16
    %v1212 = vrot.slane %v1210, 7
    %v1213 = vshll.u32 %v1191, 16
    %v1215 = vor.u32 %v1212, %v1213
    %v1216 = vsel %vm198, %v1208, %v1215
    %v1220 = vld [vmem:[#allocation3] sm:$0xf]
    %v1221 = vsel %vm249, %v1198, %v1220
    %1222 = vst [vmem:[#allocation3] sm:$0xf] %v1221
    %1223 = vst.msk [vmem:[#allocation3 + $0x8] sm:$0xf] %vm253, %v1207
    %1224 = vst.msk [vmem:[#allocation3 + $0x10] sm:$0x3] %vm257, %v1216
    %1225 = vrot.lane.b32.xlu0 %v1189, 64
    %v1226 = vpop.permute.xlu0 %1225
    %1227 = vrot.lane.b32.xlu0 %v1190, 64
    %v1228 = vpop.permute.xlu0 %1227
    %1229 = vrot.lane.b32.xlu0 %v1191, 64
    %v1230 = vpop.permute.xlu0 %1229
    %1234 = vst.msk [vmem:[#allocation3] sm:$0xf] %vm274, %v1226
    %1235 = vst.msk [vmem:[#allocation3 + $0x8] sm:$0xf] %vm274, %v1228
    %1236 = vst.msk [vmem:[#allocation3 + $0x10] sm:$0x3] %vm279, %v1230
    %v1237 = vrot.slane %v1193, 4
    %v1238 = vrot.slane %v1196, 5
    %v1239 = vor.u32 %v1237, %v1238
    %v1240 = vrot.slane %v1239, 4
    %v1241 = vrot.slane %v1204, 5
    %v1242 = vsel %vm283, %v1240, %v1241
    %v1243 = vrot.slane %v1201, 4
    %v1244 = vor.u32 %v1243, %v1241
    %v1245 = vrot.slane %v1244, 4
    %v1246 = vrot.slane %v1213, 5
    %v1247 = vsel %vm283, %v1245, %v1246
    %v1248 = vrot.slane %v1210, 4
    %v1249 = vor.u32 %v1248, %v1246
    %v1250 = vrot.slane %v1249, 4
    %1254 = vst.msk [vmem:[#allocation3 + $0x4] sm:$0xf] %vm253, %v1242
    %1255 = vst.msk [vmem:[#allocation3 + $0xc] sm:$0xf] %vm253, %v1247
    %v1256 = vld [vmem:[#allocation3 + $0x14] sm:$0x3]
    %v1257 = vsel %vm319, %v1250, %v1256
    %1258 = vst [vmem:[#allocation3 + $0x14] sm:$0x3] %v1257
    %v1259 = vld [vmem:[#allocation3] sm:$0xff]
    %v1260 = vld [vmem:[#allocation3 + $0x8] sm:$0xff]
    %v1261 = vld [vmem:[#allocation3 + $0x10] sm:$0x33]
    %v1262 = vld [vmem:[%s21] sm:$0xf]
    %v1263 = vld [vmem:[%s21 + $0x4] sm:$0xf]
    %v1264 = vld [vmem:[%s21 + $0x8] sm:$0xf]
    %v1265 = vld [vmem:[%s21 + $0xc] sm:$0xf]
    %v1266 = vld [vmem:[%s21 + $0x10] sm:$0xf]
    %v1267 = vld [vmem:[%s21 + $0x14] sm:$0xf]
    %v1268 = vld [vmem:[%s21 + $0x18] sm:$0xf]
    %v1269 = vld [vmem:[%s21 + $0x1c] sm:$0xf]
    %v1270 = vld [vmem:[%s21 + $0x20] sm:$0xf]
    %v1271 = vld [vmem:[%s21 + $0x24] sm:$0xf]
    %v1272 = vld [vmem:[%s21 + $0x28] sm:$0xf]
    %v1273 = vld [vmem:[%s21 + $0x2c] sm:$0xf]
    %v1274 = vld [vmem:[%s21 + $0x30] sm:$0xf]
    %v1275 = vld [vmem:[%s21 + $0x34] sm:$0xf]
    %v1276 = vld [vmem:[%s21 + $0x38] sm:$0xf]
    %v1277 = vld [vmem:[%s21 + $0x3c] sm:$0xf]
    %v1278 = vld [vmem:[%s21 + $0x40] sm:$0xf]
    %v1279 = vld [vmem:[%s21 + $0x44] sm:$0xf]
    %v1280 = vld [vmem:[%s21 + $0x48] sm:$0xf]
    %v1281 = vld [vmem:[%s21 + $0x4c] sm:$0xf]
    %v1282 = vld [vmem:[%s21 + $0x50] sm:$0xf]
    %v1283 = vld [vmem:[%s21 + $0x54] sm:$0xf]
    %v1284 = vld [vmem:[%s21 + $0x58] sm:$0xf]
    %v1285 = vld [vmem:[%s21 + $0x5c] sm:$0xf]
    %v1289 = vunpack.c.l.b16 %v1259
    %v1290 = vunpack.c.h.b16 %v1259
    %v1291 = vunpack.c.l.b16 %v1260
    %v1292 = vunpack.c.h.b16 %v1260
    %v1293 = vunpack.c.l.b16 %v1261
    %v1294 = vunpack.c.h.b16 %v1261
    %v1295 = vpack.c.b16 %v1291, %v1289
    %v1296 = vpack.c.b16 %v1292, %v1290
    %v1297 = vpack.c.b16 %v1293, %v1293
    %v1298 = vpack.c.b16 %v1294, %v1294
    %v1325 = vunpack.c.l.b16 %v1262
    %v1326 = vunpack.c.l.b16 %v1263
    %v1327 = vunpack.c.l.b16 %v1264
    %v1328 = vunpack.c.l.b16 %v1265
    %v1329 = vunpack.c.l.b16 %v1266
    %v1330 = vunpack.c.l.b16 %v1267
    %v1331 = vunpack.c.l.b16 %v1268
    %v1332 = vunpack.c.l.b16 %v1269
    %v1333 = vunpack.c.l.b16 %v1270
    %v1334 = vunpack.c.l.b16 %v1271
    %v1335 = vunpack.c.l.b16 %v1272
    %v1336 = vunpack.c.l.b16 %v1273
    %v1337 = vunpack.c.l.b16 %v1274
    %v1338 = vunpack.c.l.b16 %v1275
    %v1339 = vunpack.c.l.b16 %v1276
    %v1340 = vunpack.c.l.b16 %v1277
    %v1341 = vunpack.c.l.b16 %v1278
    %v1342 = vunpack.c.l.b16 %v1279
    %v1343 = vunpack.c.l.b16 %v1280
    %v1344 = vunpack.c.l.b16 %v1281
    %v1345 = vunpack.c.l.b16 %v1282
    %v1346 = vunpack.c.l.b16 %v1283
    %v1347 = vunpack.c.l.b16 %v1284
    %v1348 = vunpack.c.l.b16 %v1285
    %v1349 = vpack.c.b16 %v1326, %v1325
    %v1350 = vpack.c.b16 %v1328, %v1327
    %v1351 = vpack.c.b16 %v1330, %v1329
    %v1352 = vpack.c.b16 %v1332, %v1331
    %v1353 = vpack.c.b16 %v1334, %v1333
    %v1354 = vpack.c.b16 %v1336, %v1335
    %v1355 = vpack.c.b16 %v1338, %v1337
    %v1356 = vpack.c.b16 %v1340, %v1339
    %v1357 = vpack.c.b16 %v1342, %v1341
    %v1358 = vpack.c.b16 %v1344, %v1343
    %v1359 = vpack.c.b16 %v1346, %v1345
    %v1360 = vpack.c.b16 %v1348, %v1347
    %v1374 = vsel %vm448, %v1296, 0
    %v1377 = vsel %vm448, %v1298, 0
    %1379 = vmatprep.subr.bf16.mxu0 0
    %1380 = vmatpush1.bf16.msra.mxu0 %v1356
    %1381 = vmatprep.subr.bf16.mxu0 0
    %1382 = vmatpush1.bf16.msra.mxu0 %v1355
    %1383 = vmatprep.subr.bf16.mxu0 0
    %1384 = vmatpush1.bf16.msra.mxu0 %v1354
    %1385 = vmatprep.subr.bf16.mxu0 0
    %1386 = vmatpush1.bf16.msra.mxu0 %v1353
    %1387 = vmatprep.subr.bf16.mxu0 0
    %1388 = vmatpush1.bf16.msra.mxu0 %v1352
    %1389 = vmatprep.subr.bf16.mxu0 0
    %1390 = vmatpush1.bf16.msra.mxu0 %v1351
    %1391 = vmatprep.subr.bf16.mxu0 0
    %1392 = vmatpush1.bf16.msra.mxu0 %v1350
    %1393 = vmatprep.subr.bf16.mxu0 0
    %1394 = vmatpush1.bf16.msra.mxu0 %v1349
    %1395 = vmatprep.subr.bf16.mxu0 0
    %1396 = vmatpush2.bf16.msra.mxu0 0
    %1397 = vmatprep.subr.bf16.mxu0 0
    %1398 = vmatpush2.bf16.msra.mxu0 0
    %1399 = vmatprep.subr.bf16.mxu0 0
    %1400 = vmatpush2.bf16.msra.mxu0 0
    %1401 = vmatprep.subr.bf16.mxu0 0
    %1402 = vmatpush2.bf16.msra.mxu0 0
    %1403 = vmatprep.subr.bf16.mxu0 0
    %1404 = vmatpush2.bf16.msra.mxu0 %v1360
    %1405 = vmatprep.subr.bf16.mxu0 0
    %1406 = vmatpush2.bf16.msra.mxu0 %v1359
    %1407 = vmatprep.subr.bf16.mxu0 0
    %1408 = vmatpush2.bf16.msra.mxu0 %v1358
    %1409 = vmatprep.subr.bf16.mxu0 0
    %1410 = vmatpush2.bf16.msra.mxu0 %v1357
    %1411 = vmatprep.mubr.bf16.mxu0 %v1374
    %1412 = vmatmul.mubr.bf16.gmra.mxu0 %v1295
    %v1413 = vpop.f32.mrf.mxu0
    %v1414 = vadd.f32 0.0, %v1413
    %v1415 = vpop.f32.mrf.mxu0
    %v1416 = vpop.f32.mrf.mxu0
    %v1417 = vadd.f32 0.0, %v1416
    %v1418 = vpop.f32.mrf.mxu0
    %1419 = vmatprep.mubr.bf16.mxu0 %v1377
    %1420 = vmatmul.mubr.bf16.gmra.mxu0 %v1297
    %v1421 = vpop.f32.mrf.mxu0
    %v1422 = vadd.f32 0.0, %v1421
    %v1423 = vpop.f32.mrf.mxu0
    %v1424 = vpop.f32.mrf.mxu0
    %v1425 = vpop.f32.mrf.mxu0
    %1426 = vdwg.mxu0
    %v1427 = vld [vmem:[%s23] sm:$0x1]
    %v1429 = vlaneseq
    %v1430 = vshrl.u32 %v1429, 7
    %v1431 = vsub.s32 0, %v1430
    %v1432 = vrot.slane %v1427, %v1431
    %v1434 = vmul.f32 %v1414, %v1432
    %v1435 = vmul.f32 %v1417, %v1432
    %v1436 = vmul.f32 %v1422, %v1432
    %v1437 = vld [vmem:[%s25] sm:$0x1]
    %v1439 = vlaneseq
    %v1440 = vshrl.u32 %v1439, 7
    %v1441 = vsub.s32 0, %v1440
    %v1442 = vrot.slane %v1437, %v1441
    %v1444 = vadd.f32 %v1434, %v1442
    %v1445 = vadd.f32 %v1435, %v1442
    %v1446 = vadd.f32 %v1436, %v1442
    %v1447 = vmax.f32 %v1444, 0.0
    %v1448 = vmax.f32 %v1445, 0.0
    %v1449 = vmax.f32 %v1446, 0.0
    %v1450 = vld [vmem:[%s37] sm:$0xff]
    %v1451 = vld [vmem:[%s37 + $0x8] sm:$0xff]
    %v1452 = vld [vmem:[%s37 + $0x10] sm:$0xf]
    %1454 = vset.pattern.permute.xlu0 0
    %1455 = vperm.xlu0 %1454, %v1450
    %v1456 = vpop.permute.xlu0 %1455
    %1459 = vset.pattern.permute.xlu0 0
    %1460 = vperm.xlu0 %1459, %v1451
    %v1461 = vpop.permute.xlu0 %1460
    %1464 = vset.pattern.permute.xlu0 0
    %1465 = vperm.xlu0 %1464, %v1452
    %v1466 = vpop.permute.xlu0 %1465
    %v1468 = vmul.f32 %v1447, %v1456
    %v1469 = vmul.f32 %v1448, %v1461
    %v1470 = vmul.f32 %v1449, %v1466
    %v1471 = vadd.f32 %v1468, %v1163
    %v1472 = vadd.f32 %v1469, %v1166
    %v1473 = vadd.f32 %v1470, %v1171
    %v1474 = vpack.c.bf16 %v1472, %v1471
    %v1475 = vpack.c.bf16 %v1473, %v1473
    %v1478 = vunpack.c.l.b16 %v1474
    %v1479 = vunpack.c.h.b16 %v1474
    %v1480 = vunpack.c.l.b16 %v1475
    %v1481 = vpack.c.b16 %v1478, %v1478
    %v1482 = vpack.c.b16 %v1479, %v1479
    %v1483 = vpack.c.b16 %v1480, %v1480
    %v1485 = vshrl.u32 %v1481, 16
    %v1487 = vrot.slane %v1485, 7
    %v1488 = vshll.u32 %v1481, 16
    %v1490 = vor.u32 %v1487, %v1488
    %v1491 = vrot.slane %v1487, 4
    %v1493 = vshrl.u32 %v1482, 16
    %v1495 = vrot.slane %v1493, 7
    %v1496 = vshll.u32 %v1482, 16
    %v1498 = vor.u32 %v1495, %v1496
    %v1499 = vsel %vm198, %v1491, %v1498
    %v1500 = vrot.slane %v1495, 4
    %v1502 = vshrl.u32 %v1483, 16
    %v1504 = vrot.slane %v1502, 7
    %v1505 = vshll.u32 %v1483, 16
    %v1507 = vor.u32 %v1504, %v1505
    %v1508 = vsel %vm198, %v1500, %v1507
    %v1512 = vld [vmem:[#allocation3] sm:$0xf]
    %v1513 = vsel %vm249, %v1490, %v1512
    %1514 = vst [vmem:[#allocation3] sm:$0xf] %v1513
    %1515 = vst.msk [vmem:[#allocation3 + $0x8] sm:$0xf] %vm253, %v1499
    %1516 = vst.msk [vmem:[#allocation3 + $0x10] sm:$0x3] %vm257, %v1508
    %1517 = vrot.lane.b32.xlu0 %v1481, 64
    %v1518 = vpop.permute.xlu0 %1517
    %1519 = vrot.lane.b32.xlu0 %v1482, 64
    %v1520 = vpop.permute.xlu0 %1519
    %1521 = vrot.lane.b32.xlu0 %v1483, 64
    %v1522 = vpop.permute.xlu0 %1521
    %1526 = vst.msk [vmem:[#allocation3] sm:$0xf] %vm274, %v1518
    %1527 = vst.msk [vmem:[#allocation3 + $0x8] sm:$0xf] %vm274, %v1520
    %1528 = vst.msk [vmem:[#allocation3 + $0x10] sm:$0x3] %vm279, %v1522
    %v1529 = vrot.slane %v1485, 4
    %v1530 = vrot.slane %v1488, 5
    %v1531 = vor.u32 %v1529, %v1530
    %v1532 = vrot.slane %v1531, 4
    %v1533 = vrot.slane %v1496, 5
    %v1534 = vsel %vm283, %v1532, %v1533
    %v1535 = vrot.slane %v1493, 4
    %v1536 = vor.u32 %v1535, %v1533
    %v1537 = vrot.slane %v1536, 4
    %v1538 = vrot.slane %v1505, 5
    %v1539 = vsel %vm283, %v1537, %v1538
    %v1540 = vrot.slane %v1502, 4
    %v1541 = vor.u32 %v1540, %v1538
    %v1542 = vrot.slane %v1541, 4
    %1546 = vst.msk [vmem:[#allocation3 + $0x4] sm:$0xf] %vm253, %v1534
    %1547 = vst.msk [vmem:[#allocation3 + $0xc] sm:$0xf] %vm253, %v1539
    %v1548 = vld [vmem:[#allocation3 + $0x14] sm:$0x3]
    %v1549 = vsel %vm319, %v1542, %v1548
    %1550 = vst [vmem:[#allocation3 + $0x14] sm:$0x3] %v1549
    %v1551 = vld [vmem:[#allocation3] sm:$0xff]
    %v1552 = vld [vmem:[#allocation3 + $0x8] sm:$0xff]
    %v1553 = vld [vmem:[#allocation3 + $0x10] sm:$0x33]
    %v1554 = vld [vmem:[%s27] sm:$0xf]
    %v1555 = vld [vmem:[%s27 + $0x4] sm:$0xf]
    %v1556 = vld [vmem:[%s27 + $0x8] sm:$0xf]
    %v1557 = vld [vmem:[%s27 + $0xc] sm:$0xf]
    %v1558 = vld [vmem:[%s27 + $0x10] sm:$0xf]
    %v1559 = vld [vmem:[%s27 + $0x14] sm:$0xf]
    %v1560 = vld [vmem:[%s27 + $0x18] sm:$0xf]
    %v1561 = vld [vmem:[%s27 + $0x1c] sm:$0xf]
    %v1562 = vld [vmem:[%s27 + $0x20] sm:$0xf]
    %v1563 = vld [vmem:[%s27 + $0x24] sm:$0xf]
    %v1564 = vld [vmem:[%s27 + $0x28] sm:$0xf]
    %v1565 = vld [vmem:[%s27 + $0x2c] sm:$0xf]
    %v1566 = vld [vmem:[%s27 + $0x30] sm:$0xf]
    %v1567 = vld [vmem:[%s27 + $0x34] sm:$0xf]
    %v1568 = vld [vmem:[%s27 + $0x38] sm:$0xf]
    %v1569 = vld [vmem:[%s27 + $0x3c] sm:$0xf]
    %v1570 = vld [vmem:[%s27 + $0x40] sm:$0xf]
    %v1571 = vld [vmem:[%s27 + $0x44] sm:$0xf]
    %v1572 = vld [vmem:[%s27 + $0x48] sm:$0xf]
    %v1573 = vld [vmem:[%s27 + $0x4c] sm:$0xf]
    %v1574 = vld [vmem:[%s27 + $0x50] sm:$0xf]
    %v1575 = vld [vmem:[%s27 + $0x54] sm:$0xf]
    %v1576 = vld [vmem:[%s27 + $0x58] sm:$0xf]
    %v1577 = vld [vmem:[%s27 + $0x5c] sm:$0xf]
    %v1581 = vunpack.c.l.b16 %v1551
    %v1582 = vunpack.c.h.b16 %v1551
    %v1583 = vunpack.c.l.b16 %v1552
    %v1584 = vunpack.c.h.b16 %v1552
    %v1585 = vunpack.c.l.b16 %v1553
    %v1586 = vunpack.c.h.b16 %v1553
    %v1587 = vpack.c.b16 %v1583, %v1581
    %v1588 = vpack.c.b16 %v1584, %v1582
    %v1589 = vpack.c.b16 %v1585, %v1585
    %v1590 = vpack.c.b16 %v1586, %v1586
    %v1617 = vunpack.c.l.b16 %v1554
    %v1618 = vunpack.c.l.b16 %v1555
    %v1619 = vunpack.c.l.b16 %v1556
    %v1620 = vunpack.c.l.b16 %v1557
    %v1621 = vunpack.c.l.b16 %v1558
    %v1622 = vunpack.c.l.b16 %v1559
    %v1623 = vunpack.c.l.b16 %v1560
    %v1624 = vunpack.c.l.b16 %v1561
    %v1625 = vunpack.c.l.b16 %v1562
    %v1626 = vunpack.c.l.b16 %v1563
    %v1627 = vunpack.c.l.b16 %v1564
    %v1628 = vunpack.c.l.b16 %v1565
    %v1629 = vunpack.c.l.b16 %v1566
    %v1630 = vunpack.c.l.b16 %v1567
    %v1631 = vunpack.c.l.b16 %v1568
    %v1632 = vunpack.c.l.b16 %v1569
    %v1633 = vunpack.c.l.b16 %v1570
    %v1634 = vunpack.c.l.b16 %v1571
    %v1635 = vunpack.c.l.b16 %v1572
    %v1636 = vunpack.c.l.b16 %v1573
    %v1637 = vunpack.c.l.b16 %v1574
    %v1638 = vunpack.c.l.b16 %v1575
    %v1639 = vunpack.c.l.b16 %v1576
    %v1640 = vunpack.c.l.b16 %v1577
    %v1641 = vpack.c.b16 %v1618, %v1617
    %v1642 = vpack.c.b16 %v1620, %v1619
    %v1643 = vpack.c.b16 %v1622, %v1621
    %v1644 = vpack.c.b16 %v1624, %v1623
    %v1645 = vpack.c.b16 %v1626, %v1625
    %v1646 = vpack.c.b16 %v1628, %v1627
    %v1647 = vpack.c.b16 %v1630, %v1629
    %v1648 = vpack.c.b16 %v1632, %v1631
    %v1649 = vpack.c.b16 %v1634, %v1633
    %v1650 = vpack.c.b16 %v1636, %v1635
    %v1651 = vpack.c.b16 %v1638, %v1637
    %v1652 = vpack.c.b16 %v1640, %v1639
    %v1666 = vsel %vm448, %v1588, 0
    %v1669 = vsel %vm448, %v1590, 0
    %1671 = vmatprep.subr.bf16.mxu0 0
    %1672 = vmatpush1.bf16.msra.mxu0 %v1648
    %1673 = vmatprep.subr.bf16.mxu0 0
    %1674 = vmatpush1.bf16.msra.mxu0 %v1647
    %1675 = vmatprep.subr.bf16.mxu0 0
    %1676 = vmatpush1.bf16.msra.mxu0 %v1646
    %1677 = vmatprep.subr.bf16.mxu0 0
    %1678 = vmatpush1.bf16.msra.mxu0 %v1645
    %1679 = vmatprep.subr.bf16.mxu0 0
    %1680 = vmatpush1.bf16.msra.mxu0 %v1644
    %1681 = vmatprep.subr.bf16.mxu0 0
    %1682 = vmatpush1.bf16.msra.mxu0 %v1643
    %1683 = vmatprep.subr.bf16.mxu0 0
    %1684 = vmatpush1.bf16.msra.mxu0 %v1642
    %1685 = vmatprep.subr.bf16.mxu0 0
    %1686 = vmatpush1.bf16.msra.mxu0 %v1641
    %1687 = vmatprep.subr.bf16.mxu0 0
    %1688 = vmatpush2.bf16.msra.mxu0 0
    %1689 = vmatprep.subr.bf16.mxu0 0
    %1690 = vmatpush2.bf16.msra.mxu0 0
    %1691 = vmatprep.subr.bf16.mxu0 0
    %1692 = vmatpush2.bf16.msra.mxu0 0
    %1693 = vmatprep.subr.bf16.mxu0 0
    %1694 = vmatpush2.bf16.msra.mxu0 0
    %1695 = vmatprep.subr.bf16.mxu0 0
    %1696 = vmatpush2.bf16.msra.mxu0 %v1652
    %1697 = vmatprep.subr.bf16.mxu0 0
    %1698 = vmatpush2.bf16.msra.mxu0 %v1651
    %1699 = vmatprep.subr.bf16.mxu0 0
    %1700 = vmatpush2.bf16.msra.mxu0 %v1650
    %1701 = vmatprep.subr.bf16.mxu0 0
    %1702 = vmatpush2.bf16.msra.mxu0 %v1649
    %1703 = vmatprep.mubr.bf16.mxu0 %v1666
    %1704 = vmatmul.mubr.bf16.gmra.mxu0 %v1587
    %v1705 = vpop.f32.mrf.mxu0
    %v1706 = vadd.f32 0.0, %v1705
    %v1707 = vpop.f32.mrf.mxu0
    %v1708 = vpop.f32.mrf.mxu0
    %v1709 = vadd.f32 0.0, %v1708
    %v1710 = vpop.f32.mrf.mxu0
    %1711 = vmatprep.mubr.bf16.mxu0 %v1669
    %1712 = vmatmul.mubr.bf16.gmra.mxu0 %v1589
    %v1713 = vpop.f32.mrf.mxu0
    %v1714 = vadd.f32 0.0, %v1713
    %v1715 = vpop.f32.mrf.mxu0
    %v1716 = vpop.f32.mrf.mxu0
    %v1717 = vpop.f32.mrf.mxu0
    %1718 = vdwg.mxu0
    %v1719 = vld [vmem:[%s29] sm:$0x1]
    %v1721 = vlaneseq
    %v1722 = vshrl.u32 %v1721, 7
    %v1723 = vsub.s32 0, %v1722
    %v1724 = vrot.slane %v1719, %v1723
    %v1726 = vmul.f32 %v1706, %v1724
    %v1727 = vmul.f32 %v1709, %v1724
    %v1728 = vmul.f32 %v1714, %v1724
    %v1729 = vld [vmem:[%s31] sm:$0x1]
    %v1731 = vlaneseq
    %v1732 = vshrl.u32 %v1731, 7
    %v1733 = vsub.s32 0, %v1732
    %v1734 = vrot.slane %v1729, %v1733
    %v1736 = vadd.f32 %v1726, %v1734
    %v1737 = vadd.f32 %v1727, %v1734
    %v1738 = vadd.f32 %v1728, %v1734
    %v1739 = vmax.f32 %v1736, 0.0
    %v1740 = vmax.f32 %v1737, 0.0
    %v1741 = vmax.f32 %v1738, 0.0
    %v1745 = vrot.slane %v1739, 1
    %v1746 = vrot.slane %v1740, 1
    %v1747 = vsel %vm934, %v1745, %v1746
    %v1748 = vrot.slane %v1741, 1
    %v1749 = vsel %vm934, %v1746, %v1748
    %v1753 = vmax.f32 %v1739, %v1747
    %v1754 = vmax.f32 %v1740, %v1749
    %v1755 = vmax.f32 %v1741, %v1748
    %1759 = vrot.lane.b32.xlu0 %v1753, 112
    %v1760 = vpop.permute.xlu0 %1759
    %1761 = vrot.lane.b32.xlu0 %v1754, 112
    %v1762 = vpop.permute.xlu0 %1761
    %1763 = vrot.lane.b32.xlu0 %v1755, 112
    %v1764 = vpop.permute.xlu0 %1763
    %v1768 = vmax.f32 %v1753, %v1760
    %v1769 = vmax.f32 %v1754, %v1762
    %v1770 = vmax.f32 %v1755, %v1764
    %v1771 = vld [vmem:[%s33] sm:$0xf]
    %v1772 = vld [vmem:[%s33 + $0x4] sm:$0x3]
    %v1773 = vpack.c.bf16 %v1769, %v1768
    %v1774 = vpack.c.bf16 %v1770, %v1770
    %v1777 = vunpack.c.l.b16 %v1771
    %v1778 = vunpack.c.l.b16 %v1772
    %v1779 = vpack.c.b16 %v1778, %v1777
    %vm1780 = vcmask 154624
    %v1782 = vsel %vm1780, %v1779, 0
    %v1785 = vand.u32 %v1774, %v1003
    %1787 = vmatprep.subr.bf16.mxu0 0
    %1788 = vmatpush1.bf16.msra.mxu0 0
    %1789 = vmatprep.subr.bf16.mxu0 0
    %1790 = vmatpush1.bf16.msra.mxu0 0
    %1791 = vmatprep.subr.bf16.mxu0 0
    %1792 = vmatpush1.bf16.msra.mxu0 0
    %1793 = vmatprep.subr.bf16.mxu0 0
    %1794 = vmatpush1.bf16.msra.mxu0 0
    %1795 = vmatprep.subr.bf16.mxu0 0
    %1796 = vmatpush1.bf16.msra.mxu0 0
    %1797 = vmatprep.subr.bf16.mxu0 0
    %1798 = vmatpush1.bf16.msra.mxu0 0
    %1799 = vmatprep.subr.bf16.mxu0 0
    %1800 = vmatpush1.bf16.msra.mxu0 %v1785
    %1801 = vmatprep.subr.bf16.mxu0 0
    %1802 = vmatpush1.bf16.msra.mxu0 %v1773
    %1803 = vmatprep.subr.bf16.mxu0 0
    %1804 = vmatpush2.bf16.msra.mxu0 0
    %1805 = vmatprep.subr.bf16.mxu0 0
    %1806 = vmatpush2.bf16.msra.mxu0 0
    %1807 = vmatprep.subr.bf16.mxu0 0
    %1808 = vmatpush2.bf16.msra.mxu0 0
    %1809 = vmatprep.subr.bf16.mxu0 0
    %1810 = vmatpush2.bf16.msra.mxu0 0
    %1811 = vmatprep.subr.bf16.mxu0 0
    %1812 = vmatpush2.bf16.msra.mxu0 0
    %1813 = vmatprep.subr.bf16.mxu0 0
    %1814 = vmatpush2.bf16.msra.mxu0 0
    %1815 = vmatprep.subr.bf16.mxu0 0
    %1816 = vmatpush2.bf16.msra.mxu0 0
    %1817 = vmatprep.subr.bf16.mxu0 0
    %1818 = vmatpush2.bf16.msra.mxu0 0
    %1819 = vmatprep.mubr.bf16.mxu0 0
    %1820 = vmatmul.mubr.bf16.gmra.mxu0 %v1782
    %v1821 = vpop.f32.mrf.mxu0
    %v1822 = vadd.f32 0.0, %v1821
    %v1823 = vpop.f32.mrf.mxu0
    %v1824 = vpop.f32.mrf.mxu0
    %v1825 = vadd.f32 0.0, %v1824
    %v1826 = vpop.f32.mrf.mxu0
    %1827 = vdwg.mxu0
    %v1828 = vpack.c.bf16 %v1825, %v1822
    %v1829 = vld [vmem:[%s35] sm:$0xf]
    %v1830 = vld [vmem:[%s35 + $0x4] sm:$0xf]
    %v1831 = vld [vmem:[%s35 + $0x8] sm:$0xf]
    %v1832 = vld [vmem:[%s35 + $0xc] sm:$0xf]
    %v1833 = vld [vmem:[%s35 + $0x10] sm:$0xf]
    %v1834 = vld [vmem:[%s35 + $0x14] sm:$0xf]
    %v1835 = vld [vmem:[%s35 + $0x18] sm:$0xf]
    %v1836 = vld [vmem:[%s35 + $0x1c] sm:$0xf]
    %v1837 = vld [vmem:[%s35 + $0x20] sm:$0xf]
    %v1838 = vld [vmem:[%s35 + $0x24] sm:$0xf]
    %v1839 = vld [vmem:[%s35 + $0x28] sm:$0xf]
    %v1840 = vld [vmem:[%s35 + $0x2c] sm:$0xf]
    %v1841 = vld [vmem:[%s35 + $0x30] sm:$0xf]
    %v1842 = vld [vmem:[%s35 + $0x34] sm:$0xf]
    %v1857 = vunpack.c.l.b16 %v1829
    %v1858 = vunpack.c.l.b16 %v1830
    %v1859 = vunpack.c.l.b16 %v1831
    %v1860 = vunpack.c.l.b16 %v1832
    %v1861 = vunpack.c.l.b16 %v1833
    %v1862 = vunpack.c.l.b16 %v1834
    %v1863 = vunpack.c.l.b16 %v1835
    %v1864 = vunpack.c.l.b16 %v1836
    %v1865 = vunpack.c.l.b16 %v1837
    %v1866 = vunpack.c.l.b16 %v1838
    %v1867 = vunpack.c.l.b16 %v1839
    %v1868 = vunpack.c.l.b16 %v1840
    %v1869 = vunpack.c.l.b16 %v1841
    %v1870 = vunpack.c.l.b16 %v1842
    %v1871 = vpack.c.b16 %v1858, %v1857
    %v1872 = vpack.c.b16 %v1860, %v1859
    %v1873 = vpack.c.b16 %v1862, %v1861
    %v1874 = vpack.c.b16 %v1864, %v1863
    %v1875 = vpack.c.b16 %v1866, %v1865
    %v1876 = vpack.c.b16 %v1868, %v1867
    %v1877 = vpack.c.b16 %v1870, %v1869
    %vm1885 = vcmask 916480
    %v1887 = vsel %vm1885, %v1828, 0
    %1889 = vmatprep.subr.bf16.mxu0 0
    %1890 = vmatpush1.bf16.msra.mxu0 0
    %1891 = vmatprep.subr.bf16.mxu0 0
    %1892 = vmatpush1.bf16.msra.mxu0 %v1877
    %1893 = vmatprep.subr.bf16.mxu0 0
    %1894 = vmatpush1.bf16.msra.mxu0 %v1876
    %1895 = vmatprep.subr.bf16.mxu0 0
    %1896 = vmatpush1.bf16.msra.mxu0 %v1875
    %1897 = vmatprep.subr.bf16.mxu0 0
    %1898 = vmatpush1.bf16.msra.mxu0 %v1874
    %1899 = vmatprep.subr.bf16.mxu0 0
    %1900 = vmatpush1.bf16.msra.mxu0 %v1873
    %1901 = vmatprep.subr.bf16.mxu0 0
    %1902 = vmatpush1.bf16.msra.mxu0 %v1872
    %1903 = vmatprep.subr.bf16.mxu0 0
    %1904 = vmatpush1.bf16.msra.mxu0 %v1871
    %1905 = vmatprep.subr.bf16.mxu0 0
    %1906 = vmatpush2.bf16.msra.mxu0 0
    %1907 = vmatprep.subr.bf16.mxu0 0
    %1908 = vmatpush2.bf16.msra.mxu0 0
    %1909 = vmatprep.subr.bf16.mxu0 0
    %1910 = vmatpush2.bf16.msra.mxu0 0
    %1911 = vmatprep.subr.bf16.mxu0 0
    %1912 = vmatpush2.bf16.msra.mxu0 0
    %1913 = vmatprep.subr.bf16.mxu0 0
    %1914 = vmatpush2.bf16.msra.mxu0 0
    %1915 = vmatprep.subr.bf16.mxu0 0
    %1916 = vmatpush2.bf16.msra.mxu0 0
    %1917 = vmatprep.subr.bf16.mxu0 0
    %1918 = vmatpush2.bf16.msra.mxu0 0
    %1919 = vmatprep.subr.bf16.mxu0 0
    %1920 = vmatpush2.bf16.msra.mxu0 0
    %1921 = vmatprep.mubr.bf16.mxu0 0
    %1922 = vmatmul.mubr.bf16.gmra.mxu0 %v1887
    %v1923 = vpop.f32.mrf.mxu0
    %v1924 = vadd.f32 0.0, %v1923
    %v1925 = vpop.f32.mrf.mxu0
    %v1926 = vpop.f32.mrf.mxu0
    %v1927 = vadd.f32 0.0, %v1926
    %v1928 = vpop.f32.mrf.mxu0
    %1929 = vdwg.mxu0
    %v1930 = vld [vmem:[#allocation4] sm:$0x1]
    %v1931 = vsel %vm171, 0, %v1930
    %1932 = vst [vmem:[#allocation4] sm:$0x1] %v1931
    %v1933 = vld [vmem:[#allocation4 + $0xc] sm:$0x2]
    %v1934 = vsel %vm177, 0, %v1933
    %1935 = vst [vmem:[#allocation4 + $0xc] sm:$0x2] %v1934
    %v1936 = vpack.c.bf16 %v1927, %v1924
    %v1938 = vunpack.c.l.b16 %v1936
    %v1939 = vunpack.c.h.b16 %v1936
    %v1940 = vpack.c.b16 %v1938, %v1938
    %v1941 = vpack.c.b16 %v1939, %v1939
    %v1943 = vshrl.u32 %v1940, 16
    %v1945 = vrot.slane %v1943, 7
    %v1946 = vshll.u32 %v1940, 16
    %v1948 = vor.u32 %v1945, %v1946
    %v1949 = vrot.slane %v1945, 4
    %v1951 = vshrl.u32 %v1941, 16
    %v1953 = vrot.slane %v1951, 7
    %v1954 = vshll.u32 %v1941, 16
    %v1956 = vor.u32 %v1953, %v1954
    %v1957 = vsel %vm198, %v1949, %v1956
    %v1960 = vld [vmem:[#allocation4] sm:$0xf]
    %v1961 = vsel %vm249, %v1948, %v1960
    %1962 = vst [vmem:[#allocation4] sm:$0xf] %v1961
    %1963 = vst.msk [vmem:[#allocation4 + $0x8] sm:$0x3] %vm257, %v1957
    %1964 = vrot.lane.b32.xlu0 %v1940, 64
    %v1965 = vpop.permute.xlu0 %1964
    %1966 = vrot.lane.b32.xlu0 %v1941, 64
    %v1967 = vpop.permute.xlu0 %1966
    %1970 = vst.msk [vmem:[#allocation4] sm:$0xf] %vm274, %v1965
    %1971 = vst.msk [vmem:[#allocation4 + $0x8] sm:$0x3] %vm279, %v1967
    %v1972 = vrot.slane %v1943, 4
    %v1973 = vrot.slane %v1946, 5
    %v1974 = vor.u32 %v1972, %v1973
    %v1975 = vrot.slane %v1974, 4
    %v1976 = vrot.slane %v1954, 5
    %v1977 = vsel %vm283, %v1975, %v1976
    %v1978 = vrot.slane %v1951, 4
    %v1979 = vor.u32 %v1978, %v1976
    %v1980 = vrot.slane %v1979, 4
    %1983 = vst.msk [vmem:[#allocation4 + $0x4] sm:$0xf] %vm253, %v1977
    %v1984 = vld [vmem:[#allocation4 + $0xc] sm:$0x3]
    %v1985 = vsel %vm319, %v1980, %v1984
    %1986 = vst [vmem:[#allocation4 + $0xc] sm:$0x3] %v1985
    %v1987 = vld [vmem:[#allocation4] sm:$0xff]
    %v1988 = vld [vmem:[#allocation4 + $0x8] sm:$0x33]
    %v1989 = vld [vmem:[%s39] sm:$0xf]
    %v1990 = vld [vmem:[%s39 + $0x4] sm:$0xf]
    %v1991 = vld [vmem:[%s39 + $0x8] sm:$0xf]
    %v1992 = vld [vmem:[%s39 + $0xc] sm:$0xf]
    %v1993 = vld [vmem:[%s39 + $0x10] sm:$0xf]
    %v1994 = vld [vmem:[%s39 + $0x14] sm:$0xf]
    %v1995 = vld [vmem:[%s39 + $0x18] sm:$0xf]
    %v1996 = vld [vmem:[%s39 + $0x1c] sm:$0xf]
    %v1997 = vld [vmem:[%s39 + $0x20] sm:$0xf]
    %v1998 = vld [vmem:[%s39 + $0x24] sm:$0xf]
    %v1999 = vld [vmem:[%s39 + $0x28] sm:$0xf]
    %v2000 = vld [vmem:[%s39 + $0x2c] sm:$0xf]
    %v2001 = vld [vmem:[%s39 + $0x30] sm:$0xf]
    %v2002 = vld [vmem:[%s39 + $0x34] sm:$0xf]
    %v2003 = vld [vmem:[%s39 + $0x38] sm:$0xf]
    %v2004 = vld [vmem:[%s39 + $0x3c] sm:$0xf]
    %v2005 = vld [vmem:[%s39 + $0x40] sm:$0xf]
    %v2006 = vld [vmem:[%s39 + $0x44] sm:$0xf]
    %v2007 = vld [vmem:[%s39 + $0x48] sm:$0xf]
    %v2008 = vld [vmem:[%s39 + $0x4c] sm:$0xf]
    %v2009 = vld [vmem:[%s39 + $0x50] sm:$0xf]
    %v2010 = vld [vmem:[%s39 + $0x54] sm:$0xf]
    %v2011 = vld [vmem:[%s39 + $0x58] sm:$0xf]
    %v2012 = vld [vmem:[%s39 + $0x5c] sm:$0xf]
    %v2015 = vunpack.c.l.b16 %v1987
    %v2016 = vunpack.c.h.b16 %v1987
    %v2017 = vunpack.c.l.b16 %v1988
    %v2018 = vunpack.c.h.b16 %v1988
    %v2019 = vpack.c.b16 %v2017, %v2015
    %v2020 = vpack.c.b16 %v2018, %v2016
    %v2046 = vunpack.c.l.b16 %v1989
    %v2047 = vunpack.c.l.b16 %v1990
    %v2048 = vunpack.c.l.b16 %v1991
    %v2049 = vunpack.c.l.b16 %v1992
    %v2050 = vunpack.c.l.b16 %v1993
    %v2051 = vunpack.c.l.b16 %v1994
    %v2052 = vunpack.c.l.b16 %v1995
    %v2053 = vunpack.c.l.b16 %v1996
    %v2054 = vunpack.c.l.b16 %v1997
    %v2055 = vunpack.c.l.b16 %v1998
    %v2056 = vunpack.c.l.b16 %v1999
    %v2057 = vunpack.c.l.b16 %v2000
    %v2058 = vunpack.c.l.b16 %v2001
    %v2059 = vunpack.c.l.b16 %v2002
    %v2060 = vunpack.c.l.b16 %v2003
    %v2061 = vunpack.c.l.b16 %v2004
    %v2062 = vunpack.c.l.b16 %v2005
    %v2063 = vunpack.c.l.b16 %v2006
    %v2064 = vunpack.c.l.b16 %v2007
    %v2065 = vunpack.c.l.b16 %v2008
    %v2066 = vunpack.c.l.b16 %v2009
    %v2067 = vunpack.c.l.b16 %v2010
    %v2068 = vunpack.c.l.b16 %v2011
    %v2069 = vunpack.c.l.b16 %v2012
    %v2070 = vpack.c.b16 %v2047, %v2046
    %v2071 = vpack.c.b16 %v2049, %v2048
    %v2072 = vpack.c.b16 %v2051, %v2050
    %v2073 = vpack.c.b16 %v2053, %v2052
    %v2074 = vpack.c.b16 %v2055, %v2054
    %v2075 = vpack.c.b16 %v2057, %v2056
    %v2076 = vpack.c.b16 %v2059, %v2058
    %v2077 = vpack.c.b16 %v2061, %v2060
    %v2078 = vpack.c.b16 %v2063, %v2062
    %v2079 = vpack.c.b16 %v2065, %v2064
    %v2080 = vpack.c.b16 %v2067, %v2066
    %v2081 = vpack.c.b16 %v2069, %v2068
    %v2095 = vsel %vm448, %v2020, 0
    %2097 = vmatprep.subr.bf16.mxu0 0
    %2098 = vmatpush1.bf16.msra.mxu0 %v2077
    %2099 = vmatprep.subr.bf16.mxu0 0
    %2100 = vmatpush1.bf16.msra.mxu0 %v2076
    %2101 = vmatprep.subr.bf16.mxu0 0
    %2102 = vmatpush1.bf16.msra.mxu0 %v2075
    %2103 = vmatprep.subr.bf16.mxu0 0
    %2104 = vmatpush1.bf16.msra.mxu0 %v2074
    %2105 = vmatprep.subr.bf16.mxu0 0
    %2106 = vmatpush1.bf16.msra.mxu0 %v2073
    %2107 = vmatprep.subr.bf16.mxu0 0
    %2108 = vmatpush1.bf16.msra.mxu0 %v2072
    %2109 = vmatprep.subr.bf16.mxu0 0
    %2110 = vmatpush1.bf16.msra.mxu0 %v2071
    %2111 = vmatprep.subr.bf16.mxu0 0
    %2112 = vmatpush1.bf16.msra.mxu0 %v2070
    %2113 = vmatprep.subr.bf16.mxu0 0
    %2114 = vmatpush2.bf16.msra.mxu0 0
    %2115 = vmatprep.subr.bf16.mxu0 0
    %2116 = vmatpush2.bf16.msra.mxu0 0
    %2117 = vmatprep.subr.bf16.mxu0 0
    %2118 = vmatpush2.bf16.msra.mxu0 0
    %2119 = vmatprep.subr.bf16.mxu0 0
    %2120 = vmatpush2.bf16.msra.mxu0 0
    %2121 = vmatprep.subr.bf16.mxu0 0
    %2122 = vmatpush2.bf16.msra.mxu0 %v2081
    %2123 = vmatprep.subr.bf16.mxu0 0
    %2124 = vmatpush2.bf16.msra.mxu0 %v2080
    %2125 = vmatprep.subr.bf16.mxu0 0
    %2126 = vmatpush2.bf16.msra.mxu0 %v2079
    %2127 = vmatprep.subr.bf16.mxu0 0
    %2128 = vmatpush2.bf16.msra.mxu0 %v2078
    %2129 = vmatprep.mubr.bf16.mxu0 %v2095
    %2130 = vmatmul.mubr.bf16.gmra.mxu0 %v2019
    %v2131 = vpop.f32.mrf.mxu0
    %v2132 = vadd.f32 0.0, %v2131
    %v2133 = vpop.f32.mrf.mxu0
    %v2134 = vpop.f32.mrf.mxu0
    %v2135 = vadd.f32 0.0, %v2134
    %v2136 = vpop.f32.mrf.mxu0
    %2137 = vdwg.mxu0
    %v2138 = vld [vmem:[%s41] sm:$0x1]
    %v2140 = vlaneseq
    %v2141 = vshrl.u32 %v2140, 7
    %v2142 = vsub.s32 0, %v2141
    %v2143 = vrot.slane %v2138, %v2142
    %v2145 = vmul.f32 %v2132, %v2143
    %v2146 = vmul.f32 %v2135, %v2143
    %v2147 = vld [vmem:[%s43] sm:$0x1]
    %v2149 = vlaneseq
    %v2150 = vshrl.u32 %v2149, 7
    %v2151 = vsub.s32 0, %v2150
    %v2152 = vrot.slane %v2147, %v2151
    %v2154 = vadd.f32 %v2145, %v2152
    %v2155 = vadd.f32 %v2146, %v2152
    %v2156 = vmax.f32 %v2154, 0.0
    %v2157 = vmax.f32 %v2155, 0.0
    %v2158 = vld [vmem:[%s55] sm:$0xff]
    %v2159 = vld [vmem:[%s55 + $0x8] sm:$0xf]
    %2161 = vset.pattern.permute.xlu0 0
    %2162 = vperm.xlu0 %2161, %v2158
    %v2163 = vpop.permute.xlu0 %2162
    %2166 = vset.pattern.permute.xlu0 0
    %2167 = vperm.xlu0 %2166, %v2159
    %v2168 = vpop.permute.xlu0 %2167
    %v2170 = vmul.f32 %v2156, %v2163
    %v2171 = vmul.f32 %v2157, %v2168
    %v2172 = vadd.f32 %v2170, %v1924
    %v2173 = vadd.f32 %v2171, %v1927
    %v2174 = vpack.c.bf16 %v2173, %v2172
    %v2176 = vunpack.c.l.b16 %v2174
    %v2177 = vunpack.c.h.b16 %v2174
    %v2178 = vpack.c.b16 %v2176, %v2176
    %v2179 = vpack.c.b16 %v2177, %v2177
    %v2181 = vshrl.u32 %v2178, 16
    %v2183 = vrot.slane %v2181, 7
    %v2184 = vshll.u32 %v2178, 16
    %v2186 = vor.u32 %v2183, %v2184
    %v2187 = vrot.slane %v2183, 4
    %v2189 = vshrl.u32 %v2179, 16
    %v2191 = vrot.slane %v2189, 7
    %v2192 = vshll.u32 %v2179, 16
    %v2194 = vor.u32 %v2191, %v2192
    %v2195 = vsel %vm198, %v2187, %v2194
    %v2198 = vld [vmem:[#allocation4] sm:$0xf]
    %v2199 = vsel %vm249, %v2186, %v2198
    %2200 = vst [vmem:[#allocation4] sm:$0xf] %v2199
    %2201 = vst.msk [vmem:[#allocation4 + $0x8] sm:$0x3] %vm257, %v2195
    %2202 = vrot.lane.b32.xlu0 %v2178, 64
    %v2203 = vpop.permute.xlu0 %2202
    %2204 = vrot.lane.b32.xlu0 %v2179, 64
    %v2205 = vpop.permute.xlu0 %2204
    %2208 = vst.msk [vmem:[#allocation4] sm:$0xf] %vm274, %v2203
    %2209 = vst.msk [vmem:[#allocation4 + $0x8] sm:$0x3] %vm279, %v2205
    %v2210 = vrot.slane %v2181, 4
    %v2211 = vrot.slane %v2184, 5
    %v2212 = vor.u32 %v2210, %v2211
    %v2213 = vrot.slane %v2212, 4
    %v2214 = vrot.slane %v2192, 5
    %v2215 = vsel %vm283, %v2213, %v2214
    %v2216 = vrot.slane %v2189, 4
    %v2217 = vor.u32 %v2216, %v2214
    %v2218 = vrot.slane %v2217, 4
    %2221 = vst.msk [vmem:[#allocation4 + $0x4] sm:$0xf] %vm253, %v2215
    %v2222 = vld [vmem:[#allocation4 + $0xc] sm:$0x3]
    %v2223 = vsel %vm319, %v2218, %v2222
    %2224 = vst [vmem:[#allocation4 + $0xc] sm:$0x3] %v2223
    %v2225 = vld [vmem:[#allocation4] sm:$0xff]
    %v2226 = vld [vmem:[#allocation4 + $0x8] sm:$0x33]
    %v2227 = vld [vmem:[%s45] sm:$0xf]
    %v2228 = vld [vmem:[%s45 + $0x4] sm:$0xf]
    %v2229 = vld [vmem:[%s45 + $0x8] sm:$0xf]
    %v2230 = vld [vmem:[%s45 + $0xc] sm:$0xf]
    %v2231 = vld [vmem:[%s45 + $0x10] sm:$0xf]
    %v2232 = vld [vmem:[%s45 + $0x14] sm:$0xf]
    %v2233 = vld [vmem:[%s45 + $0x18] sm:$0xf]
    %v2234 = vld [vmem:[%s45 + $0x1c] sm:$0xf]
    %v2235 = vld [vmem:[%s45 + $0x20] sm:$0xf]
    %v2236 = vld [vmem:[%s45 + $0x24] sm:$0xf]
    %v2237 = vld [vmem:[%s45 + $0x28] sm:$0xf]
    %v2238 = vld [vmem:[%s45 + $0x2c] sm:$0xf]
    %v2239 = vld [vmem:[%s45 + $0x30] sm:$0xf]
    %v2240 = vld [vmem:[%s45 + $0x34] sm:$0xf]
    %v2241 = vld [vmem:[%s45 + $0x38] sm:$0xf]
    %v2242 = vld [vmem:[%s45 + $0x3c] sm:$0xf]
    %v2243 = vld [vmem:[%s45 + $0x40] sm:$0xf]
    %v2244 = vld [vmem:[%s45 + $0x44] sm:$0xf]
    %v2245 = vld [vmem:[%s45 + $0x48] sm:$0xf]
    %v2246 = vld [vmem:[%s45 + $0x4c] sm:$0xf]
    %v2247 = vld [vmem:[%s45 + $0x50] sm:$0xf]
    %v2248 = vld [vmem:[%s45 + $0x54] sm:$0xf]
    %v2249 = vld [vmem:[%s45 + $0x58] sm:$0xf]
    %v2250 = vld [vmem:[%s45 + $0x5c] sm:$0xf]
    %v2253 = vunpack.c.l.b16 %v2225
    %v2254 = vunpack.c.h.b16 %v2225
    %v2255 = vunpack.c.l.b16 %v2226
    %v2256 = vunpack.c.h.b16 %v2226
    %v2257 = vpack.c.b16 %v2255, %v2253
    %v2258 = vpack.c.b16 %v2256, %v2254
    %v2284 = vunpack.c.l.b16 %v2227
    %v2285 = vunpack.c.l.b16 %v2228
    %v2286 = vunpack.c.l.b16 %v2229
    %v2287 = vunpack.c.l.b16 %v2230
    %v2288 = vunpack.c.l.b16 %v2231
    %v2289 = vunpack.c.l.b16 %v2232
    %v2290 = vunpack.c.l.b16 %v2233
    %v2291 = vunpack.c.l.b16 %v2234
    %v2292 = vunpack.c.l.b16 %v2235
    %v2293 = vunpack.c.l.b16 %v2236
    %v2294 = vunpack.c.l.b16 %v2237
    %v2295 = vunpack.c.l.b16 %v2238
    %v2296 = vunpack.c.l.b16 %v2239
    %v2297 = vunpack.c.l.b16 %v2240
    %v2298 = vunpack.c.l.b16 %v2241
    %v2299 = vunpack.c.l.b16 %v2242
    %v2300 = vunpack.c.l.b16 %v2243
    %v2301 = vunpack.c.l.b16 %v2244
    %v2302 = vunpack.c.l.b16 %v2245
    %v2303 = vunpack.c.l.b16 %v2246
    %v2304 = vunpack.c.l.b16 %v2247
    %v2305 = vunpack.c.l.b16 %v2248
    %v2306 = vunpack.c.l.b16 %v2249
    %v2307 = vunpack.c.l.b16 %v2250
    %v2308 = vpack.c.b16 %v2285, %v2284
    %v2309 = vpack.c.b16 %v2287, %v2286
    %v2310 = vpack.c.b16 %v2289, %v2288
    %v2311 = vpack.c.b16 %v2291, %v2290
    %v2312 = vpack.c.b16 %v2293, %v2292
    %v2313 = vpack.c.b16 %v2295, %v2294
    %v2314 = vpack.c.b16 %v2297, %v2296
    %v2315 = vpack.c.b16 %v2299, %v2298
    %v2316 = vpack.c.b16 %v2301, %v2300
    %v2317 = vpack.c.b16 %v2303, %v2302
    %v2318 = vpack.c.b16 %v2305, %v2304
    %v2319 = vpack.c.b16 %v2307, %v2306
    %v2333 = vsel %vm448, %v2258, 0
    %2335 = vmatprep.subr.bf16.mxu0 0
    %2336 = vmatpush1.bf16.msra.mxu0 %v2315
    %2337 = vmatprep.subr.bf16.mxu0 0
    %2338 = vmatpush1.bf16.msra.mxu0 %v2314
    %2339 = vmatprep.subr.bf16.mxu0 0
    %2340 = vmatpush1.bf16.msra.mxu0 %v2313
    %2341 = vmatprep.subr.bf16.mxu0 0
    %2342 = vmatpush1.bf16.msra.mxu0 %v2312
    %2343 = vmatprep.subr.bf16.mxu0 0
    %2344 = vmatpush1.bf16.msra.mxu0 %v2311
    %2345 = vmatprep.subr.bf16.mxu0 0
    %2346 = vmatpush1.bf16.msra.mxu0 %v2310
    %2347 = vmatprep.subr.bf16.mxu0 0
    %2348 = vmatpush1.bf16.msra.mxu0 %v2309
    %2349 = vmatprep.subr.bf16.mxu0 0
    %2350 = vmatpush1.bf16.msra.mxu0 %v2308
    %2351 = vmatprep.subr.bf16.mxu0 0
    %2352 = vmatpush2.bf16.msra.mxu0 0
    %2353 = vmatprep.subr.bf16.mxu0 0
    %2354 = vmatpush2.bf16.msra.mxu0 0
    %2355 = vmatprep.subr.bf16.mxu0 0
    %2356 = vmatpush2.bf16.msra.mxu0 0
    %2357 = vmatprep.subr.bf16.mxu0 0
    %2358 = vmatpush2.bf16.msra.mxu0 0
    %2359 = vmatprep.subr.bf16.mxu0 0
    %2360 = vmatpush2.bf16.msra.mxu0 %v2319
    %2361 = vmatprep.subr.bf16.mxu0 0
    %2362 = vmatpush2.bf16.msra.mxu0 %v2318
    %2363 = vmatprep.subr.bf16.mxu0 0
    %2364 = vmatpush2.bf16.msra.mxu0 %v2317
    %2365 = vmatprep.subr.bf16.mxu0 0
    %2366 = vmatpush2.bf16.msra.mxu0 %v2316
    %2367 = vmatprep.mubr.bf16.mxu0 %v2333
    %2368 = vmatmul.mubr.bf16.gmra.mxu0 %v2257
    %v2369 = vpop.f32.mrf.mxu0
    %v2370 = vadd.f32 0.0, %v2369
    %v2371 = vpop.f32.mrf.mxu0
    %v2372 = vpop.f32.mrf.mxu0
    %v2373 = vadd.f32 0.0, %v2372
    %v2374 = vpop.f32.mrf.mxu0
    %2375 = vdwg.mxu0
    %v2376 = vld [vmem:[%s47] sm:$0x1]
    %v2378 = vlaneseq
    %v2379 = vshrl.u32 %v2378, 7
    %v2380 = vsub.s32 0, %v2379
    %v2381 = vrot.slane %v2376, %v2380
    %v2383 = vmul.f32 %v2370, %v2381
    %v2384 = vmul.f32 %v2373, %v2381
    %v2385 = vld [vmem:[%s49] sm:$0x1]
    %v2387 = vlaneseq
    %v2388 = vshrl.u32 %v2387, 7
    %v2389 = vsub.s32 0, %v2388
    %v2390 = vrot.slane %v2385, %v2389
    %v2392 = vadd.f32 %v2383, %v2390
    %v2393 = vadd.f32 %v2384, %v2390
    %v2394 = vmax.f32 %v2392, 0.0
    %v2395 = vmax.f32 %v2393, 0.0
    %v2398 = vrot.slane %v2394, 1
    %v2399 = vrot.slane %v2395, 1
    %v2400 = vsel %vm934, %v2398, %v2399
    %v2403 = vmax.f32 %v2394, %v2400
    %v2404 = vmax.f32 %v2395, %v2399
    %2407 = vrot.lane.b32.xlu0 %v2403, 96
    %v2408 = vpop.permute.xlu0 %2407
    %2409 = vrot.lane.b32.xlu0 %v2404, 96
    %v2410 = vpop.permute.xlu0 %2409
    %v2413 = vmax.f32 %v2403, %v2408
    %v2414 = vmax.f32 %v2404, %v2410
    %v2415 = vld [vmem:[%s51] sm:$0xf]
    %v2416 = vpack.c.bf16 %v2414, %v2413
    %vm2417 = vcmask 89088
    %v2419 = vsel %vm2417, %v2415, 0
    %vm2421 = vcmask 1044480
    %vm2422 = vcmask 1045504
    %v2423 = vsel %vm2421, 4294967295, 65535
    %v2424 = vsel %vm2422, %v2423, 0
    %v2426 = vand.u32 %v2416, %v2424
    %2428 = vmatprep.subr.bf16.mxu0 0
    %2429 = vmatpush1.bf16.msra.mxu0 0
    %2430 = vmatprep.subr.bf16.mxu0 0
    %2431 = vmatpush1.bf16.msra.mxu0 0
    %2432 = vmatprep.subr.bf16.mxu0 0
    %2433 = vmatpush1.bf16.msra.mxu0 0
    %2434 = vmatprep.subr.bf16.mxu0 0
    %2435 = vmatpush1.bf16.msra.mxu0 0
    %2436 = vmatprep.subr.bf16.mxu0 0
    %2437 = vmatpush1.bf16.msra.mxu0 0
    %2438 = vmatprep.subr.bf16.mxu0 0
    %2439 = vmatpush1.bf16.msra.mxu0 0
    %2440 = vmatprep.subr.bf16.mxu0 0
    %2441 = vmatpush1.bf16.msra.mxu0 0
    %2442 = vmatprep.subr.bf16.mxu0 0
    %2443 = vmatpush1.bf16.msra.mxu0 %v2426
    %2444 = vmatprep.subr.bf16.mxu0 0
    %2445 = vmatpush2.bf16.msra.mxu0 0
    %2446 = vmatprep.subr.bf16.mxu0 0
    %2447 = vmatpush2.bf16.msra.mxu0 0
    %2448 = vmatprep.subr.bf16.mxu0 0
    %2449 = vmatpush2.bf16.msra.mxu0 0
    %2450 = vmatprep.subr.bf16.mxu0 0
    %2451 = vmatpush2.bf16.msra.mxu0 0
    %2452 = vmatprep.subr.bf16.mxu0 0
    %2453 = vmatpush2.bf16.msra.mxu0 0
    %2454 = vmatprep.subr.bf16.mxu0 0
    %2455 = vmatpush2.bf16.msra.mxu0 0
    %2456 = vmatprep.subr.bf16.mxu0 0
    %2457 = vmatpush2.bf16.msra.mxu0 0
    %2458 = vmatprep.subr.bf16.mxu0 0
    %2459 = vmatpush2.bf16.msra.mxu0 0
    %2460 = vmatprep.mubr.bf16.mxu0 0
    %2461 = vmatmul.mubr.bf16.gmra.mxu0 %v2419
    %v2462 = vpop.f32.mrf.mxu0
    %v2463 = vadd.f32 0.0, %v2462
    %v2464 = vpop.f32.mrf.mxu0
    %v2465 = vpop.f32.mrf.mxu0
    %v2466 = vpop.f32.mrf.mxu0
    %2467 = vdwg.mxu0
    %v2468 = vpack.c.bf16 %v2463, %v2463
    %v2469 = vld [vmem:[%s53] sm:$0xf]
    %v2470 = vld [vmem:[%s53 + $0x4] sm:$0xf]
    %v2471 = vld [vmem:[%s53 + $0x8] sm:$0xf]
    %v2472 = vld [vmem:[%s53 + $0xc] sm:$0xf]
    %v2473 = vld [vmem:[%s53 + $0x10] sm:$0xf]
    %v2474 = vld [vmem:[%s53 + $0x14] sm:$0xf]
    %v2475 = vld [vmem:[%s53 + $0x18] sm:$0xf]
    %v2476 = vld [vmem:[%s53 + $0x1c] sm:$0xf]
    %v2477 = vld [vmem:[%s53 + $0x20] sm:$0xf]
    %v2478 = vld [vmem:[%s53 + $0x24] sm:$0xf]
    %v2479 = vld [vmem:[%s53 + $0x28] sm:$0xf]
    %v2480 = vld [vmem:[%s53 + $0x2c] sm:$0xf]
    %v2493 = vunpack.c.l.b16 %v2469
    %v2494 = vunpack.c.l.b16 %v2470
    %v2495 = vunpack.c.l.b16 %v2471
    %v2496 = vunpack.c.l.b16 %v2472
    %v2497 = vunpack.c.l.b16 %v2473
    %v2498 = vunpack.c.l.b16 %v2474
    %v2499 = vunpack.c.l.b16 %v2475
    %v2500 = vunpack.c.l.b16 %v2476
    %v2501 = vunpack.c.l.b16 %v2477
    %v2502 = vunpack.c.l.b16 %v2478
    %v2503 = vunpack.c.l.b16 %v2479
    %v2504 = vunpack.c.l.b16 %v2480
    %v2505 = vpack.c.b16 %v2494, %v2493
    %v2506 = vpack.c.b16 %v2496, %v2495
    %v2507 = vpack.c.b16 %v2498, %v2497
    %v2508 = vpack.c.b16 %v2500, %v2499
    %v2509 = vpack.c.b16 %v2502, %v2501
    %v2510 = vpack.c.b16 %v2504, %v2503
    %vm2517 = vcmask 785408
    %v2519 = vsel %vm2517, %v2468, 0
    %2521 = vmatprep.subr.bf16.mxu0 0
    %2522 = vmatpush1.bf16.msra.mxu0 0
    %2523 = vmatprep.subr.bf16.mxu0 0
    %2524 = vmatpush1.bf16.msra.mxu0 0
    %2525 = vmatprep.subr.bf16.mxu0 0
    %2526 = vmatpush1.bf16.msra.mxu0 %v2510
    %2527 = vmatprep.subr.bf16.mxu0 0
    %2528 = vmatpush1.bf16.msra.mxu0 %v2509
    %2529 = vmatprep.subr.bf16.mxu0 0
    %2530 = vmatpush1.bf16.msra.mxu0 %v2508
    %2531 = vmatprep.subr.bf16.mxu0 0
    %2532 = vmatpush1.bf16.msra.mxu0 %v2507
    %2533 = vmatprep.subr.bf16.mxu0 0
    %2534 = vmatpush1.bf16.msra.mxu0 %v2506
    %2535 = vmatprep.subr.bf16.mxu0 0
    %2536 = vmatpush1.bf16.msra.mxu0 %v2505
    %2537 = vmatprep.subr.bf16.mxu0 0
    %2538 = vmatpush2.bf16.msra.mxu0 0
    %2539 = vmatprep.subr.bf16.mxu0 0
    %2540 = vmatpush2.bf16.msra.mxu0 0
    %2541 = vmatprep.subr.bf16.mxu0 0
    %2542 = vmatpush2.bf16.msra.mxu0 0
    %2543 = vmatprep.subr.bf16.mxu0 0
    %2544 = vmatpush2.bf16.msra.mxu0 0
    %2545 = vmatprep.subr.bf16.mxu0 0
    %2546 = vmatpush2.bf16.msra.mxu0 0
    %2547 = vmatprep.subr.bf16.mxu0 0
    %2548 = vmatpush2.bf16.msra.mxu0 0
    %2549 = vmatprep.subr.bf16.mxu0 0
    %2550 = vmatpush2.bf16.msra.mxu0 0
    %2551 = vmatprep.subr.bf16.mxu0 0
    %2552 = vmatpush2.bf16.msra.mxu0 0
    %2553 = vmatprep.mubr.bf16.mxu0 0
    %2554 = vmatmul.mubr.bf16.gmra.mxu0 %v2519
    %v2555 = vpop.f32.mrf.mxu0
    %v2556 = vadd.f32 0.0, %v2555
    %v2557 = vpop.f32.mrf.mxu0
    %v2558 = vpop.f32.mrf.mxu0
    %v2559 = vpop.f32.mrf.mxu0
    %2560 = vdwg.mxu0
    %v2561 = vld [vmem:[#allocation5] sm:$0x1]
    %v2562 = vsel %vm171, 0, %v2561
    %2563 = vst [vmem:[#allocation5] sm:$0x1] %v2562
    %vm2564 = vcmask 519171
    %vm2565 = vsmask.f32 7950
    %vm2566 = vmand %vm2564, %vm2565
    %v2567 = vld [vmem:[#allocation5 + $0x4] sm:$0x8]
    %v2568 = vsel %vm2566, 0, %v2567
    %2569 = vst [vmem:[#allocation5 + $0x4] sm:$0x8] %v2568
    %v2570 = vpack.c.bf16 %v2556, %v2556
    %v2572 = vunpack.c.l.b16 %v2570
    %v2573 = vpack.c.b16 %v2572, %v2572
    %v2575 = vshrl.u32 %v2573, 16
    %v2577 = vrot.slane %v2575, 7
    %v2578 = vshll.u32 %v2573, 16
    %v2580 = vor.u32 %v2577, %v2578
    %v2582 = vld [vmem:[#allocation5] sm:$0xf]
    %v2583 = vsel %vm249, %v2580, %v2582
    %2584 = vst [vmem:[#allocation5] sm:$0xf] %v2583
    %2585 = vrot.lane.b32.xlu0 %v2573, 64
    %v2586 = vpop.permute.xlu0 %2585
    %2588 = vst.msk [vmem:[#allocation5] sm:$0xf] %vm274, %v2586
    %v2589 = vrot.slane %v2575, 4
    %v2590 = vrot.slane %v2578, 5
    %v2591 = vor.u32 %v2589, %v2590
    %v2592 = vrot.slane %v2591, 4
    %vm2594 = vmand %vm247, %vm281
    %v2595 = vld [vmem:[#allocation5 + $0x4] sm:$0xf]
    %v2596 = vsel %vm2594, %v2592, %v2595
    %2597 = vst [vmem:[#allocation5 + $0x4] sm:$0xf] %v2596
    %v2598 = vld [vmem:[#allocation5] sm:$0xff]
    %v2599 = vld [vmem:[%s57] sm:$0xf]
    %v2600 = vld [vmem:[%s57 + $0x4] sm:$0xf]
    %v2601 = vld [vmem:[%s57 + $0x8] sm:$0xf]
    %v2602 = vld [vmem:[%s57 + $0xc] sm:$0xf]
    %v2603 = vld [vmem:[%s57 + $0x10] sm:$0xf]
    %v2604 = vld [vmem:[%s57 + $0x14] sm:$0xf]
    %v2605 = vld [vmem:[%s57 + $0x18] sm:$0xf]
    %v2606 = vld [vmem:[%s57 + $0x1c] sm:$0xf]
    %v2607 = vld [vmem:[%s57 + $0x20] sm:$0xf]
    %v2608 = vld [vmem:[%s57 + $0x24] sm:$0xf]
    %v2609 = vld [vmem:[%s57 + $0x28] sm:$0xf]
    %v2610 = vld [vmem:[%s57 + $0x2c] sm:$0xf]
    %v2611 = vld [vmem:[%s57 + $0x30] sm:$0xf]
    %v2612 = vld [vmem:[%s57 + $0x34] sm:$0xf]
    %v2613 = vld [vmem:[%s57 + $0x38] sm:$0xf]
    %v2614 = vld [vmem:[%s57 + $0x3c] sm:$0xf]
    %v2615 = vld [vmem:[%s57 + $0x40] sm:$0xf]
    %v2616 = vld [vmem:[%s57 + $0x44] sm:$0xf]
    %v2617 = vld [vmem:[%s57 + $0x48] sm:$0xf]
    %v2618 = vld [vmem:[%s57 + $0x4c] sm:$0xf]
    %v2619 = vld [vmem:[%s57 + $0x50] sm:$0xf]
    %v2620 = vld [vmem:[%s57 + $0x54] sm:$0xf]
    %v2621 = vld [vmem:[%s57 + $0x58] sm:$0xf]
    %v2622 = vld [vmem:[%s57 + $0x5c] sm:$0xf]
    %v2624 = vunpack.c.l.b16 %v2598
    %v2625 = vunpack.c.h.b16 %v2598
    %v2626 = vpack.c.b16 %v2624, %v2624
    %v2627 = vpack.c.b16 %v2625, %v2625
    %v2653 = vunpack.c.l.b16 %v2599
    %v2654 = vunpack.c.l.b16 %v2600
    %v2655 = vunpack.c.l.b16 %v2601
    %v2656 = vunpack.c.l.b16 %v2602
    %v2657 = vunpack.c.l.b16 %v2603
    %v2658 = vunpack.c.l.b16 %v2604
    %v2659 = vunpack.c.l.b16 %v2605
    %v2660 = vunpack.c.l.b16 %v2606
    %v2661 = vunpack.c.l.b16 %v2607
    %v2662 = vunpack.c.l.b16 %v2608
    %v2663 = vunpack.c.l.b16 %v2609
    %v2664 = vunpack.c.l.b16 %v2610
    %v2665 = vunpack.c.l.b16 %v2611
    %v2666 = vunpack.c.l.b16 %v2612
    %v2667 = vunpack.c.l.b16 %v2613
    %v2668 = vunpack.c.l.b16 %v2614
    %v2669 = vunpack.c.l.b16 %v2615
    %v2670 = vunpack.c.l.b16 %v2616
    %v2671 = vunpack.c.l.b16 %v2617
    %v2672 = vunpack.c.l.b16 %v2618
    %v2673 = vunpack.c.l.b16 %v2619
    %v2674 = vunpack.c.l.b16 %v2620
    %v2675 = vunpack.c.l.b16 %v2621
    %v2676 = vunpack.c.l.b16 %v2622
    %v2677 = vpack.c.b16 %v2654, %v2653
    %v2678 = vpack.c.b16 %v2656, %v2655
    %v2679 = vpack.c.b16 %v2658, %v2657
    %v2680 = vpack.c.b16 %v2660, %v2659
    %v2681 = vpack.c.b16 %v2662, %v2661
    %v2682 = vpack.c.b16 %v2664, %v2663
    %v2683 = vpack.c.b16 %v2666, %v2665
    %v2684 = vpack.c.b16 %v2668, %v2667
    %v2685 = vpack.c.b16 %v2670, %v2669
    %v2686 = vpack.c.b16 %v2672, %v2671
    %v2687 = vpack.c.b16 %v2674, %v2673
    %v2688 = vpack.c.b16 %v2676, %v2675
    %v2702 = vsel %vm448, %v2627, 0
    %2704 = vmatprep.subr.bf16.mxu0 0
    %2705 = vmatpush1.bf16.msra.mxu0 %v2684
    %2706 = vmatprep.subr.bf16.mxu0 0
    %2707 = vmatpush1.bf16.msra.mxu0 %v2683
    %2708 = vmatprep.subr.bf16.mxu0 0
    %2709 = vmatpush1.bf16.msra.mxu0 %v2682
    %2710 = vmatprep.subr.bf16.mxu0 0
    %2711 = vmatpush1.bf16.msra.mxu0 %v2681
    %2712 = vmatprep.subr.bf16.mxu0 0
    %2713 = vmatpush1.bf16.msra.mxu0 %v2680
    %2714 = vmatprep.subr.bf16.mxu0 0
    %2715 = vmatpush1.bf16.msra.mxu0 %v2679
    %2716 = vmatprep.subr.bf16.mxu0 0
    %2717 = vmatpush1.bf16.msra.mxu0 %v2678
    %2718 = vmatprep.subr.bf16.mxu0 0
    %2719 = vmatpush1.bf16.msra.mxu0 %v2677
    %2720 = vmatprep.subr.bf16.mxu0 0
    %2721 = vmatpush2.bf16.msra.mxu0 0
    %2722 = vmatprep.subr.bf16.mxu0 0
    %2723 = vmatpush2.bf16.msra.mxu0 0
    %2724 = vmatprep.subr.bf16.mxu0 0
    %2725 = vmatpush2.bf16.msra.mxu0 0
    %2726 = vmatprep.subr.bf16.mxu0 0
    %2727 = vmatpush2.bf16.msra.mxu0 0
    %2728 = vmatprep.subr.bf16.mxu0 0
    %2729 = vmatpush2.bf16.msra.mxu0 %v2688
    %2730 = vmatprep.subr.bf16.mxu0 0
    %2731 = vmatpush2.bf16.msra.mxu0 %v2687
    %2732 = vmatprep.subr.bf16.mxu0 0
    %2733 = vmatpush2.bf16.msra.mxu0 %v2686
    %2734 = vmatprep.subr.bf16.mxu0 0
    %2735 = vmatpush2.bf16.msra.mxu0 %v2685
    %2736 = vmatprep.mubr.bf16.mxu0 %v2702
    %2737 = vmatmul.mubr.bf16.gmra.mxu0 %v2626
    %v2738 = vpop.f32.mrf.mxu0
    %v2739 = vadd.f32 0.0, %v2738
    %v2740 = vpop.f32.mrf.mxu0
    %v2741 = vpop.f32.mrf.mxu0
    %v2742 = vpop.f32.mrf.mxu0
    %2743 = vdwg.mxu0
    %v2744 = vld [vmem:[%s59] sm:$0x1]
    %v2746 = vlaneseq
    %v2747 = vshrl.u32 %v2746, 7
    %v2748 = vsub.s32 0, %v2747
    %v2749 = vrot.slane %v2744, %v2748
    %v2751 = vmul.f32 %v2739, %v2749
    %v2752 = vld [vmem:[%s61] sm:$0x1]
    %v2754 = vlaneseq
    %v2755 = vshrl.u32 %v2754, 7
    %v2756 = vsub.s32 0, %v2755
    %v2757 = vrot.slane %v2752, %v2756
    %v2759 = vadd.f32 %v2751, %v2757
    %v2760 = vmax.f32 %v2759, 0.0
    %v2761 = vld [vmem:[%s73] sm:$0xff]
    %2763 = vset.pattern.permute.xlu0 0
    %2764 = vperm.xlu0 %2763, %v2761
    %v2765 = vpop.permute.xlu0 %2764
    %v2767 = vmul.f32 %v2760, %v2765
    %v2768 = vadd.f32 %v2767, %v2556
    %v2769 = vpack.c.bf16 %v2768, %v2768
    %v2771 = vunpack.c.l.b16 %v2769
    %v2772 = vpack.c.b16 %v2771, %v2771
    %v2774 = vshrl.u32 %v2772, 16
    %v2776 = vrot.slane %v2774, 7
    %v2777 = vshll.u32 %v2772, 16
    %v2779 = vor.u32 %v2776, %v2777
    %v2781 = vld [vmem:[#allocation5] sm:$0xf]
    %v2782 = vsel %vm249, %v2779, %v2781
    %2783 = vst [vmem:[#allocation5] sm:$0xf] %v2782
    %2784 = vrot.lane.b32.xlu0 %v2772, 64
    %v2785 = vpop.permute.xlu0 %2784
    %2787 = vst.msk [vmem:[#allocation5] sm:$0xf] %vm274, %v2785
    %v2788 = vrot.slane %v2774, 4
    %v2789 = vrot.slane %v2777, 5
    %v2790 = vor.u32 %v2788, %v2789
    %v2791 = vrot.slane %v2790, 4
    %v2793 = vld [vmem:[#allocation5 + $0x4] sm:$0xf]
    %v2794 = vsel %vm2594, %v2791, %v2793
    %2795 = vst [vmem:[#allocation5 + $0x4] sm:$0xf] %v2794
    %v2796 = vld [vmem:[#allocation5] sm:$0xff]
    %v2797 = vld [vmem:[%s63] sm:$0xf]
    %v2798 = vld [vmem:[%s63 + $0x4] sm:$0xf]
    %v2799 = vld [vmem:[%s63 + $0x8] sm:$0xf]
    %v2800 = vld [vmem:[%s63 + $0xc] sm:$0xf]
    %v2801 = vld [vmem:[%s63 + $0x10] sm:$0xf]
    %v2802 = vld [vmem:[%s63 + $0x14] sm:$0xf]
    %v2803 = vld [vmem:[%s63 + $0x18] sm:$0xf]
    %v2804 = vld [vmem:[%s63 + $0x1c] sm:$0xf]
    %v2805 = vld [vmem:[%s63 + $0x20] sm:$0xf]
    %v2806 = vld [vmem:[%s63 + $0x24] sm:$0xf]
    %v2807 = vld [vmem:[%s63 + $0x28] sm:$0xf]
    %v2808 = vld [vmem:[%s63 + $0x2c] sm:$0xf]
    %v2809 = vld [vmem:[%s63 + $0x30] sm:$0xf]
    %v2810 = vld [vmem:[%s63 + $0x34] sm:$0xf]
    %v2811 = vld [vmem:[%s63 + $0x38] sm:$0xf]
    %v2812 = vld [vmem:[%s63 + $0x3c] sm:$0xf]
    %v2813 = vld [vmem:[%s63 + $0x40] sm:$0xf]
    %v2814 = vld [vmem:[%s63 + $0x44] sm:$0xf]
    %v2815 = vld [vmem:[%s63 + $0x48] sm:$0xf]
    %v2816 = vld [vmem:[%s63 + $0x4c] sm:$0xf]
    %v2817 = vld [vmem:[%s63 + $0x50] sm:$0xf]
    %v2818 = vld [vmem:[%s63 + $0x54] sm:$0xf]
    %v2819 = vld [vmem:[%s63 + $0x58] sm:$0xf]
    %v2820 = vld [vmem:[%s63 + $0x5c] sm:$0xf]
    %v2822 = vunpack.c.l.b16 %v2796
    %v2823 = vunpack.c.h.b16 %v2796
    %v2824 = vpack.c.b16 %v2822, %v2822
    %v2825 = vpack.c.b16 %v2823, %v2823
    %v2851 = vunpack.c.l.b16 %v2797
    %v2852 = vunpack.c.l.b16 %v2798
    %v2853 = vunpack.c.l.b16 %v2799
    %v2854 = vunpack.c.l.b16 %v2800
    %v2855 = vunpack.c.l.b16 %v2801
    %v2856 = vunpack.c.l.b16 %v2802
    %v2857 = vunpack.c.l.b16 %v2803
    %v2858 = vunpack.c.l.b16 %v2804
    %v2859 = vunpack.c.l.b16 %v2805
    %v2860 = vunpack.c.l.b16 %v2806
    %v2861 = vunpack.c.l.b16 %v2807
    %v2862 = vunpack.c.l.b16 %v2808
    %v2863 = vunpack.c.l.b16 %v2809
    %v2864 = vunpack.c.l.b16 %v2810
    %v2865 = vunpack.c.l.b16 %v2811
    %v2866 = vunpack.c.l.b16 %v2812
    %v2867 = vunpack.c.l.b16 %v2813
    %v2868 = vunpack.c.l.b16 %v2814
    %v2869 = vunpack.c.l.b16 %v2815
    %v2870 = vunpack.c.l.b16 %v2816
    %v2871 = vunpack.c.l.b16 %v2817
    %v2872 = vunpack.c.l.b16 %v2818
    %v2873 = vunpack.c.l.b16 %v2819
    %v2874 = vunpack.c.l.b16 %v2820
    %v2875 = vpack.c.b16 %v2852, %v2851
    %v2876 = vpack.c.b16 %v2854, %v2853
    %v2877 = vpack.c.b16 %v2856, %v2855
    %v2878 = vpack.c.b16 %v2858, %v2857
    %v2879 = vpack.c.b16 %v2860, %v2859
    %v2880 = vpack.c.b16 %v2862, %v2861
    %v2881 = vpack.c.b16 %v2864, %v2863
    %v2882 = vpack.c.b16 %v2866, %v2865
    %v2883 = vpack.c.b16 %v2868, %v2867
    %v2884 = vpack.c.b16 %v2870, %v2869
    %v2885 = vpack.c.b16 %v2872, %v2871
    %v2886 = vpack.c.b16 %v2874, %v2873
    %v2900 = vsel %vm448, %v2825, 0
    %2902 = vmatprep.subr.bf16.mxu0 0
    %2903 = vmatpush1.bf16.msra.mxu0 %v2882
    %2904 = vmatprep.subr.bf16.mxu0 0
    %2905 = vmatpush1.bf16.msra.mxu0 %v2881
    %2906 = vmatprep.subr.bf16.mxu0 0
    %2907 = vmatpush1.bf16.msra.mxu0 %v2880
    %2908 = vmatprep.subr.bf16.mxu0 0
    %2909 = vmatpush1.bf16.msra.mxu0 %v2879
    %2910 = vmatprep.subr.bf16.mxu0 0
    %2911 = vmatpush1.bf16.msra.mxu0 %v2878
    %2912 = vmatprep.subr.bf16.mxu0 0
    %2913 = vmatpush1.bf16.msra.mxu0 %v2877
    %2914 = vmatprep.subr.bf16.mxu0 0
    %2915 = vmatpush1.bf16.msra.mxu0 %v2876
    %2916 = vmatprep.subr.bf16.mxu0 0
    %2917 = vmatpush1.bf16.msra.mxu0 %v2875
    %2918 = vmatprep.subr.bf16.mxu0 0
    %2919 = vmatpush2.bf16.msra.mxu0 0
    %2920 = vmatprep.subr.bf16.mxu0 0
    %2921 = vmatpush2.bf16.msra.mxu0 0
    %2922 = vmatprep.subr.bf16.mxu0 0
    %2923 = vmatpush2.bf16.msra.mxu0 0
    %2924 = vmatprep.subr.bf16.mxu0 0
    %2925 = vmatpush2.bf16.msra.mxu0 0
    %2926 = vmatprep.subr.bf16.mxu0 0
    %2927 = vmatpush2.bf16.msra.mxu0 %v2886
    %2928 = vmatprep.subr.bf16.mxu0 0
    %2929 = vmatpush2.bf16.msra.mxu0 %v2885
    %2930 = vmatprep.subr.bf16.mxu0 0
    %2931 = vmatpush2.bf16.msra.mxu0 %v2884
    %2932 = vmatprep.subr.bf16.mxu0 0
    %2933 = vmatpush2.bf16.msra.mxu0 %v2883
    %2934 = vmatprep.mubr.bf16.mxu0 %v2900
    %2935 = vmatmul.mubr.bf16.gmra.mxu0 %v2824
    %v2936 = vpop.f32.mrf.mxu0
    %v2937 = vadd.f32 0.0, %v2936
    %v2938 = vpop.f32.mrf.mxu0
    %v2939 = vpop.f32.mrf.mxu0
    %v2940 = vpop.f32.mrf.mxu0
    %2941 = vdwg.mxu0
    %v2942 = vld [vmem:[%s65] sm:$0x1]
    %v2944 = vlaneseq
    %v2945 = vshrl.u32 %v2944, 7
    %v2946 = vsub.s32 0, %v2945
    %v2947 = vrot.slane %v2942, %v2946
    %v2949 = vmul.f32 %v2937, %v2947
    %v2950 = vld [vmem:[%s67] sm:$0x1]
    %v2952 = vlaneseq
    %v2953 = vshrl.u32 %v2952, 7
    %v2954 = vsub.s32 0, %v2953
    %v2955 = vrot.slane %v2950, %v2954
    %v2957 = vadd.f32 %v2949, %v2955
    %v2958 = vmax.f32 %v2957, 0.0
    %v2960 = vrot.slane %v2958, 1
    %v2962 = vmax.f32 %v2958, %v2960
    %2964 = vrot.lane.b32.xlu0 %v2962, 64
    %v2965 = vpop.permute.xlu0 %2964
    %v2967 = vmax.f32 %v2962, %v2965
    %v2968 = vld [vmem:[%s69] sm:$0x1]
    %v2969 = vpack.c.bf16 %v2967, %v2967
    %vm2970 = vcmask 56320
    %v2972 = vsel %vm2970, %v2968, 0
    %vm2974 = vcmask 1042432
    %v2975 = vsel %vm2974, 4294967295, 65535
    %v2976 = vsel %vm1124, %v2975, 0
    %v2978 = vand.u32 %v2969, %v2976
    %2980 = vmatprep.subr.bf16.mxu0 0
    %2981 = vmatpush1.bf16.msra.mxu0 0
    %2982 = vmatprep.subr.bf16.mxu0 0
    %2983 = vmatpush1.bf16.msra.mxu0 0
    %2984 = vmatprep.subr.bf16.mxu0 0
    %2985 = vmatpush1.bf16.msra.mxu0 0
    %2986 = vmatprep.subr.bf16.mxu0 0
    %2987 = vmatpush1.bf16.msra.mxu0 0
    %2988 = vmatprep.subr.bf16.mxu0 0
    %2989 = vmatpush1.bf16.msra.mxu0 0
    %2990 = vmatprep.subr.bf16.mxu0 0
    %2991 = vmatpush1.bf16.msra.mxu0 0
    %2992 = vmatprep.subr.bf16.mxu0 0
    %2993 = vmatpush1.bf16.msra.mxu0 0
    %2994 = vmatprep.subr.bf16.mxu0 0
    %2995 = vmatpush1.bf16.msra.mxu0 %v2978
    %2996 = vmatprep.subr.bf16.mxu0 0
    %2997 = vmatpush2.bf16.msra.mxu0 0
    %2998 = vmatprep.subr.bf16.mxu0 0
    %2999 = vmatpush2.bf16.msra.mxu0 0
    %3000 = vmatprep.subr.bf16.mxu0 0
    %3001 = vmatpush2.bf16.msra.mxu0 0
    %3002 = vmatprep.subr.bf16.mxu0 0
    %3003 = vmatpush2.bf16.msra.mxu0 0
    %3004 = vmatprep.subr.bf16.mxu0 0
    %3005 = vmatpush2.bf16.msra.mxu0 0
    %3006 = vmatprep.subr.bf16.mxu0 0
    %3007 = vmatpush2.bf16.msra.mxu0 0
    %3008 = vmatprep.subr.bf16.mxu0 0
    %3009 = vmatpush2.bf16.msra.mxu0 0
    %3010 = vmatprep.subr.bf16.mxu0 0
    %3011 = vmatpush2.bf16.msra.mxu0 0
    %3012 = vmatprep.mubr.bf16.mxu0 0
    %3013 = vmatmul.mubr.bf16.gmra.mxu0 %v2972
    %v3014 = vpop.f32.mrf.mxu0
    %v3015 = vadd.f32 0.0, %v3014
    %v3016 = vpop.f32.mrf.mxu0
    %v3017 = vpop.f32.mrf.mxu0
    %v3018 = vpop.f32.mrf.mxu0
    %3019 = vdwg.mxu0
    %v3020 = vpack.c.bf16 %v3015, %v3015
    %v3021 = vld [vmem:[%s71] sm:$0xf]
    %v3022 = vld [vmem:[%s71 + $0x4] sm:$0xf]
    %v3023 = vld [vmem:[%s71 + $0x8] sm:$0xf]
    %v3024 = vld [vmem:[%s71 + $0xc] sm:$0xf]
    %v3025 = vld [vmem:[%s71 + $0x10] sm:$0xf]
    %v3026 = vld [vmem:[%s71 + $0x14] sm:$0xf]
    %v3027 = vld [vmem:[%s71 + $0x18] sm:$0xf]
    %v3028 = vld [vmem:[%s71 + $0x1c] sm:$0xf]
    %v3037 = vunpack.c.l.b16 %v3021
    %v3038 = vunpack.c.l.b16 %v3022
    %v3039 = vunpack.c.l.b16 %v3023
    %v3040 = vunpack.c.l.b16 %v3024
    %v3041 = vunpack.c.l.b16 %v3025
    %v3042 = vunpack.c.l.b16 %v3026
    %v3043 = vunpack.c.l.b16 %v3027
    %v3044 = vunpack.c.l.b16 %v3028
    %v3045 = vpack.c.b16 %v3038, %v3037
    %v3046 = vpack.c.b16 %v3040, %v3039
    %v3047 = vpack.c.b16 %v3042, %v3041
    %v3048 = vpack.c.b16 %v3044, %v3043
    %v3054 = vsel %vm448, %v3020, 0
    %3056 = vmatprep.subr.bf16.mxu0 0
    %3057 = vmatpush1.bf16.msra.mxu0 0
    %3058 = vmatprep.subr.bf16.mxu0 0
    %3059 = vmatpush1.bf16.msra.mxu0 0
    %3060 = vmatprep.subr.bf16.mxu0 0
    %3061 = vmatpush1.bf16.msra.mxu0 0
    %3062 = vmatprep.subr.bf16.mxu0 0
    %3063 = vmatpush1.bf16.msra.mxu0 0
    %3064 = vmatprep.subr.bf16.mxu0 0
    %3065 = vmatpush1.bf16.msra.mxu0 %v3048
    %3066 = vmatprep.subr.bf16.mxu0 0
    %3067 = vmatpush1.bf16.msra.mxu0 %v3047
    %3068 = vmatprep.subr.bf16.mxu0 0
    %3069 = vmatpush1.bf16.msra.mxu0 %v3046
    %3070 = vmatprep.subr.bf16.mxu0 0
    %3071 = vmatpush1.bf16.msra.mxu0 %v3045
    %3072 = vmatprep.subr.bf16.mxu0 0
    %3073 = vmatpush2.bf16.msra.mxu0 0
    %3074 = vmatprep.subr.bf16.mxu0 0
    %3075 = vmatpush2.bf16.msra.mxu0 0
    %3076 = vmatprep.subr.bf16.mxu0 0
    %3077 = vmatpush2.bf16.msra.mxu0 0
    %3078 = vmatprep.subr.bf16.mxu0 0
    %3079 = vmatpush2.bf16.msra.mxu0 0
    %3080 = vmatprep.subr.bf16.mxu0 0
    %3081 = vmatpush2.bf16.msra.mxu0 0
    %3082 = vmatprep.subr.bf16.mxu0 0
    %3083 = vmatpush2.bf16.msra.mxu0 0
    %3084 = vmatprep.subr.bf16.mxu0 0
    %3085 = vmatpush2.bf16.msra.mxu0 0
    %3086 = vmatprep.subr.bf16.mxu0 0
    %3087 = vmatpush2.bf16.msra.mxu0 0
    %3088 = vmatprep.mubr.bf16.mxu0 0
    %3089 = vmatmul.mubr.bf16.gmra.mxu0 %v3054
    %v3090 = vpop.f32.mrf.mxu0
    %v3091 = vadd.f32 0.0, %v3090
    %v3092 = vpop.f32.mrf.mxu0
    %v3093 = vpop.f32.mrf.mxu0
    %v3094 = vpop.f32.mrf.mxu0
    %3095 = vdwg.mxu0
    %v3096 = vpack.c.bf16 %v3091, %v3091
    %v3097 = vld [vmem:[%s75] sm:$0xf]
    %v3098 = vld [vmem:[%s75 + $0x4] sm:$0xf]
    %v3099 = vld [vmem:[%s75 + $0x8] sm:$0xf]
    %v3100 = vld [vmem:[%s75 + $0xc] sm:$0xf]
    %v3101 = vld [vmem:[%s75 + $0x10] sm:$0xf]
    %v3102 = vld [vmem:[%s75 + $0x14] sm:$0xf]
    %v3103 = vld [vmem:[%s75 + $0x18] sm:$0xf]
    %v3104 = vld [vmem:[%s75 + $0x1c] sm:$0xf]
    %v3105 = vld [vmem:[%s77] sm:$0x1]
    %v3107 = vlaneseq
    %v3108 = vshrl.u32 %v3107, 7
    %v3109 = vsub.s32 0, %v3108
    %v3110 = vrot.slane %v3105, %v3109
    %v3120 = vunpack.c.l.b16 %v3097
    %v3121 = vunpack.c.l.b16 %v3098
    %v3122 = vunpack.c.l.b16 %v3099
    %v3123 = vunpack.c.l.b16 %v3100
    %v3124 = vunpack.c.l.b16 %v3101
    %v3125 = vunpack.c.l.b16 %v3102
    %v3126 = vunpack.c.l.b16 %v3103
    %v3127 = vunpack.c.l.b16 %v3104
    %v3128 = vpack.c.b16 %v3121, %v3120
    %v3129 = vpack.c.b16 %v3123, %v3122
    %v3130 = vpack.c.b16 %v3125, %v3124
    %v3131 = vpack.c.b16 %v3127, %v3126
    %v3137 = vsel %vm448, %v3096, 0
    %3139 = vmatprep.subr.bf16.mxu0 0
    %3140 = vmatpush1.bf16.msra.mxu0 0
    %3141 = vmatprep.subr.bf16.mxu0 0
    %3142 = vmatpush1.bf16.msra.mxu0 0
    %3143 = vmatprep.subr.bf16.mxu0 0
    %3144 = vmatpush1.bf16.msra.mxu0 0
    %3145 = vmatprep.subr.bf16.mxu0 0
    %3146 = vmatpush1.bf16.msra.mxu0 0
    %3147 = vmatprep.subr.bf16.mxu0 0
    %3148 = vmatpush1.bf16.msra.mxu0 %v3131
    %3149 = vmatprep.subr.bf16.mxu0 0
    %3150 = vmatpush1.bf16.msra.mxu0 %v3130
    %3151 = vmatprep.subr.bf16.mxu0 0
    %3152 = vmatpush1.bf16.msra.mxu0 %v3129
    %3153 = vmatprep.subr.bf16.mxu0 0
    %3154 = vmatpush1.bf16.msra.mxu0 %v3128
    %3155 = vmatprep.subr.bf16.mxu0 0
    %3156 = vmatpush2.bf16.msra.mxu0 0
    %3157 = vmatprep.subr.bf16.mxu0 0
    %3158 = vmatpush2.bf16.msra.mxu0 0
    %3159 = vmatprep.subr.bf16.mxu0 0
    %3160 = vmatpush2.bf16.msra.mxu0 0
    %3161 = vmatprep.subr.bf16.mxu0 0
    %3162 = vmatpush2.bf16.msra.mxu0 0
    %3163 = vmatprep.subr.bf16.mxu0 0
    %3164 = vmatpush2.bf16.msra.mxu0 0
    %3165 = vmatprep.subr.bf16.mxu0 0
    %3166 = vmatpush2.bf16.msra.mxu0 0
    %3167 = vmatprep.subr.bf16.mxu0 0
    %3168 = vmatpush2.bf16.msra.mxu0 0
    %3169 = vmatprep.subr.bf16.mxu0 0
    %3170 = vmatpush2.bf16.msra.mxu0 0
    %3171 = vmatprep.mubr.bf16.mxu0 0
    %3172 = vmatmul.mubr.bf16.gmra.mxu0 %v3137
    %v3173 = vpop.f32.mrf.mxu0
    %v3174 = vadd.f32 %v3110, %v3173
    %v3175 = vpop.f32.mrf.mxu0
    %v3176 = vpop.f32.mrf.mxu0
    %v3177 = vpop.f32.mrf.mxu0
    %3178 = vdwg.mxu0
    %3179 = vst [vmem:[#allocation6] sm:$0x3] %v3174
    // Predicated region
    $region158: #{tpu_custom_call.1} parent=1 // pred_check
      _
    $region159: #{tpu_custom_call.1} parent=1 // pred_check_branch
      %3181 = sbr.rel (0) target = $region161
    $region160: #{tpu_custom_call.1} parent=1 // pred_region
      %s3183 = ssub.s32 32, 32
      %3184 = vsyncadd [#allocation7], %s3183
      %s3186 = sshll.u32 [#allocation6], 4
      %s3187 = int_to_ptr.vmem [resolvable:$true] %s3186
      %3189 = dma.vmem_to_hbm [thread:$0]  %s3187, 32, %s79, [#allocation7]
    $region161: #{tpu_custom_call.1} parent=1 // pred_fallthru
      _
    // Predicated region
    $region162: #{tpu_custom_call.1} parent=1 // pred_check
      _
    $region163: #{tpu_custom_call.1} parent=1 // pred_check_branch
      %3191 = sbr.rel (0) target = $region165
    $region164: #{tpu_custom_call.1} parent=1 // pred_region
      %3192 = dma.done [#allocation7], 32
    $region165: #{tpu_custom_call.1} parent=1 // pred_fallthru
      _
    %3193 = vsyncpa [#allocation7], 1

</llo_original>
